<compile_context>
chip_gen: v6e
topology: v6e:2x2x1
jax: 0.10.0
libtpu: 0.0.40
codegen_flags: <defaults>
</compile_context>

<pallas_src>
import functools

import jax
import jax.numpy as jnp
import numpy as np
from jax.experimental import pallas as pl
from jax.experimental.pallas import tpu as pltpu


def _round_up(x, m):
    return ((x + m - 1) // m) * m


def _distil_kernel(labels_ref, h_ref, w_ref, ce_ref, kl_ref,
                   m_s, z_s, m_t, z_t, acc_ts, picked):
    """Grid = (token_blocks [parallel], vocab_blocks [arbitrary, innermost]).

    Per step: one fused bf16 matmul h @ [Ws_tile | Wt_tile] on the MXU, then online
    logsumexp updates for student & teacher, the label-logit pick, and the streaming
    KL numerator  sum_v e^{t-m_t} (t - s).  Per-token CE / KL are written on the last
    vocab block.
    """
    j = pl.program_id(1)
    n_vb = pl.num_programs(1)

    @pl.when(j == 0)
    def _():
        m_s[...] = jnp.full_like(m_s, -jnp.inf)
        m_t[...] = jnp.full_like(m_t, -jnp.inf)
        z_s[...] = jnp.zeros_like(z_s)
        z_t[...] = jnp.zeros_like(z_t)
        acc_ts[...] = jnp.zeros_like(acc_ts)
        picked[...] = jnp.zeros_like(picked)

    # One MXU pass for both heads: (TN, H) bf16 @ (H, 2*TV) bf16 -> (TN, 2*TV) f32.
    logits = jnp.dot(h_ref[...], w_ref[...], preferred_element_type=jnp.float32)
    tv = logits.shape[-1] // 2
    s = logits[:, :tv]          # student vocab tile
    t = logits[:, tv:]          # teacher vocab tile

    labels = labels_ref[...]    # (TN, 1) int32; >=0 valid CE label, -1 no label, -2 pad

    # --- student: online logsumexp + raw-logit label pick (CE needs no log_p_s) ---
    m_s_new = jnp.maximum(m_s[...], jnp.max(s, axis=-1, keepdims=True))
    z_s[...] = (z_s[...] * jnp.exp(m_s[...] - m_s_new)
                + jnp.sum(jnp.exp(s - m_s_new), axis=-1, keepdims=True))
    m_s[...] = m_s_new

    vocab_ids = j * tv + jax.lax.broadcasted_iota(jnp.int32, s.shape, 1)
    onehot = (vocab_ids == labels).astype(jnp.float32)
    picked[...] += jnp.sum(s * onehot, axis=-1, keepdims=True)

    # --- teacher: online logsumexp; reuse e_t for Z_t and the KL numerator ---
    m_t_new = jnp.maximum(m_t[...], jnp.max(t, axis=-1, keepdims=True))
    corr_t = jnp.exp(m_t[...] - m_t_new)
    e_t = jnp.exp(t - m_t_new)
    z_t[...] = z_t[...] * corr_t + jnp.sum(e_t, axis=-1, keepdims=True)
    acc_ts[...] = acc_ts[...] * corr_t + jnp.sum(e_t * (t - s), axis=-1, keepdims=True)
    m_t[...] = m_t_new

    @pl.when(j == n_vb - 1)
    def _():
        lse_s = m_s[...] + jnp.log(z_s[...])
        lse_t = m_t[...] + jnp.log(z_t[...])
        ce_mask = (labels >= 0).astype(jnp.float32)   # real token with a next-token label
        kl_mask = (labels >= -1).astype(jnp.float32)  # any real (non-padded) token
        # CE per token: logsumexp(s) - s[label]
        ce_ref[...] = (lse_s - picked[...]) * ce_mask
        # KL(p_t || p_s) per token: E_{p_t}[t - s] - lse_t + lse_s
        kl_ref[...] = (acc_ts[...] / z_t[...] - lse_t + lse_s) * kl_mask


def _ce_kernel(labels_ref, h_ref, w_ref, ce_ref, m_s, z_s, picked):
    """CE-only variant for the non-distil path (student matmul + online logsumexp)."""
    j = pl.program_id(1)
    n_vb = pl.num_programs(1)

    @pl.when(j == 0)
    def _():
        m_s[...] = jnp.full_like(m_s, -jnp.inf)
        z_s[...] = jnp.zeros_like(z_s)
        picked[...] = jnp.zeros_like(picked)

    s = jnp.dot(h_ref[...], w_ref[...], preferred_element_type=jnp.float32)  # (TN, TV)
    tv = s.shape[-1]
    labels = labels_ref[...]

    m_s_new = jnp.maximum(m_s[...], jnp.max(s, axis=-1, keepdims=True))
    z_s[...] = (z_s[...] * jnp.exp(m_s[...] - m_s_new)
                + jnp.sum(jnp.exp(s - m_s_new), axis=-1, keepdims=True))
    m_s[...] = m_s_new

    vocab_ids = j * tv + jax.lax.broadcasted_iota(jnp.int32, s.shape, 1)
    onehot = (vocab_ids == labels).astype(jnp.float32)
    picked[...] += jnp.sum(s * onehot, axis=-1, keepdims=True)

    @pl.when(j == n_vb - 1)
    def _():
        ce_mask = (labels >= 0).astype(jnp.float32)
        ce_ref[...] = (m_s[...] + jnp.log(z_s[...]) - picked[...]) * ce_mask


def objective_loss(input_ids, hidden, w_student, w_teacher, *, distil=True,
                   tile_tokens=256, tile_vocab=512):
    """JAX wrapper reproducing Objective.forward (distil / non-distil paths)."""
    B, S = input_ids.shape
    H = hidden.shape[-1]
    V = w_student.shape[-1]
    N = B * S

    tv = min(tile_vocab, V)
    assert V % tv == 0 and tv % 128 == 0
    tn = min(tile_tokens, _round_up(N, 8))
    assert tn % 8 == 0
    n_pad = _round_up(N, tn)
    n_tok_blocks = n_pad // tn
    n_vocab_blocks = V // tv

    # Tokens-major bf16 hidden, zero-padded to a tile multiple (padded rows give
    # exactly-zero logits and are masked out of CE/KL via the label encoding).
    h = hidden.reshape(N, H).astype(jnp.bfloat16)
    if n_pad != N:
        h = jnp.concatenate([h, jnp.zeros((n_pad - N, H), jnp.bfloat16)], axis=0)

    # Labels with the validity mask folded in:
    #   >= 0 : next-token label (CE + KL),  -1 : last position (KL only),  -2 : padding.
    labels = jnp.concatenate(
        [input_ids[:, 1:].astype(jnp.int32), jnp.full((B, 1), -1, jnp.int32)],
        axis=1).reshape(N)
    if n_pad != N:
        labels = jnp.concatenate([labels, jnp.full((n_pad - N,), -2, jnp.int32)])
    labels = labels.reshape(n_pad, 1)

    cparams = pltpu.CompilerParams(
        dimension_semantics=("parallel", "arbitrary"),
        vmem_limit_bytes=64 * 1024 * 1024)

    if distil:
        # Fuse the two LM heads: vocab tile j holds [Ws tile j | Wt tile j] side by side,
        # so one (TN,H)x(H,2*TV) matmul streams the LHS through the MXU once.
        w_cat = jnp.concatenate(
            [w_student.reshape(H, n_vocab_blocks, tv),
             w_teacher.reshape(H, n_vocab_blocks, tv)],
            axis=-1).reshape(H, 2 * V).astype(jnp.bfloat16)

        ce_tok, kl_tok = pl.pallas_call(
            _distil_kernel,
            out_shape=(jax.ShapeDtypeStruct((n_pad, 1), jnp.float32),
                       jax.ShapeDtypeStruct((n_pad, 1), jnp.float32)),
            grid_spec=pltpu.PrefetchScalarGridSpec(
                num_scalar_prefetch=0,
                grid=(n_tok_blocks, n_vocab_blocks),
                in_specs=[
                    pl.BlockSpec((tn, 1), lambda i, j: (i, 0)),      # labels
                    pl.BlockSpec((tn, H), lambda i, j: (i, 0)),      # hidden (bf16)
                    pl.BlockSpec((H, 2 * tv), lambda i, j: (0, j)),  # [Ws|Wt] vocab tile
                ],
                out_specs=[
                    pl.BlockSpec((tn, 1), lambda i, j: (i, 0)),      # per-token CE
                    pl.BlockSpec((tn, 1), lambda i, j: (i, 0)),      # per-token KL
                ],
                scratch_shapes=[pltpu.VMEM((tn, 1), jnp.float32)] * 6),
            compiler_params=cparams,
        )(labels, h, w_cat)

        ce = jnp.sum(ce_tok) / jnp.float32(B * (S - 1))   # CrossEntropyLoss mean
        kl = jnp.sum(kl_tok) / jnp.float32(N)             # KL: sum over vocab, mean over positions
        # TODO(synk): linear_loss() iterates MergeLinear modules of the wrapped model; no standalone equivalent.
        lin = jnp.float32(0.0)
        total = kl + ce + lin
        return {'loss': total, 'loss/logits': kl, 'loss/crossentropy': ce}

    # Non-distil path: CE-only kernel — no teacher matmul, softmax or KL work.
    w_s = w_student.astype(jnp.bfloat16)
    ce_tok = pl.pallas_call(
        _ce_kernel,
        out_shape=jax.ShapeDtypeStruct((n_pad, 1), jnp.float32),
        grid_spec=pltpu.PrefetchScalarGridSpec(
            num_scalar_prefetch=0,
            grid=(n_tok_blocks, n_vocab_blocks),
            in_specs=[
                pl.BlockSpec((tn, 1), lambda i, j: (i, 0)),
                pl.BlockSpec((tn, H), lambda i, j: (i, 0)),
                pl.BlockSpec((H, tv), lambda i, j: (0, j)),
            ],
            out_specs=pl.BlockSpec((tn, 1), lambda i, j: (i, 0)),
            scratch_shapes=[pltpu.VMEM((tn, 1), jnp.float32)] * 3),
        compiler_params=cparams,
    )(labels, h, w_s)
    ce = jnp.sum(ce_tok) / jnp.float32(B * (S - 1))
    return {'loss': ce, 'crossentropy': ce}


def _reference(input_ids, hidden, ws, wt):
    """Pure-JAX reference (same bf16-operand matmul so the comparison is tight)."""
    B, S = input_ids.shape
    h = hidden.reshape(B * S, -1).astype(jnp.bfloat16)
    s = jnp.dot(h, ws.astype(jnp.bfloat16), preferred_element_type=jnp.float32)
    t = jnp.dot(h, wt.astype(jnp.bfloat16), preferred_element_type=jnp.float32)
    log_p_s = jax.nn.log_softmax(s, -1)
    log_p_t = jax.nn.log_softmax(t, -1)
    p_t = jnp.exp(log_p_t)
    kl = jnp.mean(jnp.sum(p_t * (log_p_t - log_p_s), -1))
    labels = input_ids[:, 1:].reshape(-1)
    logits = s.reshape(B, S, -1)[:, :-1, :].reshape(B * (S - 1), -1)
    nll = jax.nn.logsumexp(logits, -1) - jnp.take_along_axis(logits, labels[:, None], 1)[:, 0]
    ce = jnp.mean(nll)
    return kl + ce, kl, ce


if __name__ == "__main__":
    # Small but tiling-exercising shapes: N = 384 tokens -> padded to 2 token tiles of 256,
    # V = 256 -> 2 vocab tiles of 128 (so the online logsumexp path really streams).
    B, S, H, V = 4, 96, 64, 256

    key = jax.random.PRNGKey(0)
    k_ids, k_h, k_ws, k_wt = jax.random.split(key, 4)
    input_ids = jax.random.randint(k_ids, (B, S), 0, V, dtype=jnp.int32)
    hidden = jax.random.normal(k_h, (B, S, H), dtype=jnp.float32)
    w_student = 0.1 * jax.random.normal(k_ws, (H, V), dtype=jnp.float32)
    w_teacher = 0.1 * jax.random.normal(k_wt, (H, V), dtype=jnp.float32)

    run = functools.partial(objective_loss, tile_tokens=256, tile_vocab=128)

    out = run(input_ids, hidden, w_student, w_teacher, distil=True)
    out = jax.tree_util.tree_map(jax.block_until_ready, out)

    ref_total, ref_kl, ref_ce = _reference(input_ids, hidden, w_student, w_teacher)
    np.testing.assert_allclose(np.asarray(out['loss/crossentropy']), np.asarray(ref_ce),
                               rtol=2e-3, atol=2e-3)
    np.testing.assert_allclose(np.asarray(out['loss/logits']), np.asarray(ref_kl),
                               rtol=2e-3, atol=2e-3)
    np.testing.assert_allclose(np.asarray(out['loss']), np.asarray(ref_total),
                               rtol=2e-3, atol=2e-3)

    # non-distil path (Objective.loss): CE only, via the CE-only kernel variant.
    out_ce = run(input_ids, hidden, w_student, w_teacher, distil=False)
    jax.block_until_ready(out_ce['loss'])
    np.testing.assert_allclose(np.asarray(out_ce['loss']), np.asarray(ref_ce),
                               rtol=2e-3, atol=2e-3)

    print("KERNEL_OK")
</pallas_src>

<mosaic_0001>
module attributes {stable_mosaic.version = 11 : i64} {
  func.func @_distil_kernel(%arg0: i32, %arg1: i32, %arg2: memref<256x1xi32, #tpu.memory_space<vmem>>, %arg3: memref<256x64xbf16, #tpu.memory_space<vmem>>, %arg4: memref<64x256xbf16, #tpu.memory_space<vmem>>, %arg5: memref<256x1xf32, #tpu.memory_space<vmem>>, %arg6: memref<256x1xf32, #tpu.memory_space<vmem>>, %arg7: memref<256x1xf32, #tpu.memory_space<vmem>>, %arg8: memref<256x1xf32, #tpu.memory_space<vmem>>, %arg9: memref<256x1xf32, #tpu.memory_space<vmem>>, %arg10: memref<256x1xf32, #tpu.memory_space<vmem>>, %arg11: memref<256x1xf32, #tpu.memory_space<vmem>>, %arg12: memref<256x1xf32, #tpu.memory_space<vmem>>) attributes {dimension_semantics = [#tpu.dimension_semantics<parallel>, #tpu.dimension_semantics<arbitrary>], iteration_bounds = array<i64: 2, 2>, scalar_prefetch = 0 : i64, scratch_operands = 6 : i64, tpu.core_type = #tpu.core_type<tc>, window_params = [{transform_indices = @transform_0, window_bounds = array<i64: 256, 1>}, {transform_indices = @transform_1, window_bounds = array<i64: 256, 64>}, {transform_indices = @transform_2, window_bounds = array<i64: 64, 256>}, {transform_indices = @transform_3, window_bounds = array<i64: 256, 1>}, {transform_indices = @transform_4, window_bounds = array<i64: 256, 1>}]} {
    %c0_i32 = arith.constant 0 : i32
    %0 = arith.cmpi eq, %arg1, %c0_i32 : i32
    %1 = arith.extui %0 : i1 to i32
    %c0_i32_0 = arith.constant 0 : i32
    %2 = arith.cmpi ne, %1, %c0_i32_0 : i32
    scf.if %2 {
      %cst_41 = arith.constant 0xFF800000 : f32
      %68 = vector.broadcast %cst_41 : f32 to vector<256x1xf32>
      %c0_42 = arith.constant 0 : index
      %c0_43 = arith.constant 0 : index
      %69 = vector.load %arg7[%c0_42, %c0_43] : memref<256x1xf32, #tpu.memory_space<vmem>>, vector<256x1xf32>
      tpu.vector_store %arg7[%c0_42, %c0_43], %68 {strides = array<i32>} : memref<256x1xf32, #tpu.memory_space<vmem>>, vector<256x1xf32>,
      %cst_44 = arith.constant 0xFF800000 : f32
      %70 = vector.broadcast %cst_44 : f32 to vector<256x1xf32>
      %c0_45 = arith.constant 0 : index
      %c0_46 = arith.constant 0 : index
      %71 = vector.load %arg9[%c0_45, %c0_46] : memref<256x1xf32, #tpu.memory_space<vmem>>, vector<256x1xf32>
      tpu.vector_store %arg9[%c0_45, %c0_46], %70 {strides = array<i32>} : memref<256x1xf32, #tpu.memory_space<vmem>>, vector<256x1xf32>,
      %cst_47 = arith.constant 0.000000e+00 : f32
      %72 = vector.broadcast %cst_47 : f32 to vector<256x1xf32>
      %c0_48 = arith.constant 0 : index
      %c0_49 = arith.constant 0 : index
      %73 = vector.load %arg8[%c0_48, %c0_49] : memref<256x1xf32, #tpu.memory_space<vmem>>, vector<256x1xf32>
      tpu.vector_store %arg8[%c0_48, %c0_49], %72 {strides = array<i32>} : memref<256x1xf32, #tpu.memory_space<vmem>>, vector<256x1xf32>,
      %cst_50 = arith.constant 0.000000e+00 : f32
      %74 = vector.broadcast %cst_50 : f32 to vector<256x1xf32>
      %c0_51 = arith.constant 0 : index
      %c0_52 = arith.constant 0 : index
      %75 = vector.load %arg10[%c0_51, %c0_52] : memref<256x1xf32, #tpu.memory_space<vmem>>, vector<256x1xf32>
      tpu.vector_store %arg10[%c0_51, %c0_52], %74 {strides = array<i32>} : memref<256x1xf32, #tpu.memory_space<vmem>>, vector<256x1xf32>,
      %cst_53 = arith.constant 0.000000e+00 : f32
      %76 = vector.broadcast %cst_53 : f32 to vector<256x1xf32>
      %c0_54 = arith.constant 0 : index
      %c0_55 = arith.constant 0 : index
      %77 = vector.load %arg11[%c0_54, %c0_55] : memref<256x1xf32, #tpu.memory_space<vmem>>, vector<256x1xf32>
      tpu.vector_store %arg11[%c0_54, %c0_55], %76 {strides = array<i32>} : memref<256x1xf32, #tpu.memory_space<vmem>>, vector<256x1xf32>,
      %cst_56 = arith.constant 0.000000e+00 : f32
      %78 = vector.broadcast %cst_56 : f32 to vector<256x1xf32>
      %c0_57 = arith.constant 0 : index
      %c0_58 = arith.constant 0 : index
      %79 = vector.load %arg12[%c0_57, %c0_58] : memref<256x1xf32, #tpu.memory_space<vmem>>, vector<256x1xf32>
      tpu.vector_store %arg12[%c0_57, %c0_58], %78 {strides = array<i32>} : memref<256x1xf32, #tpu.memory_space<vmem>>, vector<256x1xf32>,
    } else {
    }
    %c0 = arith.constant 0 : index
    %c0_1 = arith.constant 0 : index
    %3 = vector.load %arg3[%c0, %c0_1] : memref<256x64xbf16, #tpu.memory_space<vmem>>, vector<256x64xbf16>
    %c0_2 = arith.constant 0 : index
    %c0_3 = arith.constant 0 : index
    %4 = vector.load %arg4[%c0_2, %c0_3] : memref<64x256xbf16, #tpu.memory_space<vmem>>, vector<64x256xbf16>
    %cst = arith.constant dense<0.000000e+00> : vector<256x256xf32>
    %5 = tpu.matmul %3, %4, %cst {dimension_numbers = #tpu.dot_dimension_numbers<[1], [0], [0], [1], [0, 0, 1, 1], [], []>} : vector<256x64xbf16>, vector<64x256xbf16>, vector<256x256xf32> -> vector<256x256xf32>
    %6 = vector.extract_strided_slice %5 {offsets = [0, 0], sizes = [256, 128], strides = [1, 1]} : vector<256x256xf32> to vector<256x128xf32>
    %7 = vector.extract_strided_slice %5 {offsets = [0, 128], sizes = [256, 128], strides = [1, 1]} : vector<256x256xf32> to vector<256x128xf32>
    %c0_4 = arith.constant 0 : index
    %c0_5 = arith.constant 0 : index
    %8 = vector.load %arg2[%c0_4, %c0_5] : memref<256x1xi32, #tpu.memory_space<vmem>>, vector<256x1xi32>
    %c0_6 = arith.constant 0 : index
    %c0_7 = arith.constant 0 : index
    %9 = vector.load %arg7[%c0_6, %c0_7] : memref<256x1xf32, #tpu.memory_space<vmem>>, vector<256x1xf32>
    %cst_8 = arith.constant dense<0xFF800000> : vector<256xf32>
    %10 = vector.multi_reduction <maximumf>, %6, %cst_8 [1] : vector<256x128xf32> to vector<256xf32>
    %11 = vector.shape_cast %10 : vector<256xf32> to vector<256x1xf32>
    %12 = arith.maximumf %9, %11 : vector<256x1xf32>
    %c0_9 = arith.constant 0 : index
    %c0_10 = arith.constant 0 : index
    %13 = vector.load %arg8[%c0_9, %c0_10] : memref<256x1xf32, #tpu.memory_space<vmem>>, vector<256x1xf32>
    %c0_11 = arith.constant 0 : index
    %c0_12 = arith.constant 0 : index
    %14 = vector.load %arg7[%c0_11, %c0_12] : memref<256x1xf32, #tpu.memory_space<vmem>>, vector<256x1xf32>
    %15 = arith.subf %14, %12 : vector<256x1xf32>
    %16 = math.exp %15 : vector<256x1xf32>
    %17 = arith.mulf %13, %16 : vector<256x1xf32>
    %18 = vector.broadcast %12 : vector<256x1xf32> to vector<256x128xf32>
    %19 = arith.subf %6, %18 : vector<256x128xf32>
    %20 = math.exp %19 : vector<256x128xf32>
    %cst_13 = arith.constant dense<0.000000e+00> : vector<256xf32>
    %21 = vector.multi_reduction <add>, %20, %cst_13 [1] : vector<256x128xf32> to vector<256xf32>
    %22 = vector.shape_cast %21 : vector<256xf32> to vector<256x1xf32>
    %23 = arith.addf %17, %22 : vector<256x1xf32>
    %c0_14 = arith.constant 0 : index
    %c0_15 = arith.constant 0 : index
    %24 = vector.load %arg8[%c0_14, %c0_15] : memref<256x1xf32, #tpu.memory_space<vmem>>, vector<256x1xf32>
    tpu.vector_store %arg8[%c0_14, %c0_15], %23 {strides = array<i32>} : memref<256x1xf32, #tpu.memory_space<vmem>>, vector<256x1xf32>,
    %c0_16 = arith.constant 0 : index
    %c0_17 = arith.constant 0 : index
    %25 = vector.load %arg7[%c0_16, %c0_17] : memref<256x1xf32, #tpu.memory_space<vmem>>, vector<256x1xf32>
    tpu.vector_store %arg7[%c0_16, %c0_17], %12 {strides = array<i32>} : memref<256x1xf32, #tpu.memory_space<vmem>>, vector<256x1xf32>,
    %c128_i32 = arith.constant 128 : i32
    %26 = arith.muli %arg1, %c128_i32 : i32
    %27 = tpu.iota {dimensions = array<i32: 1>} : vector<256x128xi32>
    %28 = vector.broadcast %26 : i32 to vector<256x128xi32>
    %29 = arith.addi %28, %27 : vector<256x128xi32>
    %30 = vector.broadcast %8 : vector<256x1xi32> to vector<256x128xi32>
    %31 = arith.cmpi eq, %29, %30 : vector<256x128xi32>
    %32 = arith.extui %31 : vector<256x128xi1> to vector<256x128xi32>
    %33 = arith.sitofp %32 : vector<256x128xi32> to vector<256x128xf32>
    %c0_18 = arith.constant 0 : index
    %c0_19 = arith.constant 0 : index
    %34 = vector.load %arg12[%c0_18, %c0_19] : memref<256x1xf32, #tpu.memory_space<vmem>>, vector<256x1xf32>
    %35 = arith.mulf %6, %33 : vector<256x128xf32>
    %cst_20 = arith.constant dense<0.000000e+00> : vector<256xf32>
    %36 = vector.multi_reduction <add>, %35, %cst_20 [1] : vector<256x128xf32> to vector<256xf32>
    %37 = vector.shape_cast %36 : vector<256xf32> to vector<256x1xf32>
    %38 = arith.addf %34, %37 : vector<256x1xf32>
    %c0_21 = arith.constant 0 : index
    %c0_22 = arith.constant 0 : index
    %39 = vector.load %arg12[%c0_21, %c0_22] : memref<256x1xf32, #tpu.memory_space<vmem>>, vector<256x1xf32>
    tpu.vector_store %arg12[%c0_21, %c0_22], %38 {strides = array<i32>} : memref<256x1xf32, #tpu.memory_space<vmem>>, vector<256x1xf32>,
    %c0_23 = arith.constant 0 : index
    %c0_24 = arith.constant 0 : index
    %40 = vector.load %arg9[%c0_23, %c0_24] : memref<256x1xf32, #tpu.memory_space<vmem>>, vector<256x1xf32>
    %cst_25 = arith.constant dense<0xFF800000> : vector<256xf32>
    %41 = vector.multi_reduction <maximumf>, %7, %cst_25 [1] : vector<256x128xf32> to vector<256xf32>
    %42 = vector.shape_cast %41 : vector<256xf32> to vector<256x1xf32>
    %43 = arith.maximumf %40, %42 : vector<256x1xf32>
    %c0_26 = arith.constant 0 : index
    %c0_27 = arith.constant 0 : index
    %44 = vector.load %arg9[%c0_26, %c0_27] : memref<256x1xf32, #tpu.memory_space<vmem>>, vector<256x1xf32>
    %45 = arith.subf %44, %43 : vector<256x1xf32>
    %46 = math.exp %45 : vector<256x1xf32>
    %47 = vector.broadcast %43 : vector<256x1xf32> to vector<256x128xf32>
    %48 = arith.subf %7, %47 : vector<256x128xf32>
    %49 = math.exp %48 : vector<256x128xf32>
    %c0_28 = arith.constant 0 : index
    %c0_29 = arith.constant 0 : index
    %50 = vector.load %arg10[%c0_28, %c0_29] : memref<256x1xf32, #tpu.memory_space<vmem>>, vector<256x1xf32>
    %51 = arith.mulf %50, %46 : vector<256x1xf32>
    %cst_30 = arith.constant dense<0.000000e+00> : vector<256xf32>
    %52 = vector.multi_reduction <add>, %49, %cst_30 [1] : vector<256x128xf32> to vector<256xf32>
    %53 = vector.shape_cast %52 : vector<256xf32> to vector<256x1xf32>
    %54 = arith.addf %51, %53 : vector<256x1xf32>
    %c0_31 = arith.constant 0 : index
    %c0_32 = arith.constant 0 : index
    %55 = vector.load %arg10[%c0_31, %c0_32] : memref<256x1xf32, #tpu.memory_space<vmem>>, vector<256x1xf32>
    tpu.vector_store %arg10[%c0_31, %c0_32], %54 {strides = array<i32>} : memref<256x1xf32, #tpu.memory_space<vmem>>, vector<256x1xf32>,
    %c0_33 = arith.constant 0 : index
    %c0_34 = arith.constant 0 : index
    %56 = vector.load %arg11[%c0_33, %c0_34] : memref<256x1xf32, #tpu.memory_space<vmem>>, vector<256x1xf32>
    %57 = arith.mulf %56, %46 : vector<256x1xf32>
    %58 = arith.subf %7, %6 : vector<256x128xf32>
    %59 = arith.mulf %49, %58 : vector<256x128xf32>
    %cst_35 = arith.constant dense<0.000000e+00> : vector<256xf32>
    %60 = vector.multi_reduction <add>, %59, %cst_35 [1] : vector<256x128xf32> to vector<256xf32>
    %61 = vector.shape_cast %60 : vector<256xf32> to vector<256x1xf32>
    %62 = arith.addf %57, %61 : vector<256x1xf32>
    %c0_36 = arith.constant 0 : index
    %c0_37 = arith.constant 0 : index
    %63 = vector.load %arg11[%c0_36, %c0_37] : memref<256x1xf32, #tpu.memory_space<vmem>>, vector<256x1xf32>
    tpu.vector_store %arg11[%c0_36, %c0_37], %62 {strides = array<i32>} : memref<256x1xf32, #tpu.memory_space<vmem>>, vector<256x1xf32>,
    %c0_38 = arith.constant 0 : index
    %c0_39 = arith.constant 0 : index
    %64 = vector.load %arg9[%c0_38, %c0_39] : memref<256x1xf32, #tpu.memory_space<vmem>>, vector<256x1xf32>
    tpu.vector_store %arg9[%c0_38, %c0_39], %43 {strides = array<i32>} : memref<256x1xf32, #tpu.memory_space<vmem>>, vector<256x1xf32>,
    %c1_i32 = arith.constant 1 : i32
    %65 = arith.cmpi eq, %arg1, %c1_i32 : i32
    %66 = arith.extui %65 : i1 to i32
    %c0_i32_40 = arith.constant 0 : i32
    %67 = arith.cmpi ne, %66, %c0_i32_40 : i32
    scf.if %67 {
      %c0_41 = arith.constant 0 : index
      %c0_42 = arith.constant 0 : index
      %68 = vector.load %arg7[%c0_41, %c0_42] : memref<256x1xf32, #tpu.memory_space<vmem>>, vector<256x1xf32>
      %c0_43 = arith.constant 0 : index
      %c0_44 = arith.constant 0 : index
      %69 = vector.load %arg8[%c0_43, %c0_44] : memref<256x1xf32, #tpu.memory_space<vmem>>, vector<256x1xf32>
      %70 = math.log %69 : vector<256x1xf32>
      %71 = arith.addf %68, %70 : vector<256x1xf32>
      %c0_45 = arith.constant 0 : index
      %c0_46 = arith.constant 0 : index
      %72 = vector.load %arg9[%c0_45, %c0_46] : memref<256x1xf32, #tpu.memory_space<vmem>>, vector<256x1xf32>
      %c0_47 = arith.constant 0 : index
      %c0_48 = arith.constant 0 : index
      %73 = vector.load %arg10[%c0_47, %c0_48] : memref<256x1xf32, #tpu.memory_space<vmem>>, vector<256x1xf32>
      %74 = math.log %73 : vector<256x1xf32>
      %75 = arith.addf %72, %74 : vector<256x1xf32>
      %c0_i32_49 = arith.constant 0 : i32
      %76 = vector.broadcast %c0_i32_49 : i32 to vector<256x1xi32>
      %77 = arith.cmpi sge, %8, %76 : vector<256x1xi32>
      %78 = arith.extui %77 : vector<256x1xi1> to vector<256x1xi32>
      %79 = arith.sitofp %78 : vector<256x1xi32> to vector<256x1xf32>
      %c-1_i32 = arith.constant -1 : i32
      %80 = vector.broadcast %c-1_i32 : i32 to vector<256x1xi32>
      %81 = arith.cmpi sge, %8, %80 : vector<256x1xi32>
      %82 = arith.extui %81 : vector<256x1xi1> to vector<256x1xi32>
      %83 = arith.sitofp %82 : vector<256x1xi32> to vector<256x1xf32>
      %c0_50 = arith.constant 0 : index
      %c0_51 = arith.constant 0 : index
      %84 = vector.load %arg12[%c0_50, %c0_51] : memref<256x1xf32, #tpu.memory_space<vmem>>, vector<256x1xf32>
      %85 = arith.subf %71, %84 : vector<256x1xf32>
      %86 = arith.mulf %85, %79 : vector<256x1xf32>
      %c0_52 = arith.constant 0 : index
      %c0_53 = arith.constant 0 : index
      %87 = vector.load %arg5[%c0_52, %c0_53] : memref<256x1xf32, #tpu.memory_space<vmem>>, vector<256x1xf32>
      tpu.vector_store %arg5[%c0_52, %c0_53], %86 {strides = array<i32>} : memref<256x1xf32, #tpu.memory_space<vmem>>, vector<256x1xf32>,
      %c0_54 = arith.constant 0 : index
      %c0_55 = arith.constant 0 : index
      %88 = vector.load %arg11[%c0_54, %c0_55] : memref<256x1xf32, #tpu.memory_space<vmem>>, vector<256x1xf32>
      %c0_56 = arith.constant 0 : index
      %c0_57 = arith.constant 0 : index
      %89 = vector.load %arg10[%c0_56, %c0_57] : memref<256x1xf32, #tpu.memory_space<vmem>>, vector<256x1xf32>
      %90 = arith.divf %88, %89 : vector<256x1xf32>
      %91 = arith.subf %90, %75 : vector<256x1xf32>
      %92 = arith.addf %91, %71 : vector<256x1xf32>
      %93 = arith.mulf %92, %83 : vector<256x1xf32>
      %c0_58 = arith.constant 0 : index
      %c0_59 = arith.constant 0 : index
      %94 = vector.load %arg6[%c0_58, %c0_59] : memref<256x1xf32, #tpu.memory_space<vmem>>, vector<256x1xf32>
      tpu.vector_store %arg6[%c0_58, %c0_59], %93 {strides = array<i32>} : memref<256x1xf32, #tpu.memory_space<vmem>>, vector<256x1xf32>,
    } else {
    }
    return
  }
  func.func @transform_0(%arg0: i32, %arg1: i32) -> (i32, i32) {
    %c0_i32 = arith.constant 0 : i32
    %c0_i32_0 = arith.constant 0 : i32
    return %arg0, %c0_i32 : i32, i32
  }
  func.func @transform_1(%arg0: i32, %arg1: i32) -> (i32, i32) {
    %c0_i32 = arith.constant 0 : i32
    %c0_i32_0 = arith.constant 0 : i32
    return %arg0, %c0_i32 : i32, i32
  }
  func.func @transform_2(%arg0: i32, %arg1: i32) -> (i32, i32) {
    %c0_i32 = arith.constant 0 : i32
    %c0_i32_0 = arith.constant 0 : i32
    return %c0_i32, %arg1 : i32, i32
  }
  func.func @transform_3(%arg0: i32, %arg1: i32) -> (i32, i32) {
    %c0_i32 = arith.constant 0 : i32
    %c0_i32_0 = arith.constant 0 : i32
    return %arg0, %c0_i32 : i32, i32
  }
  func.func @transform_4(%arg0: i32, %arg1: i32) -> (i32, i32) {
    %c0_i32 = arith.constant 0 : i32
    %c0_i32_0 = arith.constant 0 : i32
    return %arg0, %c0_i32 : i32, i32
  }
}

</mosaic_0001>

<llo_original>
// kernel: tpu_custom_call.1
$region0: #{tpu_custom_call.1}
  #allocation0 [shape = 'u32[]', space=smem, size = 0x4, offset = 0x4, fixed_abs, tag = 'smem constant byte address 0x4 - core index']
  #allocation1 [shape = 'u32[144,128]{1,0:T(1,128)}', space=vmem, size = 0x12000, scoped, tag = 'internal scratch']
  #allocation2 [shape = 'f32[256,1]{1,0:T(8,128)}', space=vmem, size = 0x20000, scoped, tag = 'scratch operand']
  #allocation3 [shape = 'f32[256,1]{1,0:T(8,128)}', space=vmem, size = 0x20000, scoped, tag = 'scratch operand']
  #allocation4 [shape = 'f32[256,1]{1,0:T(8,128)}', space=vmem, size = 0x20000, scoped, tag = 'scratch operand']
  #allocation5 [shape = 'f32[256,1]{1,0:T(8,128)}', space=vmem, size = 0x20000, scoped, tag = 'scratch operand']
  #allocation6 [shape = 'f32[256,1]{1,0:T(8,128)}', space=vmem, size = 0x20000, scoped, tag = 'scratch operand']
  #allocation7 [shape = 'f32[256,1]{1,0:T(8,128)}', space=vmem, size = 0x20000, scoped, tag = 'scratch operand']
  %s0 = inlined_call_operand.vmem [shape: s32[512,1], index: 0, kind: input, shape index: {}]
  %s1 = inlined_call_operand.vmem [shape: bf16[512,64], index: 1, kind: input, shape index: {}]
  %s2 = inlined_call_operand.vmem [shape: bf16[64,512], index: 2, kind: input, shape index: {}]
  %s3 = inlined_call_operand.vmem [shape: f32[512,1], index: 3, kind: output, shape index: {0}]
  %s4 = inlined_call_operand.vmem [shape: f32[512,1], index: 4, kind: output, shape index: {1}]
  %5 = xla_tuple %s3, %s4
  %s6 = sld [smem:[#allocation0]]
  $region99: #{tpu_custom_call.1} parent=0
    _
  %s8 = ssub.s32 1, %s6
  %s9 = scalar_select 0, %s8, %s6
  $region1: #{tpu_custom_call.1} parent=0
    #allocation8 [shape = 'u8[65536]{0}', space=vmem, size = 0x10000, scoped, tag = 'input window, operand 2']
    loop: start=0, step=1, limit=6
    $region2: #{tpu_custom_call.1} parent=1 // loop_pre_header
      _
    $region3: #{tpu_custom_call.1} parent=1 // loop_header
      %s11 = sphi 0, %s15
      %p12 = scmp.ge.s32.totalorder %s11, 6
      %s18 = sphi 0, %s30
      %s19 = sphi 0, %s26
      %s20 = sphi 0, %s18
      %s21 = sphi 0, %s19
      %s22 = sphi 0, %s20
      %s23 = sphi 0, %s21
      %s33 = sphi 0, %s35
      %s36 = sphi 0, %s33
      %s37 = sphi 0, %s36
      %s53 = sphi 0, %s37
      %s59 = sphi 0, %s61
      %s62 = sphi 0, %s59
      %s63 = sphi 0, %s62
      %s79 = sphi 0, %s63
      %s85 = sphi 0, %s87
      %s88 = sphi 0, %s85
      %s89 = sphi 0, %s88
      %s105 = sphi 0, %s89
      %s111 = sphi 0, %s113
      %s114 = sphi 0, %s111
      %s115 = sphi 0, %s114
      %s131 = sphi 0, %s115
      %s137 = sphi 0, %s139
      %s140 = sphi 0, %s137
      %s141 = sphi 0, %s140
      %s157 = sphi 0, %s141
    $region4: #{tpu_custom_call.1} parent=1 // loop_header_branch
      %14 = sbr.rel (%p12) target = $region8
    $region5: #{tpu_custom_call.1} parent=1 // loop_body
      %s16 = ssub.s32 %s11, 1
      %s17 = ssub.s32 %s11, 2
      %s24 = sadd.s32 1, %s19
      %p25 = scmp.ge.s32.totalorder %s24, 2
      %s26 = scalar_select %p25, 0, %s24
      %s27 = sadd.s32 1, %s18
      %s28 = scalar_select %p25, %s27, %s18
      %p29 = scmp.ge.s32.totalorder %s28, 2
      %s30 = scalar_select %p29, 0, %s28
      %s31 = ssub.s32 %s18, %s30
      %p32 = scmp.eq.s32.totalorder %s31, 0
      %s34 = sadd.s32 %s33, 1
      %s35 = scalar_select %p32, %s33, %s34
      %p38 = pneg %p32
      %p39 = scmp.eq.s32.totalorder %s11, 3
      %p40 = por %p38, %p39
      %p41 = scmp.ne.s32.totalorder %s33, %s36
      %p42 = scmp.eq.s32.totalorder %s11, 0
      %p43 = por %p41, %p42
      %p44 = scmp.ne.s32.totalorder %s33, %s36
      %p45 = scmp.eq.s32.totalorder %s16, 3
      %p46 = por %p44, %p45
      %p47 = scmp.ne.s32.totalorder %s36, %s37
      %p48 = scmp.eq.s32.totalorder %s16, 0
      %p49 = por %p47, %p48
      %p50 = scmp.ne.s32.totalorder %s36, %s37
      %p51 = scmp.eq.s32.totalorder %s17, 3
      %p52 = por %p50, %p51
      %p54 = scmp.ne.s32.totalorder %s37, %s53
      %p55 = scmp.eq.s32.totalorder %s17, 0
      %p56 = por %p54, %p55
      %s57 = ssub.s32 %s18, %s30
      %p58 = scmp.eq.s32.totalorder %s57, 0
      %s60 = sadd.s32 %s59, 1
      %s61 = scalar_select %p58, %s59, %s60
      %p64 = pneg %p58
      %p65 = scmp.eq.s32.totalorder %s11, 3
      %p66 = por %p64, %p65
      %p67 = scmp.ne.s32.totalorder %s59, %s62
      %p68 = scmp.eq.s32.totalorder %s11, 0
      %p69 = por %p67, %p68
      %p70 = scmp.ne.s32.totalorder %s59, %s62
      %p71 = scmp.eq.s32.totalorder %s16, 3
      %p72 = por %p70, %p71
      %p73 = scmp.ne.s32.totalorder %s62, %s63
      %p74 = scmp.eq.s32.totalorder %s16, 0
      %p75 = por %p73, %p74
      %p76 = scmp.ne.s32.totalorder %s62, %s63
      %p77 = scmp.eq.s32.totalorder %s17, 3
      %p78 = por %p76, %p77
      %p80 = scmp.ne.s32.totalorder %s63, %s79
      %p81 = scmp.eq.s32.totalorder %s17, 0
      %p82 = por %p80, %p81
      %s83 = ssub.s32 %s19, %s26
      %p84 = scmp.eq.s32.totalorder %s83, 0
      %s86 = sadd.s32 %s85, 1
      %s87 = scalar_select %p84, %s85, %s86
      %p90 = pneg %p84
      %p91 = scmp.eq.s32.totalorder %s11, 3
      %p92 = por %p90, %p91
      %p93 = scmp.ne.s32.totalorder %s85, %s88
      %p94 = scmp.eq.s32.totalorder %s11, 0
      %p95 = por %p93, %p94
      %p96 = scmp.ne.s32.totalorder %s85, %s88
      %p97 = scmp.eq.s32.totalorder %s16, 3
      %p98 = por %p96, %p97
      %p99 = scmp.ne.s32.totalorder %s88, %s89
      %p100 = scmp.eq.s32.totalorder %s16, 0
      %p101 = por %p99, %p100
      %p102 = scmp.ne.s32.totalorder %s88, %s89
      %p103 = scmp.eq.s32.totalorder %s17, 3
      %p104 = por %p102, %p103
      %p106 = scmp.ne.s32.totalorder %s89, %s105
      %p107 = scmp.eq.s32.totalorder %s17, 0
      %p108 = por %p106, %p107
      %s109 = ssub.s32 %s18, %s30
      %p110 = scmp.eq.s32.totalorder %s109, 0
      %s112 = sadd.s32 %s111, 1
      %s113 = scalar_select %p110, %s111, %s112
      %p116 = pneg %p110
      %p117 = scmp.eq.s32.totalorder %s11, 3
      %p118 = por %p116, %p117
      %p119 = scmp.ne.s32.totalorder %s111, %s114
      %p120 = scmp.eq.s32.totalorder %s11, 0
      %p121 = por %p119, %p120
      %p122 = scmp.ne.s32.totalorder %s111, %s114
      %p123 = scmp.eq.s32.totalorder %s16, 3
      %p124 = por %p122, %p123
      %p125 = scmp.ne.s32.totalorder %s114, %s115
      %p126 = scmp.eq.s32.totalorder %s16, 0
      %p127 = por %p125, %p126
      %p128 = scmp.ne.s32.totalorder %s114, %s115
      %p129 = scmp.eq.s32.totalorder %s17, 3
      %p130 = por %p128, %p129
      %p132 = scmp.ne.s32.totalorder %s115, %s131
      %p133 = scmp.eq.s32.totalorder %s17, 0
      %p134 = por %p132, %p133
      %s135 = ssub.s32 %s18, %s30
      %p136 = scmp.eq.s32.totalorder %s135, 0
      %s138 = sadd.s32 %s137, 1
      %s139 = scalar_select %p136, %s137, %s138
      %p142 = pneg %p136
      %p143 = scmp.eq.s32.totalorder %s11, 3
      %p144 = por %p142, %p143
      %p145 = scmp.ne.s32.totalorder %s137, %s140
      %p146 = scmp.eq.s32.totalorder %s11, 0
      %p147 = por %p145, %p146
      %p148 = scmp.ne.s32.totalorder %s137, %s140
      %p149 = scmp.eq.s32.totalorder %s16, 3
      %p150 = por %p148, %p149
      %p151 = scmp.ne.s32.totalorder %s140, %s141
      %p152 = scmp.eq.s32.totalorder %s16, 0
      %p153 = por %p151, %p152
      %p154 = scmp.ne.s32.totalorder %s140, %s141
      %p155 = scmp.eq.s32.totalorder %s17, 3
      %p156 = por %p154, %p155
      %p158 = scmp.ne.s32.totalorder %s141, %s157
      %p159 = scmp.eq.s32.totalorder %s17, 0
      %p160 = por %p158, %p159
      %p161 = scmp.le.s32.totalorder 1, %s11
      %p162 = scmp.lt.s32.totalorder %s11, 5
      %p163 = pnand %p161, %p162
      %p164 = pneg %p163
      // Predicated region
      $region9: #{tpu_custom_call.1} parent=5 // pred_check
        _
      $region10: #{tpu_custom_call.1} parent=5 // pred_check_branch
        %166 = sbr.rel (%p163) target = $region12
      $region11: #{tpu_custom_call.1} parent=5 // pred_region
        %s167 = ssub.s32 %s11, 1
      $region12: #{tpu_custom_call.1} parent=5 // pred_fallthru
        _
      %p168 = scmp.lt.s32.totalorder %s11, 4
      // Predicated region
      $region13: #{tpu_custom_call.1} parent=5 // pred_check
        %p169 = pneg %p168
      $region14: #{tpu_custom_call.1} parent=5 // pred_check_branch
        %171 = sbr.rel (%p169) target = $region16
      $region15: #{tpu_custom_call.1} parent=5 // pred_region
        // Predicated region
        $region17: #{tpu_custom_call.1} parent=15 // pred_check
          %p172 = pneg %p43
        $region18: #{tpu_custom_call.1} parent=15 // pred_check_branch
          %174 = sbr.rel (%p172) target = $region20
        $region19: #{tpu_custom_call.1} parent=15 // pred_region
          %s175 = smul.u32 32, %s18
          %p176 = scmp.lt.s32.totalorder %s175, 63
          %s177 = scalar_select %p176, %s175, 63
          %s178 = smul.addr %s177, 8
          %s179 = scalar_lea.vmem %s0, %s178
          %s180 = smul.u32 32, %s18
        $region20: #{tpu_custom_call.1} parent=15 // pred_fallthru
          _
        // Predicated region
        $region21: #{tpu_custom_call.1} parent=15 // pred_check
          %p181 = pneg %p69
        $region22: #{tpu_custom_call.1} parent=15 // pred_check_branch
          %183 = sbr.rel (%p181) target = $region24
        $region23: #{tpu_custom_call.1} parent=15 // pred_region
          %s184 = smul.u32 32, %s18
          %p185 = scmp.lt.s32.totalorder %s184, 63
          %s186 = scalar_select %p185, %s184, 63
          %s187 = smul.addr %s186, 4
          %s188 = scalar_lea.vmem %s1, %s187
          %s189 = smul.u32 32, %s18
        $region24: #{tpu_custom_call.1} parent=15 // pred_fallthru
          _
        // Predicated region
        $region25: #{tpu_custom_call.1} parent=15 // pred_check
          %p190 = pneg %p95
        $region26: #{tpu_custom_call.1} parent=15 // pred_check_branch
          %192 = sbr.rel (%p190) target = $region28
        $region27: #{tpu_custom_call.1} parent=15 // pred_region
          %s193 = sand.u32 %s85, 1
          %s194 = sand.u32 %s85, 1
          %s195 = smul.addr %s194, 64
          %s196 = scalar_lea.vmem [#allocation8], %s195
          %s197 = smul.u32 2, %s19
          %s198 = smul.addr %s197, 4
          %s199 = scalar_lea.vmem %s2, %s198
          // Predicated region
          $region29: #{tpu_custom_call.1} parent=27 // pred_check
            _
          $region30: #{tpu_custom_call.1} parent=27 // pred_check_branch
            %201 = sbr.rel (0) target = $region32
          $region31: #{tpu_custom_call.1} parent=27 // pred_region
            // Predicated region
            $region33: #{tpu_custom_call.1} parent=31 // pred_check
              _
            $region34: #{tpu_custom_call.1} parent=31 // pred_check_branch
              %203 = sbr.rel (0) target = $region36
            $region35: #{tpu_custom_call.1} parent=31 // pred_region
              // Predicated region
              $region48: #{tpu_custom_call.1} parent=35 // pred_check
                _
              $region49: #{tpu_custom_call.1} parent=35 // pred_check_branch
                %233 = sbr.rel (0) target = $region51
              $region50: #{tpu_custom_call.1} parent=35 // pred_region
                loop: start=0, step=1, limit=1
                $region52: #{tpu_custom_call.1} parent=50 // loop_pre_header
                  _
                $region53: #{tpu_custom_call.1} parent=50 // loop_header
                  %s235 = sphi 0, %s239
                  %p236 = scmp.ge.s32.totalorder %s235, 1
                  %s240 = sphi %s199, %s199
                  %s241 = sphi %s196, %s196
                $region54: #{tpu_custom_call.1} parent=50 // loop_header_branch
                  %238 = sbr.rel (%p236) target = $region58
                $region55: #{tpu_custom_call.1} parent=50 // loop_body
                  %v242 = vld [vmem:[%s240] sm:$0xff]
                  %243 = vst [vmem:[%s241] sm:$0xff] %v242
                  %v244 = vld [vmem:[%s240 + $0x10] sm:$0xff]
                  %245 = vst [vmem:[%s241 + $0x8] sm:$0xff] %v244
                  %v246 = vld [vmem:[%s240 + $0x20] sm:$0xff]
                  %247 = vst [vmem:[%s241 + $0x10] sm:$0xff] %v246
                  %v248 = vld [vmem:[%s240 + $0x30] sm:$0xff]
                  %249 = vst [vmem:[%s241 + $0x18] sm:$0xff] %v248
                  %v250 = vld [vmem:[%s240 + $0x40] sm:$0xff]
                  %251 = vst [vmem:[%s241 + $0x20] sm:$0xff] %v250
                  %v252 = vld [vmem:[%s240 + $0x50] sm:$0xff]
                  %253 = vst [vmem:[%s241 + $0x28] sm:$0xff] %v252
                  %v254 = vld [vmem:[%s240 + $0x60] sm:$0xff]
                  %255 = vst [vmem:[%s241 + $0x30] sm:$0xff] %v254
                  %v256 = vld [vmem:[%s240 + $0x70] sm:$0xff]
                  %257 = vst [vmem:[%s241 + $0x38] sm:$0xff] %v256
                $region56: #{tpu_custom_call.1} parent=50 // loop_footer
                  %s239 = sadd.s32 1, %s235
                $region57: #{tpu_custom_call.1} parent=50 // loop_footer_branch
                  %234 = sbr.rel target = $region53
                $region58: #{tpu_custom_call.1} parent=50 // loop_exit
                  _
              $region51: #{tpu_custom_call.1} parent=35 // pred_fallthru
                _
              // Predicated region
              $region59: #{tpu_custom_call.1} parent=35 // pred_check
                _
              $region60: #{tpu_custom_call.1} parent=35 // pred_check_branch
                %259 = sbr.rel target = $region62
              $region61: #{tpu_custom_call.1} parent=35 // pred_region
                _
              $region62: #{tpu_custom_call.1} parent=35 // pred_fallthru
                _
            $region36: #{tpu_custom_call.1} parent=31 // pred_fallthru
              _
            // Predicated region
            $region37: #{tpu_custom_call.1} parent=31 // pred_check
              _
            $region38: #{tpu_custom_call.1} parent=31 // pred_check_branch
              %205 = sbr.rel target = $region40
            $region39: #{tpu_custom_call.1} parent=31 // pred_region
              %s207 = ssub.s32 256, 1
              loop: start=0, step=1, limit=1
              $region41: #{tpu_custom_call.1} parent=39 // loop_pre_header
                _
              $region42: #{tpu_custom_call.1} parent=39 // loop_header
                %s209 = sphi 0, %s213
                %p210 = scmp.ge.s32.totalorder %s209, 1
                %s214 = sphi %s199, %s199
                %s215 = sphi %s196, %s196
              $region43: #{tpu_custom_call.1} parent=39 // loop_header_branch
                %212 = sbr.rel (%p210) target = $region47
              $region44: #{tpu_custom_call.1} parent=39 // loop_body
                %v216 = vld [vmem:[%s214] sm:%s207]
                %217 = vst [vmem:[%s215] sm:%s207] %v216
                %v218 = vld [vmem:[%s214 + $0x10] sm:%s207]
                %219 = vst [vmem:[%s215 + $0x8] sm:%s207] %v218
                %v220 = vld [vmem:[%s214 + $0x20] sm:%s207]
                %221 = vst [vmem:[%s215 + $0x10] sm:%s207] %v220
                %v222 = vld [vmem:[%s214 + $0x30] sm:%s207]
                %223 = vst [vmem:[%s215 + $0x18] sm:%s207] %v222
                %v224 = vld [vmem:[%s214 + $0x40] sm:%s207]
                %225 = vst [vmem:[%s215 + $0x20] sm:%s207] %v224
                %v226 = vld [vmem:[%s214 + $0x50] sm:%s207]
                %227 = vst [vmem:[%s215 + $0x28] sm:%s207] %v226
                %v228 = vld [vmem:[%s214 + $0x60] sm:%s207]
                %229 = vst [vmem:[%s215 + $0x30] sm:%s207] %v228
                %v230 = vld [vmem:[%s214 + $0x70] sm:%s207]
                %231 = vst [vmem:[%s215 + $0x38] sm:%s207] %v230
              $region45: #{tpu_custom_call.1} parent=39 // loop_footer
                %s213 = sadd.s32 1, %s209
              $region46: #{tpu_custom_call.1} parent=39 // loop_footer_branch
                %208 = sbr.rel target = $region42
              $region47: #{tpu_custom_call.1} parent=39 // loop_exit
                _
            $region40: #{tpu_custom_call.1} parent=31 // pred_fallthru
              _
          $region32: #{tpu_custom_call.1} parent=27 // pred_fallthru
            _
          %260 = vnop
        $region28: #{tpu_custom_call.1} parent=15 // pred_fallthru
          _
      $region16: #{tpu_custom_call.1} parent=5 // pred_fallthru
        _
      %p261 = scmp.le.s32.totalorder 1, %s11
      %p262 = scmp.lt.s32.totalorder %s11, 5
      %p263 = pnand %p261, %p262
      %p264 = pneg %p263
      // Predicated region
      $region63: #{tpu_custom_call.1} parent=5 // pred_check
        _
      $region64: #{tpu_custom_call.1} parent=5 // pred_check_branch
        %266 = sbr.rel (%p263) target = $region66
      $region65: #{tpu_custom_call.1} parent=5 // pred_region
        %s267 = ssub.s32 %s11, 1
        %s268 = sand.u32 %s88, 1
        %s269 = sand.u32 %s88, 1
        %s270 = smul.addr %s269, 64
        %s271 = scalar_lea.vmem [#allocation8], %s270
        // Predicated region
        $region67: #{tpu_custom_call.1} parent=65 // pred_check
          %p272 = pneg %p101
        $region68: #{tpu_custom_call.1} parent=65 // pred_check_branch
          %274 = sbr.rel (%p272) target = $region70
        $region69: #{tpu_custom_call.1} parent=65 // pred_region
          _
        $region70: #{tpu_custom_call.1} parent=65 // pred_fallthru
          _
        %s275 = smul.u32 32, %s20
        %p276 = scmp.lt.s32.totalorder %s275, 63
        %s277 = scalar_select %p276, %s275, 63
        %s278 = smul.addr %s277, 8
        %s279 = scalar_lea.vmem %s0, %s278
        %p280 = pneg %p49
        %p281 = pneg %p46
        %s282 = smul.u32 32, %s20
        %p283 = scmp.lt.s32.totalorder %s282, 63
        %s284 = scalar_select %p283, %s282, 63
        %s285 = smul.addr %s284, 4
        %s286 = scalar_lea.vmem %s1, %s285
        %p287 = pneg %p75
        %p288 = pneg %p72
        %s289 = sand.u32 %s88, 1
        %s290 = sand.u32 %s88, 1
        %s291 = smul.addr %s290, 64
        %s292 = scalar_lea.vmem [#allocation8], %s291
        %p293 = pneg %p101
        %p294 = pneg %p98
        %p295 = pneg %p127
        %p296 = pneg %p124
        %s297 = smul.u32 32, %s20
        %p298 = scmp.lt.s32.totalorder %s297, 63
        %s299 = scalar_select %p298, %s297, 63
        %s300 = smul.addr %s299, 8
        %s301 = scalar_lea.vmem %s3, %s300
        %p302 = pneg %p153
        %p303 = pneg %p150
        %s304 = smul.u32 32, %s20
        %p305 = scmp.lt.s32.totalorder %s304, 63
        %s306 = scalar_select %p305, %s304, 63
        %s307 = smul.addr %s306, 8
        %s308 = scalar_lea.vmem %s4, %s307
        %s309 = smul.u32 32, %s20
        %p310 = scmp.lt.s32.totalorder %s309, 63
        %s311 = scalar_select %p310, %s309, 63
        %s312 = smul.addr %s311, 8
        %s313 = scalar_lea.vmem %s0, %s312
        %s314 = smul.u32 32, %s20
        %s315 = smul.u32 32, %s20
        %p316 = scmp.lt.s32.totalorder %s315, 63
        %s317 = scalar_select %p316, %s315, 63
        %s318 = smul.addr %s317, 4
        %s319 = scalar_lea.vmem %s1, %s318
        %s320 = smul.u32 32, %s20
        %s321 = smul.u32 2, %s21
        %s322 = smul.u32 32, %s20
        %p323 = scmp.lt.s32.totalorder %s322, 63
        %s324 = scalar_select %p323, %s322, 63
        %s325 = smul.addr %s324, 8
        %s326 = scalar_lea.vmem %s3, %s325
        %s327 = smul.u32 32, %s20
        %s328 = smul.u32 32, %s20
        %p329 = scmp.lt.s32.totalorder %s328, 63
        %s330 = scalar_select %p329, %s328, 63
        %s331 = smul.addr %s330, 8
        %s332 = scalar_lea.vmem %s4, %s331
        %s333 = smul.u32 32, %s20
        %p335 = scmp.eq.s32.totalorder %s21, 0
        // Predicated region
        $region71: #{tpu_custom_call.1} parent=65 // pred_check
          %p336 = pneg %p335
        $region72: #{tpu_custom_call.1} parent=65 // pred_check_branch
          %338 = sbr.rel (%p336) target = $region74
        $region73: #{tpu_custom_call.1} parent=65 // pred_region
          %vm339 = vcmask 7168
          %340 = vst.msk [vmem:[#allocation2] sm:$0xff] %vm339, -inf
          %341 = vst.msk [vmem:[#allocation2 + $0x8] sm:$0xff] %vm339, -inf
          %342 = vst.msk [vmem:[#allocation2 + $0x10] sm:$0xff] %vm339, -inf
          %343 = vst.msk [vmem:[#allocation2 + $0x18] sm:$0xff] %vm339, -inf
          %344 = vst.msk [vmem:[#allocation2 + $0x20] sm:$0xff] %vm339, -inf
          %345 = vst.msk [vmem:[#allocation2 + $0x28] sm:$0xff] %vm339, -inf
          %346 = vst.msk [vmem:[#allocation2 + $0x30] sm:$0xff] %vm339, -inf
          %347 = vst.msk [vmem:[#allocation2 + $0x38] sm:$0xff] %vm339, -inf
          %348 = vst.msk [vmem:[#allocation2 + $0x40] sm:$0xff] %vm339, -inf
          %349 = vst.msk [vmem:[#allocation2 + $0x48] sm:$0xff] %vm339, -inf
          %350 = vst.msk [vmem:[#allocation2 + $0x50] sm:$0xff] %vm339, -inf
          %351 = vst.msk [vmem:[#allocation2 + $0x58] sm:$0xff] %vm339, -inf
          %352 = vst.msk [vmem:[#allocation2 + $0x60] sm:$0xff] %vm339, -inf
          %353 = vst.msk [vmem:[#allocation2 + $0x68] sm:$0xff] %vm339, -inf
          %354 = vst.msk [vmem:[#allocation2 + $0x70] sm:$0xff] %vm339, -inf
          %355 = vst.msk [vmem:[#allocation2 + $0x78] sm:$0xff] %vm339, -inf
          %356 = vst.msk [vmem:[#allocation2 + $0x80] sm:$0xff] %vm339, -inf
          %357 = vst.msk [vmem:[#allocation2 + $0x88] sm:$0xff] %vm339, -inf
          %358 = vst.msk [vmem:[#allocation2 + $0x90] sm:$0xff] %vm339, -inf
          %359 = vst.msk [vmem:[#allocation2 + $0x98] sm:$0xff] %vm339, -inf
          %360 = vst.msk [vmem:[#allocation2 + $0xa0] sm:$0xff] %vm339, -inf
          %361 = vst.msk [vmem:[#allocation2 + $0xa8] sm:$0xff] %vm339, -inf
          %362 = vst.msk [vmem:[#allocation2 + $0xb0] sm:$0xff] %vm339, -inf
          %363 = vst.msk [vmem:[#allocation2 + $0xb8] sm:$0xff] %vm339, -inf
          %364 = vst.msk [vmem:[#allocation2 + $0xc0] sm:$0xff] %vm339, -inf
          %365 = vst.msk [vmem:[#allocation2 + $0xc8] sm:$0xff] %vm339, -inf
          %366 = vst.msk [vmem:[#allocation2 + $0xd0] sm:$0xff] %vm339, -inf
          %367 = vst.msk [vmem:[#allocation2 + $0xd8] sm:$0xff] %vm339, -inf
          %368 = vst.msk [vmem:[#allocation2 + $0xe0] sm:$0xff] %vm339, -inf
          %369 = vst.msk [vmem:[#allocation2 + $0xe8] sm:$0xff] %vm339, -inf
          %370 = vst.msk [vmem:[#allocation2 + $0xf0] sm:$0xff] %vm339, -inf
          %371 = vst.msk [vmem:[#allocation2 + $0xf8] sm:$0xff] %vm339, -inf
          %372 = vst.msk [vmem:[#allocation4] sm:$0xff] %vm339, -inf
          %373 = vst.msk [vmem:[#allocation4 + $0x8] sm:$0xff] %vm339, -inf
          %374 = vst.msk [vmem:[#allocation4 + $0x10] sm:$0xff] %vm339, -inf
          %375 = vst.msk [vmem:[#allocation4 + $0x18] sm:$0xff] %vm339, -inf
          %376 = vst.msk [vmem:[#allocation4 + $0x20] sm:$0xff] %vm339, -inf
          %377 = vst.msk [vmem:[#allocation4 + $0x28] sm:$0xff] %vm339, -inf
          %378 = vst.msk [vmem:[#allocation4 + $0x30] sm:$0xff] %vm339, -inf
          %379 = vst.msk [vmem:[#allocation4 + $0x38] sm:$0xff] %vm339, -inf
          %380 = vst.msk [vmem:[#allocation4 + $0x40] sm:$0xff] %vm339, -inf
          %381 = vst.msk [vmem:[#allocation4 + $0x48] sm:$0xff] %vm339, -inf
          %382 = vst.msk [vmem:[#allocation4 + $0x50] sm:$0xff] %vm339, -inf
          %383 = vst.msk [vmem:[#allocation4 + $0x58] sm:$0xff] %vm339, -inf
          %384 = vst.msk [vmem:[#allocation4 + $0x60] sm:$0xff] %vm339, -inf
          %385 = vst.msk [vmem:[#allocation4 + $0x68] sm:$0xff] %vm339, -inf
          %386 = vst.msk [vmem:[#allocation4 + $0x70] sm:$0xff] %vm339, -inf
          %387 = vst.msk [vmem:[#allocation4 + $0x78] sm:$0xff] %vm339, -inf
          %388 = vst.msk [vmem:[#allocation4 + $0x80] sm:$0xff] %vm339, -inf
          %389 = vst.msk [vmem:[#allocation4 + $0x88] sm:$0xff] %vm339, -inf
          %390 = vst.msk [vmem:[#allocation4 + $0x90] sm:$0xff] %vm339, -inf
          %391 = vst.msk [vmem:[#allocation4 + $0x98] sm:$0xff] %vm339, -inf
          %392 = vst.msk [vmem:[#allocation4 + $0xa0] sm:$0xff] %vm339, -inf
          %393 = vst.msk [vmem:[#allocation4 + $0xa8] sm:$0xff] %vm339, -inf
          %394 = vst.msk [vmem:[#allocation4 + $0xb0] sm:$0xff] %vm339, -inf
          %395 = vst.msk [vmem:[#allocation4 + $0xb8] sm:$0xff] %vm339, -inf
          %396 = vst.msk [vmem:[#allocation4 + $0xc0] sm:$0xff] %vm339, -inf
          %397 = vst.msk [vmem:[#allocation4 + $0xc8] sm:$0xff] %vm339, -inf
          %398 = vst.msk [vmem:[#allocation4 + $0xd0] sm:$0xff] %vm339, -inf
          %399 = vst.msk [vmem:[#allocation4 + $0xd8] sm:$0xff] %vm339, -inf
          %400 = vst.msk [vmem:[#allocation4 + $0xe0] sm:$0xff] %vm339, -inf
          %401 = vst.msk [vmem:[#allocation4 + $0xe8] sm:$0xff] %vm339, -inf
          %402 = vst.msk [vmem:[#allocation4 + $0xf0] sm:$0xff] %vm339, -inf
          %403 = vst.msk [vmem:[#allocation4 + $0xf8] sm:$0xff] %vm339, -inf
          %404 = vst.msk [vmem:[#allocation3] sm:$0xff] %vm339, 0.0
          %405 = vst.msk [vmem:[#allocation3 + $0x8] sm:$0xff] %vm339, 0.0
          %406 = vst.msk [vmem:[#allocation3 + $0x10] sm:$0xff] %vm339, 0.0
          %407 = vst.msk [vmem:[#allocation3 + $0x18] sm:$0xff] %vm339, 0.0
          %408 = vst.msk [vmem:[#allocation3 + $0x20] sm:$0xff] %vm339, 0.0
          %409 = vst.msk [vmem:[#allocation3 + $0x28] sm:$0xff] %vm339, 0.0
          %410 = vst.msk [vmem:[#allocation3 + $0x30] sm:$0xff] %vm339, 0.0
          %411 = vst.msk [vmem:[#allocation3 + $0x38] sm:$0xff] %vm339, 0.0
          %412 = vst.msk [vmem:[#allocation3 + $0x40] sm:$0xff] %vm339, 0.0
          %413 = vst.msk [vmem:[#allocation3 + $0x48] sm:$0xff] %vm339, 0.0
          %414 = vst.msk [vmem:[#allocation3 + $0x50] sm:$0xff] %vm339, 0.0
          %415 = vst.msk [vmem:[#allocation3 + $0x58] sm:$0xff] %vm339, 0.0
          %416 = vst.msk [vmem:[#allocation3 + $0x60] sm:$0xff] %vm339, 0.0
          %417 = vst.msk [vmem:[#allocation3 + $0x68] sm:$0xff] %vm339, 0.0
          %418 = vst.msk [vmem:[#allocation3 + $0x70] sm:$0xff] %vm339, 0.0
          %419 = vst.msk [vmem:[#allocation3 + $0x78] sm:$0xff] %vm339, 0.0
          %420 = vst.msk [vmem:[#allocation3 + $0x80] sm:$0xff] %vm339, 0.0
          %421 = vst.msk [vmem:[#allocation3 + $0x88] sm:$0xff] %vm339, 0.0
          %422 = vst.msk [vmem:[#allocation3 + $0x90] sm:$0xff] %vm339, 0.0
          %423 = vst.msk [vmem:[#allocation3 + $0x98] sm:$0xff] %vm339, 0.0
          %424 = vst.msk [vmem:[#allocation3 + $0xa0] sm:$0xff] %vm339, 0.0
          %425 = vst.msk [vmem:[#allocation3 + $0xa8] sm:$0xff] %vm339, 0.0
          %426 = vst.msk [vmem:[#allocation3 + $0xb0] sm:$0xff] %vm339, 0.0
          %427 = vst.msk [vmem:[#allocation3 + $0xb8] sm:$0xff] %vm339, 0.0
          %428 = vst.msk [vmem:[#allocation3 + $0xc0] sm:$0xff] %vm339, 0.0
          %429 = vst.msk [vmem:[#allocation3 + $0xc8] sm:$0xff] %vm339, 0.0
          %430 = vst.msk [vmem:[#allocation3 + $0xd0] sm:$0xff] %vm339, 0.0
          %431 = vst.msk [vmem:[#allocation3 + $0xd8] sm:$0xff] %vm339, 0.0
          %432 = vst.msk [vmem:[#allocation3 + $0xe0] sm:$0xff] %vm339, 0.0
          %433 = vst.msk [vmem:[#allocation3 + $0xe8] sm:$0xff] %vm339, 0.0
          %434 = vst.msk [vmem:[#allocation3 + $0xf0] sm:$0xff] %vm339, 0.0
          %435 = vst.msk [vmem:[#allocation3 + $0xf8] sm:$0xff] %vm339, 0.0
          %436 = vst.msk [vmem:[#allocation5] sm:$0xff] %vm339, 0.0
          %437 = vst.msk [vmem:[#allocation5 + $0x8] sm:$0xff] %vm339, 0.0
          %438 = vst.msk [vmem:[#allocation5 + $0x10] sm:$0xff] %vm339, 0.0
          %439 = vst.msk [vmem:[#allocation5 + $0x18] sm:$0xff] %vm339, 0.0
          %440 = vst.msk [vmem:[#allocation5 + $0x20] sm:$0xff] %vm339, 0.0
          %441 = vst.msk [vmem:[#allocation5 + $0x28] sm:$0xff] %vm339, 0.0
          %442 = vst.msk [vmem:[#allocation5 + $0x30] sm:$0xff] %vm339, 0.0
          %443 = vst.msk [vmem:[#allocation5 + $0x38] sm:$0xff] %vm339, 0.0
          %444 = vst.msk [vmem:[#allocation5 + $0x40] sm:$0xff] %vm339, 0.0
          %445 = vst.msk [vmem:[#allocation5 + $0x48] sm:$0xff] %vm339, 0.0
          %446 = vst.msk [vmem:[#allocation5 + $0x50] sm:$0xff] %vm339, 0.0
          %447 = vst.msk [vmem:[#allocation5 + $0x58] sm:$0xff] %vm339, 0.0
          %448 = vst.msk [vmem:[#allocation5 + $0x60] sm:$0xff] %vm339, 0.0
          %449 = vst.msk [vmem:[#allocation5 + $0x68] sm:$0xff] %vm339, 0.0
          %450 = vst.msk [vmem:[#allocation5 + $0x70] sm:$0xff] %vm339, 0.0
          %451 = vst.msk [vmem:[#allocation5 + $0x78] sm:$0xff] %vm339, 0.0
          %452 = vst.msk [vmem:[#allocation5 + $0x80] sm:$0xff] %vm339, 0.0
          %453 = vst.msk [vmem:[#allocation5 + $0x88] sm:$0xff] %vm339, 0.0
          %454 = vst.msk [vmem:[#allocation5 + $0x90] sm:$0xff] %vm339, 0.0
          %455 = vst.msk [vmem:[#allocation5 + $0x98] sm:$0xff] %vm339, 0.0
          %456 = vst.msk [vmem:[#allocation5 + $0xa0] sm:$0xff] %vm339, 0.0
          %457 = vst.msk [vmem:[#allocation5 + $0xa8] sm:$0xff] %vm339, 0.0
          %458 = vst.msk [vmem:[#allocation5 + $0xb0] sm:$0xff] %vm339, 0.0
          %459 = vst.msk [vmem:[#allocation5 + $0xb8] sm:$0xff] %vm339, 0.0
          %460 = vst.msk [vmem:[#allocation5 + $0xc0] sm:$0xff] %vm339, 0.0
          %461 = vst.msk [vmem:[#allocation5 + $0xc8] sm:$0xff] %vm339, 0.0
          %462 = vst.msk [vmem:[#allocation5 + $0xd0] sm:$0xff] %vm339, 0.0
          %463 = vst.msk [vmem:[#allocation5 + $0xd8] sm:$0xff] %vm339, 0.0
          %464 = vst.msk [vmem:[#allocation5 + $0xe0] sm:$0xff] %vm339, 0.0
          %465 = vst.msk [vmem:[#allocation5 + $0xe8] sm:$0xff] %vm339, 0.0
          %466 = vst.msk [vmem:[#allocation5 + $0xf0] sm:$0xff] %vm339, 0.0
          %467 = vst.msk [vmem:[#allocation5 + $0xf8] sm:$0xff] %vm339, 0.0
          %468 = vst.msk [vmem:[#allocation6] sm:$0xff] %vm339, 0.0
          %469 = vst.msk [vmem:[#allocation6 + $0x8] sm:$0xff] %vm339, 0.0
          %470 = vst.msk [vmem:[#allocation6 + $0x10] sm:$0xff] %vm339, 0.0
          %471 = vst.msk [vmem:[#allocation6 + $0x18] sm:$0xff] %vm339, 0.0
          %472 = vst.msk [vmem:[#allocation6 + $0x20] sm:$0xff] %vm339, 0.0
          %473 = vst.msk [vmem:[#allocation6 + $0x28] sm:$0xff] %vm339, 0.0
          %474 = vst.msk [vmem:[#allocation6 + $0x30] sm:$0xff] %vm339, 0.0
          %475 = vst.msk [vmem:[#allocation6 + $0x38] sm:$0xff] %vm339, 0.0
          %476 = vst.msk [vmem:[#allocation6 + $0x40] sm:$0xff] %vm339, 0.0
          %477 = vst.msk [vmem:[#allocation6 + $0x48] sm:$0xff] %vm339, 0.0
          %478 = vst.msk [vmem:[#allocation6 + $0x50] sm:$0xff] %vm339, 0.0
          %479 = vst.msk [vmem:[#allocation6 + $0x58] sm:$0xff] %vm339, 0.0
          %480 = vst.msk [vmem:[#allocation6 + $0x60] sm:$0xff] %vm339, 0.0
          %481 = vst.msk [vmem:[#allocation6 + $0x68] sm:$0xff] %vm339, 0.0
          %482 = vst.msk [vmem:[#allocation6 + $0x70] sm:$0xff] %vm339, 0.0
          %483 = vst.msk [vmem:[#allocation6 + $0x78] sm:$0xff] %vm339, 0.0
          %484 = vst.msk [vmem:[#allocation6 + $0x80] sm:$0xff] %vm339, 0.0
          %485 = vst.msk [vmem:[#allocation6 + $0x88] sm:$0xff] %vm339, 0.0
          %486 = vst.msk [vmem:[#allocation6 + $0x90] sm:$0xff] %vm339, 0.0
          %487 = vst.msk [vmem:[#allocation6 + $0x98] sm:$0xff] %vm339, 0.0
          %488 = vst.msk [vmem:[#allocation6 + $0xa0] sm:$0xff] %vm339, 0.0
          %489 = vst.msk [vmem:[#allocation6 + $0xa8] sm:$0xff] %vm339, 0.0
          %490 = vst.msk [vmem:[#allocation6 + $0xb0] sm:$0xff] %vm339, 0.0
          %491 = vst.msk [vmem:[#allocation6 + $0xb8] sm:$0xff] %vm339, 0.0
          %492 = vst.msk [vmem:[#allocation6 + $0xc0] sm:$0xff] %vm339, 0.0
          %493 = vst.msk [vmem:[#allocation6 + $0xc8] sm:$0xff] %vm339, 0.0
          %494 = vst.msk [vmem:[#allocation6 + $0xd0] sm:$0xff] %vm339, 0.0
          %495 = vst.msk [vmem:[#allocation6 + $0xd8] sm:$0xff] %vm339, 0.0
          %496 = vst.msk [vmem:[#allocation6 + $0xe0] sm:$0xff] %vm339, 0.0
          %497 = vst.msk [vmem:[#allocation6 + $0xe8] sm:$0xff] %vm339, 0.0
          %498 = vst.msk [vmem:[#allocation6 + $0xf0] sm:$0xff] %vm339, 0.0
          %499 = vst.msk [vmem:[#allocation6 + $0xf8] sm:$0xff] %vm339, 0.0
          %500 = vst.msk [vmem:[#allocation7] sm:$0xff] %vm339, 0.0
          %501 = vst.msk [vmem:[#allocation7 + $0x8] sm:$0xff] %vm339, 0.0
          %502 = vst.msk [vmem:[#allocation7 + $0x10] sm:$0xff] %vm339, 0.0
          %503 = vst.msk [vmem:[#allocation7 + $0x18] sm:$0xff] %vm339, 0.0
          %504 = vst.msk [vmem:[#allocation7 + $0x20] sm:$0xff] %vm339, 0.0
          %505 = vst.msk [vmem:[#allocation7 + $0x28] sm:$0xff] %vm339, 0.0
          %506 = vst.msk [vmem:[#allocation7 + $0x30] sm:$0xff] %vm339, 0.0
          %507 = vst.msk [vmem:[#allocation7 + $0x38] sm:$0xff] %vm339, 0.0
          %508 = vst.msk [vmem:[#allocation7 + $0x40] sm:$0xff] %vm339, 0.0
          %509 = vst.msk [vmem:[#allocation7 + $0x48] sm:$0xff] %vm339, 0.0
          %510 = vst.msk [vmem:[#allocation7 + $0x50] sm:$0xff] %vm339, 0.0
          %511 = vst.msk [vmem:[#allocation7 + $0x58] sm:$0xff] %vm339, 0.0
          %512 = vst.msk [vmem:[#allocation7 + $0x60] sm:$0xff] %vm339, 0.0
          %513 = vst.msk [vmem:[#allocation7 + $0x68] sm:$0xff] %vm339, 0.0
          %514 = vst.msk [vmem:[#allocation7 + $0x70] sm:$0xff] %vm339, 0.0
          %515 = vst.msk [vmem:[#allocation7 + $0x78] sm:$0xff] %vm339, 0.0
          %516 = vst.msk [vmem:[#allocation7 + $0x80] sm:$0xff] %vm339, 0.0
          %517 = vst.msk [vmem:[#allocation7 + $0x88] sm:$0xff] %vm339, 0.0
          %518 = vst.msk [vmem:[#allocation7 + $0x90] sm:$0xff] %vm339, 0.0
          %519 = vst.msk [vmem:[#allocation7 + $0x98] sm:$0xff] %vm339, 0.0
          %520 = vst.msk [vmem:[#allocation7 + $0xa0] sm:$0xff] %vm339, 0.0
          %521 = vst.msk [vmem:[#allocation7 + $0xa8] sm:$0xff] %vm339, 0.0
          %522 = vst.msk [vmem:[#allocation7 + $0xb0] sm:$0xff] %vm339, 0.0
          %523 = vst.msk [vmem:[#allocation7 + $0xb8] sm:$0xff] %vm339, 0.0
          %524 = vst.msk [vmem:[#allocation7 + $0xc0] sm:$0xff] %vm339, 0.0
          %525 = vst.msk [vmem:[#allocation7 + $0xc8] sm:$0xff] %vm339, 0.0
          %526 = vst.msk [vmem:[#allocation7 + $0xd0] sm:$0xff] %vm339, 0.0
          %527 = vst.msk [vmem:[#allocation7 + $0xd8] sm:$0xff] %vm339, 0.0
          %528 = vst.msk [vmem:[#allocation7 + $0xe0] sm:$0xff] %vm339, 0.0
          %529 = vst.msk [vmem:[#allocation7 + $0xe8] sm:$0xff] %vm339, 0.0
          %530 = vst.msk [vmem:[#allocation7 + $0xf0] sm:$0xff] %vm339, 0.0
          %531 = vst.msk [vmem:[#allocation7 + $0xf8] sm:$0xff] %vm339, 0.0
        $region74: #{tpu_custom_call.1} parent=65 // pred_fallthru
          _
        %v532 = vld [vmem:[%s319] sm:$0xf]
        %v533 = vld [vmem:[%s319 + $0x4] sm:$0xf]
        %v534 = vld [vmem:[%s319 + $0x8] sm:$0xf]
        %v535 = vld [vmem:[%s319 + $0xc] sm:$0xf]
        %v536 = vld [vmem:[%s319 + $0x10] sm:$0xf]
        %v537 = vld [vmem:[%s319 + $0x14] sm:$0xf]
        %v538 = vld [vmem:[%s319 + $0x18] sm:$0xf]
        %v539 = vld [vmem:[%s319 + $0x1c] sm:$0xf]
        %v540 = vld [vmem:[%s319 + $0x20] sm:$0xf]
        %v541 = vld [vmem:[%s319 + $0x24] sm:$0xf]
        %v542 = vld [vmem:[%s319 + $0x28] sm:$0xf]
        %v543 = vld [vmem:[%s319 + $0x2c] sm:$0xf]
        %v544 = vld [vmem:[%s319 + $0x30] sm:$0xf]
        %v545 = vld [vmem:[%s319 + $0x34] sm:$0xf]
        %v546 = vld [vmem:[%s319 + $0x38] sm:$0xf]
        %v547 = vld [vmem:[%s319 + $0x3c] sm:$0xf]
        %v548 = vld [vmem:[%s319 + $0x40] sm:$0xf]
        %v549 = vld [vmem:[%s319 + $0x44] sm:$0xf]
        %v550 = vld [vmem:[%s319 + $0x48] sm:$0xf]
        %v551 = vld [vmem:[%s319 + $0x4c] sm:$0xf]
        %v552 = vld [vmem:[%s319 + $0x50] sm:$0xf]
        %v553 = vld [vmem:[%s319 + $0x54] sm:$0xf]
        %v554 = vld [vmem:[%s319 + $0x58] sm:$0xf]
        %v555 = vld [vmem:[%s319 + $0x5c] sm:$0xf]
        %v556 = vld [vmem:[%s319 + $0x60] sm:$0xf]
        %v557 = vld [vmem:[%s319 + $0x64] sm:$0xf]
        %v558 = vld [vmem:[%s319 + $0x68] sm:$0xf]
        %v559 = vld [vmem:[%s319 + $0x6c] sm:$0xf]
        %v560 = vld [vmem:[%s319 + $0x70] sm:$0xf]
        %v561 = vld [vmem:[%s319 + $0x74] sm:$0xf]
        %v562 = vld [vmem:[%s319 + $0x78] sm:$0xf]
        %v563 = vld [vmem:[%s319 + $0x7c] sm:$0xf]
        %v564 = vld [vmem:[%s271] sm:$0xff]
        %v565 = vld [vmem:[%s271 + $0x8] sm:$0xff]
        %v566 = vld [vmem:[%s271 + $0x10] sm:$0xff]
        %v567 = vld [vmem:[%s271 + $0x18] sm:$0xff]
        %v568 = vld [vmem:[%s271 + $0x20] sm:$0xff]
        %v569 = vld [vmem:[%s271 + $0x28] sm:$0xff]
        %v570 = vld [vmem:[%s271 + $0x30] sm:$0xff]
        %v571 = vld [vmem:[%s271 + $0x38] sm:$0xff]
        %v604 = vunpack.c.l.b16 %v532
        %v605 = vunpack.c.l.b16 %v533
        %v606 = vunpack.c.l.b16 %v534
        %v607 = vunpack.c.l.b16 %v535
        %v608 = vunpack.c.l.b16 %v536
        %v609 = vunpack.c.l.b16 %v537
        %v610 = vunpack.c.l.b16 %v538
        %v611 = vunpack.c.l.b16 %v539
        %v612 = vunpack.c.l.b16 %v540
        %v613 = vunpack.c.l.b16 %v541
        %v614 = vunpack.c.l.b16 %v542
        %v615 = vunpack.c.l.b16 %v543
        %v616 = vunpack.c.l.b16 %v544
        %v617 = vunpack.c.l.b16 %v545
        %v618 = vunpack.c.l.b16 %v546
        %v619 = vunpack.c.l.b16 %v547
        %v620 = vunpack.c.l.b16 %v548
        %v621 = vunpack.c.l.b16 %v549
        %v622 = vunpack.c.l.b16 %v550
        %v623 = vunpack.c.l.b16 %v551
        %v624 = vunpack.c.l.b16 %v552
        %v625 = vunpack.c.l.b16 %v553
        %v626 = vunpack.c.l.b16 %v554
        %v627 = vunpack.c.l.b16 %v555
        %v628 = vunpack.c.l.b16 %v556
        %v629 = vunpack.c.l.b16 %v557
        %v630 = vunpack.c.l.b16 %v558
        %v631 = vunpack.c.l.b16 %v559
        %v632 = vunpack.c.l.b16 %v560
        %v633 = vunpack.c.l.b16 %v561
        %v634 = vunpack.c.l.b16 %v562
        %v635 = vunpack.c.l.b16 %v563
        %v636 = vpack.c.b16 %v605, %v604
        %v637 = vpack.c.b16 %v607, %v606
        %v638 = vpack.c.b16 %v609, %v608
        %v639 = vpack.c.b16 %v611, %v610
        %v640 = vpack.c.b16 %v613, %v612
        %v641 = vpack.c.b16 %v615, %v614
        %v642 = vpack.c.b16 %v617, %v616
        %v643 = vpack.c.b16 %v619, %v618
        %v644 = vpack.c.b16 %v621, %v620
        %v645 = vpack.c.b16 %v623, %v622
        %v646 = vpack.c.b16 %v625, %v624
        %v647 = vpack.c.b16 %v627, %v626
        %v648 = vpack.c.b16 %v629, %v628
        %v649 = vpack.c.b16 %v631, %v630
        %v650 = vpack.c.b16 %v633, %v632
        %v651 = vpack.c.b16 %v635, %v634
        %v660 = vunpack.c.l.b16 %v564
        %v661 = vunpack.c.h.b16 %v564
        %v662 = vunpack.c.l.b16 %v565
        %v663 = vunpack.c.h.b16 %v565
        %v664 = vunpack.c.l.b16 %v566
        %v665 = vunpack.c.h.b16 %v566
        %v666 = vunpack.c.l.b16 %v567
        %v667 = vunpack.c.h.b16 %v567
        %v668 = vunpack.c.l.b16 %v568
        %v669 = vunpack.c.h.b16 %v568
        %v670 = vunpack.c.l.b16 %v569
        %v671 = vunpack.c.h.b16 %v569
        %v672 = vunpack.c.l.b16 %v570
        %v673 = vunpack.c.h.b16 %v570
        %v674 = vunpack.c.l.b16 %v571
        %v675 = vunpack.c.h.b16 %v571
        %v676 = vpack.c.b16 %v662, %v660
        %v677 = vpack.c.b16 %v663, %v661
        %v678 = vpack.c.b16 %v666, %v664
        %v679 = vpack.c.b16 %v667, %v665
        %v680 = vpack.c.b16 %v670, %v668
        %v681 = vpack.c.b16 %v671, %v669
        %v682 = vpack.c.b16 %v674, %v672
        %v683 = vpack.c.b16 %v675, %v673
        %vm692 = vcmask 523264
        %v694 = vsel %vm692, %v636, 0
        %v697 = vsel %vm692, %v637, 0
        %v700 = vsel %vm692, %v638, 0
        %v703 = vsel %vm692, %v639, 0
        %v706 = vsel %vm692, %v640, 0
        %v709 = vsel %vm692, %v641, 0
        %v712 = vsel %vm692, %v642, 0
        %v715 = vsel %vm692, %v643, 0
        %v718 = vsel %vm692, %v644, 0
        %v721 = vsel %vm692, %v645, 0
        %v724 = vsel %vm692, %v646, 0
        %v727 = vsel %vm692, %v647, 0
        %v730 = vsel %vm692, %v648, 0
        %v733 = vsel %vm692, %v649, 0
        %v736 = vsel %vm692, %v650, 0
        %v739 = vsel %vm692, %v651, 0
        %741 = vmatprep.subr.bf16.mxu0 0
        %742 = vmatpush1.bf16.msra.mxu0 0
        %743 = vmatprep.subr.bf16.mxu0 0
        %744 = vmatpush1.bf16.msra.mxu0 0
        %745 = vmatprep.subr.bf16.mxu0 0
        %746 = vmatpush1.bf16.msra.mxu0 0
        %747 = vmatprep.subr.bf16.mxu0 0
        %748 = vmatpush1.bf16.msra.mxu0 0
        %749 = vmatprep.subr.bf16.mxu0 %v683
        %750 = vmatpush1.bf16.msra.mxu0 %v682
        %751 = vmatprep.subr.bf16.mxu0 %v681
        %752 = vmatpush1.bf16.msra.mxu0 %v680
        %753 = vmatprep.subr.bf16.mxu0 %v679
        %754 = vmatpush1.bf16.msra.mxu0 %v678
        %755 = vmatprep.subr.bf16.mxu0 %v677
        %756 = vmatpush1.bf16.msra.mxu0 %v676
        %757 = vmatprep.subr.bf16.mxu0 0
        %758 = vmatpush2.bf16.msra.mxu0 0
        %759 = vmatprep.subr.bf16.mxu0 0
        %760 = vmatpush2.bf16.msra.mxu0 0
        %761 = vmatprep.subr.bf16.mxu0 0
        %762 = vmatpush2.bf16.msra.mxu0 0
        %763 = vmatprep.subr.bf16.mxu0 0
        %764 = vmatpush2.bf16.msra.mxu0 0
        %765 = vmatprep.subr.bf16.mxu0 0
        %766 = vmatpush2.bf16.msra.mxu0 0
        %767 = vmatprep.subr.bf16.mxu0 0
        %768 = vmatpush2.bf16.msra.mxu0 0
        %769 = vmatprep.subr.bf16.mxu0 0
        %770 = vmatpush2.bf16.msra.mxu0 0
        %771 = vmatprep.subr.bf16.mxu0 0
        %772 = vmatpush2.bf16.msra.mxu0 0
        %773 = vmatprep.mubr.bf16.mxu0 0
        %774 = vmatmul.mubr.bf16.gmra.mxu0 %v694
        %v775 = vpop.f32.mrf.mxu0
        %v776 = vadd.f32 0.0, %v775
        %v777 = vpop.f32.mrf.mxu0
        %v778 = vadd.f32 0.0, %v777
        %v779 = vpop.f32.mrf.mxu0
        %v780 = vadd.f32 0.0, %v779
        %v781 = vpop.f32.mrf.mxu0
        %v782 = vadd.f32 0.0, %v781
        %783 = vmatprep.mubr.bf16.mxu0 0
        %784 = vmatmul.mubr.bf16.gmra.mxu0 %v697
        %v785 = vpop.f32.mrf.mxu0
        %v786 = vadd.f32 0.0, %v785
        %v787 = vpop.f32.mrf.mxu0
        %v788 = vadd.f32 0.0, %v787
        %v789 = vpop.f32.mrf.mxu0
        %v790 = vadd.f32 0.0, %v789
        %v791 = vpop.f32.mrf.mxu0
        %v792 = vadd.f32 0.0, %v791
        %793 = vmatprep.mubr.bf16.mxu0 0
        %794 = vmatmul.mubr.bf16.gmra.mxu0 %v700
        %v795 = vpop.f32.mrf.mxu0
        %v796 = vadd.f32 0.0, %v795
        %v797 = vpop.f32.mrf.mxu0
        %v798 = vadd.f32 0.0, %v797
        %v799 = vpop.f32.mrf.mxu0
        %v800 = vadd.f32 0.0, %v799
        %v801 = vpop.f32.mrf.mxu0
        %v802 = vadd.f32 0.0, %v801
        %803 = vmatprep.mubr.bf16.mxu0 0
        %804 = vmatmul.mubr.bf16.gmra.mxu0 %v703
        %v805 = vpop.f32.mrf.mxu0
        %v806 = vadd.f32 0.0, %v805
        %v807 = vpop.f32.mrf.mxu0
        %v808 = vadd.f32 0.0, %v807
        %v809 = vpop.f32.mrf.mxu0
        %v810 = vadd.f32 0.0, %v809
        %v811 = vpop.f32.mrf.mxu0
        %v812 = vadd.f32 0.0, %v811
        %813 = vmatprep.mubr.bf16.mxu0 0
        %814 = vmatmul.mubr.bf16.gmra.mxu0 %v706
        %v815 = vpop.f32.mrf.mxu0
        %v816 = vadd.f32 0.0, %v815
        %v817 = vpop.f32.mrf.mxu0
        %v818 = vadd.f32 0.0, %v817
        %v819 = vpop.f32.mrf.mxu0
        %v820 = vadd.f32 0.0, %v819
        %v821 = vpop.f32.mrf.mxu0
        %v822 = vadd.f32 0.0, %v821
        %823 = vmatprep.mubr.bf16.mxu0 0
        %824 = vmatmul.mubr.bf16.gmra.mxu0 %v709
        %v825 = vpop.f32.mrf.mxu0
        %v826 = vadd.f32 0.0, %v825
        %v827 = vpop.f32.mrf.mxu0
        %v828 = vadd.f32 0.0, %v827
        %v829 = vpop.f32.mrf.mxu0
        %v830 = vadd.f32 0.0, %v829
        %v831 = vpop.f32.mrf.mxu0
        %v832 = vadd.f32 0.0, %v831
        %833 = vmatprep.mubr.bf16.mxu0 0
        %834 = vmatmul.mubr.bf16.gmra.mxu0 %v712
        %v835 = vpop.f32.mrf.mxu0
        %v836 = vadd.f32 0.0, %v835
        %v837 = vpop.f32.mrf.mxu0
        %v838 = vadd.f32 0.0, %v837
        %v839 = vpop.f32.mrf.mxu0
        %v840 = vadd.f32 0.0, %v839
        %v841 = vpop.f32.mrf.mxu0
        %v842 = vadd.f32 0.0, %v841
        %843 = vmatprep.mubr.bf16.mxu0 0
        %844 = vmatmul.mubr.bf16.gmra.mxu0 %v715
        %v845 = vpop.f32.mrf.mxu0
        %v846 = vadd.f32 0.0, %v845
        %v847 = vpop.f32.mrf.mxu0
        %v848 = vadd.f32 0.0, %v847
        %v849 = vpop.f32.mrf.mxu0
        %v850 = vadd.f32 0.0, %v849
        %v851 = vpop.f32.mrf.mxu0
        %v852 = vadd.f32 0.0, %v851
        %853 = vmatprep.mubr.bf16.mxu0 0
        %854 = vmatmul.mubr.bf16.gmra.mxu0 %v718
        %v855 = vpop.f32.mrf.mxu0
        %v856 = vadd.f32 0.0, %v855
        %v857 = vpop.f32.mrf.mxu0
        %v858 = vadd.f32 0.0, %v857
        %v859 = vpop.f32.mrf.mxu0
        %v860 = vadd.f32 0.0, %v859
        %v861 = vpop.f32.mrf.mxu0
        %v862 = vadd.f32 0.0, %v861
        %863 = vmatprep.mubr.bf16.mxu0 0
        %864 = vmatmul.mubr.bf16.gmra.mxu0 %v721
        %v865 = vpop.f32.mrf.mxu0
        %v866 = vadd.f32 0.0, %v865
        %v867 = vpop.f32.mrf.mxu0
        %v868 = vadd.f32 0.0, %v867
        %v869 = vpop.f32.mrf.mxu0
        %v870 = vadd.f32 0.0, %v869
        %v871 = vpop.f32.mrf.mxu0
        %v872 = vadd.f32 0.0, %v871
        %873 = vmatprep.mubr.bf16.mxu0 0
        %874 = vmatmul.mubr.bf16.gmra.mxu0 %v724
        %v875 = vpop.f32.mrf.mxu0
        %v876 = vadd.f32 0.0, %v875
        %v877 = vpop.f32.mrf.mxu0
        %v878 = vadd.f32 0.0, %v877
        %v879 = vpop.f32.mrf.mxu0
        %v880 = vadd.f32 0.0, %v879
        %v881 = vpop.f32.mrf.mxu0
        %v882 = vadd.f32 0.0, %v881
        %883 = vmatprep.mubr.bf16.mxu0 0
        %884 = vmatmul.mubr.bf16.gmra.mxu0 %v727
        %v885 = vpop.f32.mrf.mxu0
        %v886 = vadd.f32 0.0, %v885
        %v887 = vpop.f32.mrf.mxu0
        %v888 = vadd.f32 0.0, %v887
        %v889 = vpop.f32.mrf.mxu0
        %v890 = vadd.f32 0.0, %v889
        %v891 = vpop.f32.mrf.mxu0
        %v892 = vadd.f32 0.0, %v891
        %893 = vmatprep.mubr.bf16.mxu0 0
        %894 = vmatmul.mubr.bf16.gmra.mxu0 %v730
        %v895 = vpop.f32.mrf.mxu0
        %v896 = vadd.f32 0.0, %v895
        %v897 = vpop.f32.mrf.mxu0
        %v898 = vadd.f32 0.0, %v897
        %v899 = vpop.f32.mrf.mxu0
        %v900 = vadd.f32 0.0, %v899
        %v901 = vpop.f32.mrf.mxu0
        %v902 = vadd.f32 0.0, %v901
        %903 = vmatprep.mubr.bf16.mxu0 0
        %904 = vmatmul.mubr.bf16.gmra.mxu0 %v733
        %v905 = vpop.f32.mrf.mxu0
        %v906 = vadd.f32 0.0, %v905
        %v907 = vpop.f32.mrf.mxu0
        %v908 = vadd.f32 0.0, %v907
        %v909 = vpop.f32.mrf.mxu0
        %v910 = vadd.f32 0.0, %v909
        %v911 = vpop.f32.mrf.mxu0
        %v912 = vadd.f32 0.0, %v911
        %913 = vmatprep.mubr.bf16.mxu0 0
        %914 = vmatmul.mubr.bf16.gmra.mxu0 %v736
        %v915 = vpop.f32.mrf.mxu0
        %v916 = vadd.f32 0.0, %v915
        %v917 = vpop.f32.mrf.mxu0
        %v918 = vadd.f32 0.0, %v917
        %v919 = vpop.f32.mrf.mxu0
        %v920 = vadd.f32 0.0, %v919
        %v921 = vpop.f32.mrf.mxu0
        %v922 = vadd.f32 0.0, %v921
        %923 = vmatprep.mubr.bf16.mxu0 0
        %924 = vmatmul.mubr.bf16.gmra.mxu0 %v739
        %v925 = vpop.f32.mrf.mxu0
        %v926 = vadd.f32 0.0, %v925
        %v927 = vpop.f32.mrf.mxu0
        %v928 = vadd.f32 0.0, %v927
        %v929 = vpop.f32.mrf.mxu0
        %v930 = vadd.f32 0.0, %v929
        %v931 = vpop.f32.mrf.mxu0
        %v932 = vadd.f32 0.0, %v931
        %933 = vdwg.mxu0
        %v934 = vld [vmem:[%s313] sm:$0xff]
        %v935 = vld [vmem:[%s313 + $0x8] sm:$0xff]
        %v936 = vld [vmem:[%s313 + $0x10] sm:$0xff]
        %v937 = vld [vmem:[%s313 + $0x18] sm:$0xff]
        %v938 = vld [vmem:[%s313 + $0x20] sm:$0xff]
        %v939 = vld [vmem:[%s313 + $0x28] sm:$0xff]
        %v940 = vld [vmem:[%s313 + $0x30] sm:$0xff]
        %v941 = vld [vmem:[%s313 + $0x38] sm:$0xff]
        %v942 = vld [vmem:[%s313 + $0x40] sm:$0xff]
        %v943 = vld [vmem:[%s313 + $0x48] sm:$0xff]
        %v944 = vld [vmem:[%s313 + $0x50] sm:$0xff]
        %v945 = vld [vmem:[%s313 + $0x58] sm:$0xff]
        %v946 = vld [vmem:[%s313 + $0x60] sm:$0xff]
        %v947 = vld [vmem:[%s313 + $0x68] sm:$0xff]
        %v948 = vld [vmem:[%s313 + $0x70] sm:$0xff]
        %v949 = vld [vmem:[%s313 + $0x78] sm:$0xff]
        %v950 = vld [vmem:[%s313 + $0x80] sm:$0xff]
        %v951 = vld [vmem:[%s313 + $0x88] sm:$0xff]
        %v952 = vld [vmem:[%s313 + $0x90] sm:$0xff]
        %v953 = vld [vmem:[%s313 + $0x98] sm:$0xff]
        %v954 = vld [vmem:[%s313 + $0xa0] sm:$0xff]
        %v955 = vld [vmem:[%s313 + $0xa8] sm:$0xff]
        %v956 = vld [vmem:[%s313 + $0xb0] sm:$0xff]
        %v957 = vld [vmem:[%s313 + $0xb8] sm:$0xff]
        %v958 = vld [vmem:[%s313 + $0xc0] sm:$0xff]
        %v959 = vld [vmem:[%s313 + $0xc8] sm:$0xff]
        %v960 = vld [vmem:[%s313 + $0xd0] sm:$0xff]
        %v961 = vld [vmem:[%s313 + $0xd8] sm:$0xff]
        %v962 = vld [vmem:[%s313 + $0xe0] sm:$0xff]
        %v963 = vld [vmem:[%s313 + $0xe8] sm:$0xff]
        %v964 = vld [vmem:[%s313 + $0xf0] sm:$0xff]
        %v965 = vld [vmem:[%s313 + $0xf8] sm:$0xff]
        %v966 = vld [vmem:[#allocation2] sm:$0xff]
        %v967 = vld [vmem:[#allocation2 + $0x8] sm:$0xff]
        %v968 = vld [vmem:[#allocation2 + $0x10] sm:$0xff]
        %v969 = vld [vmem:[#allocation2 + $0x18] sm:$0xff]
        %v970 = vld [vmem:[#allocation2 + $0x20] sm:$0xff]
        %v971 = vld [vmem:[#allocation2 + $0x28] sm:$0xff]
        %v972 = vld [vmem:[#allocation2 + $0x30] sm:$0xff]
        %v973 = vld [vmem:[#allocation2 + $0x38] sm:$0xff]
        %v974 = vld [vmem:[#allocation2 + $0x40] sm:$0xff]
        %v975 = vld [vmem:[#allocation2 + $0x48] sm:$0xff]
        %v976 = vld [vmem:[#allocation2 + $0x50] sm:$0xff]
        %v977 = vld [vmem:[#allocation2 + $0x58] sm:$0xff]
        %v978 = vld [vmem:[#allocation2 + $0x60] sm:$0xff]
        %v979 = vld [vmem:[#allocation2 + $0x68] sm:$0xff]
        %v980 = vld [vmem:[#allocation2 + $0x70] sm:$0xff]
        %v981 = vld [vmem:[#allocation2 + $0x78] sm:$0xff]
        %v982 = vld [vmem:[#allocation2 + $0x80] sm:$0xff]
        %v983 = vld [vmem:[#allocation2 + $0x88] sm:$0xff]
        %v984 = vld [vmem:[#allocation2 + $0x90] sm:$0xff]
        %v985 = vld [vmem:[#allocation2 + $0x98] sm:$0xff]
        %v986 = vld [vmem:[#allocation2 + $0xa0] sm:$0xff]
        %v987 = vld [vmem:[#allocation2 + $0xa8] sm:$0xff]
        %v988 = vld [vmem:[#allocation2 + $0xb0] sm:$0xff]
        %v989 = vld [vmem:[#allocation2 + $0xb8] sm:$0xff]
        %v990 = vld [vmem:[#allocation2 + $0xc0] sm:$0xff]
        %v991 = vld [vmem:[#allocation2 + $0xc8] sm:$0xff]
        %v992 = vld [vmem:[#allocation2 + $0xd0] sm:$0xff]
        %v993 = vld [vmem:[#allocation2 + $0xd8] sm:$0xff]
        %v994 = vld [vmem:[#allocation2 + $0xe0] sm:$0xff]
        %v995 = vld [vmem:[#allocation2 + $0xe8] sm:$0xff]
        %v996 = vld [vmem:[#allocation2 + $0xf0] sm:$0xff]
        %v997 = vld [vmem:[#allocation2 + $0xf8] sm:$0xff]
        %998 = vmax.xlane.f32.xlu0 %v776
        %v999 = vpop.xlane.xlu0 %998
        %1000 = vmax.xlane.f32.xlu0 %v780
        %v1001 = vpop.xlane.xlu0 %1000
        %1002 = vmax.xlane.f32.xlu0 %v786
        %v1003 = vpop.xlane.xlu0 %1002
        %1004 = vmax.xlane.f32.xlu0 %v790
        %v1005 = vpop.xlane.xlu0 %1004
        %1006 = vmax.xlane.f32.xlu0 %v796
        %v1007 = vpop.xlane.xlu0 %1006
        %1008 = vmax.xlane.f32.xlu0 %v800
        %v1009 = vpop.xlane.xlu0 %1008
        %1010 = vmax.xlane.f32.xlu0 %v806
        %v1011 = vpop.xlane.xlu0 %1010
        %1012 = vmax.xlane.f32.xlu0 %v810
        %v1013 = vpop.xlane.xlu0 %1012
        %1014 = vmax.xlane.f32.xlu0 %v816
        %v1015 = vpop.xlane.xlu0 %1014
        %1016 = vmax.xlane.f32.xlu0 %v820
        %v1017 = vpop.xlane.xlu0 %1016
        %1018 = vmax.xlane.f32.xlu0 %v826
        %v1019 = vpop.xlane.xlu0 %1018
        %1020 = vmax.xlane.f32.xlu0 %v830
        %v1021 = vpop.xlane.xlu0 %1020
        %1022 = vmax.xlane.f32.xlu0 %v836
        %v1023 = vpop.xlane.xlu0 %1022
        %1024 = vmax.xlane.f32.xlu0 %v840
        %v1025 = vpop.xlane.xlu0 %1024
        %1026 = vmax.xlane.f32.xlu0 %v846
        %v1027 = vpop.xlane.xlu0 %1026
        %1028 = vmax.xlane.f32.xlu0 %v850
        %v1029 = vpop.xlane.xlu0 %1028
        %1030 = vmax.xlane.f32.xlu0 %v856
        %v1031 = vpop.xlane.xlu0 %1030
        %1032 = vmax.xlane.f32.xlu0 %v860
        %v1033 = vpop.xlane.xlu0 %1032
        %1034 = vmax.xlane.f32.xlu0 %v866
        %v1035 = vpop.xlane.xlu0 %1034
        %1036 = vmax.xlane.f32.xlu0 %v870
        %v1037 = vpop.xlane.xlu0 %1036
        %1038 = vmax.xlane.f32.xlu0 %v876
        %v1039 = vpop.xlane.xlu0 %1038
        %1040 = vmax.xlane.f32.xlu0 %v880
        %v1041 = vpop.xlane.xlu0 %1040
        %1042 = vmax.xlane.f32.xlu0 %v886
        %v1043 = vpop.xlane.xlu0 %1042
        %1044 = vmax.xlane.f32.xlu0 %v890
        %v1045 = vpop.xlane.xlu0 %1044
        %1046 = vmax.xlane.f32.xlu0 %v896
        %v1047 = vpop.xlane.xlu0 %1046
        %1048 = vmax.xlane.f32.xlu0 %v900
        %v1049 = vpop.xlane.xlu0 %1048
        %1050 = vmax.xlane.f32.xlu0 %v906
        %v1051 = vpop.xlane.xlu0 %1050
        %1052 = vmax.xlane.f32.xlu0 %v910
        %v1053 = vpop.xlane.xlu0 %1052
        %1054 = vmax.xlane.f32.xlu0 %v916
        %v1055 = vpop.xlane.xlu0 %1054
        %1056 = vmax.xlane.f32.xlu0 %v920
        %v1057 = vpop.xlane.xlu0 %1056
        %1058 = vmax.xlane.f32.xlu0 %v926
        %v1059 = vpop.xlane.xlu0 %1058
        %1060 = vmax.xlane.f32.xlu0 %v930
        %v1061 = vpop.xlane.xlu0 %1060
        %v1062 = vmax.f32 %v966, %v999
        %v1063 = vmax.f32 %v967, %v1001
        %v1064 = vmax.f32 %v968, %v1003
        %v1065 = vmax.f32 %v969, %v1005
        %v1066 = vmax.f32 %v970, %v1007
        %v1067 = vmax.f32 %v971, %v1009
        %v1068 = vmax.f32 %v972, %v1011
        %v1069 = vmax.f32 %v973, %v1013
        %v1070 = vmax.f32 %v974, %v1015
        %v1071 = vmax.f32 %v975, %v1017
        %v1072 = vmax.f32 %v976, %v1019
        %v1073 = vmax.f32 %v977, %v1021
        %v1074 = vmax.f32 %v978, %v1023
        %v1075 = vmax.f32 %v979, %v1025
        %v1076 = vmax.f32 %v980, %v1027
        %v1077 = vmax.f32 %v981, %v1029
        %v1078 = vmax.f32 %v982, %v1031
        %v1079 = vmax.f32 %v983, %v1033
        %v1080 = vmax.f32 %v984, %v1035
        %v1081 = vmax.f32 %v985, %v1037
        %v1082 = vmax.f32 %v986, %v1039
        %v1083 = vmax.f32 %v987, %v1041
        %v1084 = vmax.f32 %v988, %v1043
        %v1085 = vmax.f32 %v989, %v1045
        %v1086 = vmax.f32 %v990, %v1047
        %v1087 = vmax.f32 %v991, %v1049
        %v1088 = vmax.f32 %v992, %v1051
        %v1089 = vmax.f32 %v993, %v1053
        %v1090 = vmax.f32 %v994, %v1055
        %v1091 = vmax.f32 %v995, %v1057
        %v1092 = vmax.f32 %v996, %v1059
        %v1093 = vmax.f32 %v997, %v1061
        %v1094 = vld [vmem:[#allocation3] sm:$0xff]
        %v1095 = vld [vmem:[#allocation3 + $0x8] sm:$0xff]
        %v1096 = vld [vmem:[#allocation3 + $0x10] sm:$0xff]
        %v1097 = vld [vmem:[#allocation3 + $0x18] sm:$0xff]
        %v1098 = vld [vmem:[#allocation3 + $0x20] sm:$0xff]
        %v1099 = vld [vmem:[#allocation3 + $0x28] sm:$0xff]
        %v1100 = vld [vmem:[#allocation3 + $0x30] sm:$0xff]
        %v1101 = vld [vmem:[#allocation3 + $0x38] sm:$0xff]
        %v1102 = vld [vmem:[#allocation3 + $0x40] sm:$0xff]
        %v1103 = vld [vmem:[#allocation3 + $0x48] sm:$0xff]
        %v1104 = vld [vmem:[#allocation3 + $0x50] sm:$0xff]
        %v1105 = vld [vmem:[#allocation3 + $0x58] sm:$0xff]
        %v1106 = vld [vmem:[#allocation3 + $0x60] sm:$0xff]
        %v1107 = vld [vmem:[#allocation3 + $0x68] sm:$0xff]
        %v1108 = vld [vmem:[#allocation3 + $0x70] sm:$0xff]
        %v1109 = vld [vmem:[#allocation3 + $0x78] sm:$0xff]
        %v1110 = vld [vmem:[#allocation3 + $0x80] sm:$0xff]
        %v1111 = vld [vmem:[#allocation3 + $0x88] sm:$0xff]
        %v1112 = vld [vmem:[#allocation3 + $0x90] sm:$0xff]
        %v1113 = vld [vmem:[#allocation3 + $0x98] sm:$0xff]
        %v1114 = vld [vmem:[#allocation3 + $0xa0] sm:$0xff]
        %v1115 = vld [vmem:[#allocation3 + $0xa8] sm:$0xff]
        %v1116 = vld [vmem:[#allocation3 + $0xb0] sm:$0xff]
        %v1117 = vld [vmem:[#allocation3 + $0xb8] sm:$0xff]
        %v1118 = vld [vmem:[#allocation3 + $0xc0] sm:$0xff]
        %v1119 = vld [vmem:[#allocation3 + $0xc8] sm:$0xff]
        %v1120 = vld [vmem:[#allocation3 + $0xd0] sm:$0xff]
        %v1121 = vld [vmem:[#allocation3 + $0xd8] sm:$0xff]
        %v1122 = vld [vmem:[#allocation3 + $0xe0] sm:$0xff]
        %v1123 = vld [vmem:[#allocation3 + $0xe8] sm:$0xff]
        %v1124 = vld [vmem:[#allocation3 + $0xf0] sm:$0xff]
        %v1125 = vld [vmem:[#allocation3 + $0xf8] sm:$0xff]
        %v1126 = vsub.f32 %v966, %v1062
        %v1127 = vsub.f32 %v967, %v1063
        %v1128 = vsub.f32 %v968, %v1064
        %v1129 = vsub.f32 %v969, %v1065
        %v1130 = vsub.f32 %v970, %v1066
        %v1131 = vsub.f32 %v971, %v1067
        %v1132 = vsub.f32 %v972, %v1068
        %v1133 = vsub.f32 %v973, %v1069
        %v1134 = vsub.f32 %v974, %v1070
        %v1135 = vsub.f32 %v975, %v1071
        %v1136 = vsub.f32 %v976, %v1072
        %v1137 = vsub.f32 %v977, %v1073
        %v1138 = vsub.f32 %v978, %v1074
        %v1139 = vsub.f32 %v979, %v1075
        %v1140 = vsub.f32 %v980, %v1076
        %v1141 = vsub.f32 %v981, %v1077
        %v1142 = vsub.f32 %v982, %v1078
        %v1143 = vsub.f32 %v983, %v1079
        %v1144 = vsub.f32 %v984, %v1080
        %v1145 = vsub.f32 %v985, %v1081
        %v1146 = vsub.f32 %v986, %v1082
        %v1147 = vsub.f32 %v987, %v1083
        %v1148 = vsub.f32 %v988, %v1084
        %v1149 = vsub.f32 %v989, %v1085
        %v1150 = vsub.f32 %v990, %v1086
        %v1151 = vsub.f32 %v991, %v1087
        %v1152 = vsub.f32 %v992, %v1088
        %v1153 = vsub.f32 %v993, %v1089
        %v1154 = vsub.f32 %v994, %v1090
        %v1155 = vsub.f32 %v995, %v1091
        %v1156 = vsub.f32 %v996, %v1092
        %v1157 = vsub.f32 %v997, %v1093
        %v1158 = vmul.f32 %v1126, 1.442695
        %v1159 = vpow.pop %v1158
        %v1160 = vmul.f32 %v1127, 1.442695
        %v1161 = vpow.pop %v1160
        %v1162 = vmul.f32 %v1128, 1.442695
        %v1163 = vpow.pop %v1162
        %v1164 = vmul.f32 %v1129, 1.442695
        %v1165 = vpow.pop %v1164
        %v1166 = vmul.f32 %v1130, 1.442695
        %v1167 = vpow.pop %v1166
        %v1168 = vmul.f32 %v1131, 1.442695
        %v1169 = vpow.pop %v1168
        %v1170 = vmul.f32 %v1132, 1.442695
        %v1171 = vpow.pop %v1170
        %v1172 = vmul.f32 %v1133, 1.442695
        %v1173 = vpow.pop %v1172
        %v1174 = vmul.f32 %v1134, 1.442695
        %v1175 = vpow.pop %v1174
        %v1176 = vmul.f32 %v1135, 1.442695
        %v1177 = vpow.pop %v1176
        %v1178 = vmul.f32 %v1136, 1.442695
        %v1179 = vpow.pop %v1178
        %v1180 = vmul.f32 %v1137, 1.442695
        %v1181 = vpow.pop %v1180
        %v1182 = vmul.f32 %v1138, 1.442695
        %v1183 = vpow.pop %v1182
        %v1184 = vmul.f32 %v1139, 1.442695
        %v1185 = vpow.pop %v1184
        %v1186 = vmul.f32 %v1140, 1.442695
        %v1187 = vpow.pop %v1186
        %v1188 = vmul.f32 %v1141, 1.442695
        %v1189 = vpow.pop %v1188
        %v1190 = vmul.f32 %v1142, 1.442695
        %v1191 = vpow.pop %v1190
        %v1192 = vmul.f32 %v1143, 1.442695
        %v1193 = vpow.pop %v1192
        %v1194 = vmul.f32 %v1144, 1.442695
        %v1195 = vpow.pop %v1194
        %v1196 = vmul.f32 %v1145, 1.442695
        %v1197 = vpow.pop %v1196
        %v1198 = vmul.f32 %v1146, 1.442695
        %v1199 = vpow.pop %v1198
        %v1200 = vmul.f32 %v1147, 1.442695
        %v1201 = vpow.pop %v1200
        %v1202 = vmul.f32 %v1148, 1.442695
        %v1203 = vpow.pop %v1202
        %v1204 = vmul.f32 %v1149, 1.442695
        %v1205 = vpow.pop %v1204
        %v1206 = vmul.f32 %v1150, 1.442695
        %v1207 = vpow.pop %v1206
        %v1208 = vmul.f32 %v1151, 1.442695
        %v1209 = vpow.pop %v1208
        %v1210 = vmul.f32 %v1152, 1.442695
        %v1211 = vpow.pop %v1210
        %v1212 = vmul.f32 %v1153, 1.442695
        %v1213 = vpow.pop %v1212
        %v1214 = vmul.f32 %v1154, 1.442695
        %v1215 = vpow.pop %v1214
        %v1216 = vmul.f32 %v1155, 1.442695
        %v1217 = vpow.pop %v1216
        %v1218 = vmul.f32 %v1156, 1.442695
        %v1219 = vpow.pop %v1218
        %v1220 = vmul.f32 %v1157, 1.442695
        %v1221 = vpow.pop %v1220
        %v1222 = vmul.f32 %v1094, %v1159
        %v1223 = vmul.f32 %v1095, %v1161
        %v1224 = vmul.f32 %v1096, %v1163
        %v1225 = vmul.f32 %v1097, %v1165
        %v1226 = vmul.f32 %v1098, %v1167
        %v1227 = vmul.f32 %v1099, %v1169
        %v1228 = vmul.f32 %v1100, %v1171
        %v1229 = vmul.f32 %v1101, %v1173
        %v1230 = vmul.f32 %v1102, %v1175
        %v1231 = vmul.f32 %v1103, %v1177
        %v1232 = vmul.f32 %v1104, %v1179
        %v1233 = vmul.f32 %v1105, %v1181
        %v1234 = vmul.f32 %v1106, %v1183
        %v1235 = vmul.f32 %v1107, %v1185
        %v1236 = vmul.f32 %v1108, %v1187
        %v1237 = vmul.f32 %v1109, %v1189
        %v1238 = vmul.f32 %v1110, %v1191
        %v1239 = vmul.f32 %v1111, %v1193
        %v1240 = vmul.f32 %v1112, %v1195
        %v1241 = vmul.f32 %v1113, %v1197
        %v1242 = vmul.f32 %v1114, %v1199
        %v1243 = vmul.f32 %v1115, %v1201
        %v1244 = vmul.f32 %v1116, %v1203
        %v1245 = vmul.f32 %v1117, %v1205
        %v1246 = vmul.f32 %v1118, %v1207
        %v1247 = vmul.f32 %v1119, %v1209
        %v1248 = vmul.f32 %v1120, %v1211
        %v1249 = vmul.f32 %v1121, %v1213
        %v1250 = vmul.f32 %v1122, %v1215
        %v1251 = vmul.f32 %v1123, %v1217
        %v1252 = vmul.f32 %v1124, %v1219
        %v1253 = vmul.f32 %v1125, %v1221
        %1255 = vset.pattern.permute.xlu0 0
        %1256 = vperm.xlu0 %1255, %v1062
        %v1257 = vpop.permute.xlu0 %1256
        %1260 = vset.pattern.permute.xlu0 0
        %1261 = vperm.xlu0 %1260, %v1063
        %v1262 = vpop.permute.xlu0 %1261
        %1265 = vset.pattern.permute.xlu0 0
        %1266 = vperm.xlu0 %1265, %v1064
        %v1267 = vpop.permute.xlu0 %1266
        %1270 = vset.pattern.permute.xlu0 0
        %1271 = vperm.xlu0 %1270, %v1065
        %v1272 = vpop.permute.xlu0 %1271
        %1275 = vset.pattern.permute.xlu0 0
        %1276 = vperm.xlu0 %1275, %v1066
        %v1277 = vpop.permute.xlu0 %1276
        %1280 = vset.pattern.permute.xlu0 0
        %1281 = vperm.xlu0 %1280, %v1067
        %v1282 = vpop.permute.xlu0 %1281
        %1285 = vset.pattern.permute.xlu0 0
        %1286 = vperm.xlu0 %1285, %v1068
        %v1287 = vpop.permute.xlu0 %1286
        %1290 = vset.pattern.permute.xlu0 0
        %1291 = vperm.xlu0 %1290, %v1069
        %v1292 = vpop.permute.xlu0 %1291
        %1295 = vset.pattern.permute.xlu0 0
        %1296 = vperm.xlu0 %1295, %v1070
        %v1297 = vpop.permute.xlu0 %1296
        %1300 = vset.pattern.permute.xlu0 0
        %1301 = vperm.xlu0 %1300, %v1071
        %v1302 = vpop.permute.xlu0 %1301
        %1305 = vset.pattern.permute.xlu0 0
        %1306 = vperm.xlu0 %1305, %v1072
        %v1307 = vpop.permute.xlu0 %1306
        %1310 = vset.pattern.permute.xlu0 0
        %1311 = vperm.xlu0 %1310, %v1073
        %v1312 = vpop.permute.xlu0 %1311
        %1315 = vset.pattern.permute.xlu0 0
        %1316 = vperm.xlu0 %1315, %v1074
        %v1317 = vpop.permute.xlu0 %1316
        %1320 = vset.pattern.permute.xlu0 0
        %1321 = vperm.xlu0 %1320, %v1075
        %v1322 = vpop.permute.xlu0 %1321
        %1325 = vset.pattern.permute.xlu0 0
        %1326 = vperm.xlu0 %1325, %v1076
        %v1327 = vpop.permute.xlu0 %1326
        %1330 = vset.pattern.permute.xlu0 0
        %1331 = vperm.xlu0 %1330, %v1077
        %v1332 = vpop.permute.xlu0 %1331
        %1335 = vset.pattern.permute.xlu0 0
        %1336 = vperm.xlu0 %1335, %v1078
        %v1337 = vpop.permute.xlu0 %1336
        %1340 = vset.pattern.permute.xlu0 0
        %1341 = vperm.xlu0 %1340, %v1079
        %v1342 = vpop.permute.xlu0 %1341
        %1345 = vset.pattern.permute.xlu0 0
        %1346 = vperm.xlu0 %1345, %v1080
        %v1347 = vpop.permute.xlu0 %1346
        %1350 = vset.pattern.permute.xlu0 0
        %1351 = vperm.xlu0 %1350, %v1081
        %v1352 = vpop.permute.xlu0 %1351
        %1355 = vset.pattern.permute.xlu0 0
        %1356 = vperm.xlu0 %1355, %v1082
        %v1357 = vpop.permute.xlu0 %1356
        %1360 = vset.pattern.permute.xlu0 0
        %1361 = vperm.xlu0 %1360, %v1083
        %v1362 = vpop.permute.xlu0 %1361
        %1365 = vset.pattern.permute.xlu0 0
        %1366 = vperm.xlu0 %1365, %v1084
        %v1367 = vpop.permute.xlu0 %1366
        %1370 = vset.pattern.permute.xlu0 0
        %1371 = vperm.xlu0 %1370, %v1085
        %v1372 = vpop.permute.xlu0 %1371
        %1375 = vset.pattern.permute.xlu0 0
        %1376 = vperm.xlu0 %1375, %v1086
        %v1377 = vpop.permute.xlu0 %1376
        %1380 = vset.pattern.permute.xlu0 0
        %1381 = vperm.xlu0 %1380, %v1087
        %v1382 = vpop.permute.xlu0 %1381
        %1385 = vset.pattern.permute.xlu0 0
        %1386 = vperm.xlu0 %1385, %v1088
        %v1387 = vpop.permute.xlu0 %1386
        %1390 = vset.pattern.permute.xlu0 0
        %1391 = vperm.xlu0 %1390, %v1089
        %v1392 = vpop.permute.xlu0 %1391
        %1395 = vset.pattern.permute.xlu0 0
        %1396 = vperm.xlu0 %1395, %v1090
        %v1397 = vpop.permute.xlu0 %1396
        %1400 = vset.pattern.permute.xlu0 0
        %1401 = vperm.xlu0 %1400, %v1091
        %v1402 = vpop.permute.xlu0 %1401
        %1405 = vset.pattern.permute.xlu0 0
        %1406 = vperm.xlu0 %1405, %v1092
        %v1407 = vpop.permute.xlu0 %1406
        %1410 = vset.pattern.permute.xlu0 0
        %1411 = vperm.xlu0 %1410, %v1093
        %v1412 = vpop.permute.xlu0 %1411
        %v1414 = vsub.f32 %v776, %v1257
        %v1415 = vsub.f32 %v780, %v1262
        %v1416 = vsub.f32 %v786, %v1267
        %v1417 = vsub.f32 %v790, %v1272
        %v1418 = vsub.f32 %v796, %v1277
        %v1419 = vsub.f32 %v800, %v1282
        %v1420 = vsub.f32 %v806, %v1287
        %v1421 = vsub.f32 %v810, %v1292
        %v1422 = vsub.f32 %v816, %v1297
        %v1423 = vsub.f32 %v820, %v1302
        %v1424 = vsub.f32 %v826, %v1307
        %v1425 = vsub.f32 %v830, %v1312
        %v1426 = vsub.f32 %v836, %v1317
        %v1427 = vsub.f32 %v840, %v1322
        %v1428 = vsub.f32 %v846, %v1327
        %v1429 = vsub.f32 %v850, %v1332
        %v1430 = vsub.f32 %v856, %v1337
        %v1431 = vsub.f32 %v860, %v1342
        %v1432 = vsub.f32 %v866, %v1347
        %v1433 = vsub.f32 %v870, %v1352
        %v1434 = vsub.f32 %v876, %v1357
        %v1435 = vsub.f32 %v880, %v1362
        %v1436 = vsub.f32 %v886, %v1367
        %v1437 = vsub.f32 %v890, %v1372
        %v1438 = vsub.f32 %v896, %v1377
        %v1439 = vsub.f32 %v900, %v1382
        %v1440 = vsub.f32 %v906, %v1387
        %v1441 = vsub.f32 %v910, %v1392
        %v1442 = vsub.f32 %v916, %v1397
        %v1443 = vsub.f32 %v920, %v1402
        %v1444 = vsub.f32 %v926, %v1407
        %v1445 = vsub.f32 %v930, %v1412
        %v1446 = vmul.f32 %v1414, 1.442695
        %v1447 = vpow.pop %v1446
        %v1448 = vmul.f32 %v1415, 1.442695
        %v1449 = vpow.pop %v1448
        %v1450 = vmul.f32 %v1416, 1.442695
        %v1451 = vpow.pop %v1450
        %v1452 = vmul.f32 %v1417, 1.442695
        %v1453 = vpow.pop %v1452
        %v1454 = vmul.f32 %v1418, 1.442695
        %v1455 = vpow.pop %v1454
        %v1456 = vmul.f32 %v1419, 1.442695
        %v1457 = vpow.pop %v1456
        %v1458 = vmul.f32 %v1420, 1.442695
        %v1459 = vpow.pop %v1458
        %v1460 = vmul.f32 %v1421, 1.442695
        %v1461 = vpow.pop %v1460
        %v1462 = vmul.f32 %v1422, 1.442695
        %v1463 = vpow.pop %v1462
        %v1464 = vmul.f32 %v1423, 1.442695
        %v1465 = vpow.pop %v1464
        %v1466 = vmul.f32 %v1424, 1.442695
        %v1467 = vpow.pop %v1466
        %v1468 = vmul.f32 %v1425, 1.442695
        %v1469 = vpow.pop %v1468
        %v1470 = vmul.f32 %v1426, 1.442695
        %v1471 = vpow.pop %v1470
        %v1472 = vmul.f32 %v1427, 1.442695
        %v1473 = vpow.pop %v1472
        %v1474 = vmul.f32 %v1428, 1.442695
        %v1475 = vpow.pop %v1474
        %v1476 = vmul.f32 %v1429, 1.442695
        %v1477 = vpow.pop %v1476
        %v1478 = vmul.f32 %v1430, 1.442695
        %v1479 = vpow.pop %v1478
        %v1480 = vmul.f32 %v1431, 1.442695
        %v1481 = vpow.pop %v1480
        %v1482 = vmul.f32 %v1432, 1.442695
        %v1483 = vpow.pop %v1482
        %v1484 = vmul.f32 %v1433, 1.442695
        %v1485 = vpow.pop %v1484
        %v1486 = vmul.f32 %v1434, 1.442695
        %v1487 = vpow.pop %v1486
        %v1488 = vmul.f32 %v1435, 1.442695
        %v1489 = vpow.pop %v1488
        %v1490 = vmul.f32 %v1436, 1.442695
        %v1491 = vpow.pop %v1490
        %v1492 = vmul.f32 %v1437, 1.442695
        %v1493 = vpow.pop %v1492
        %v1494 = vmul.f32 %v1438, 1.442695
        %v1495 = vpow.pop %v1494
        %v1496 = vmul.f32 %v1439, 1.442695
        %v1497 = vpow.pop %v1496
        %v1498 = vmul.f32 %v1440, 1.442695
        %v1499 = vpow.pop %v1498
        %v1500 = vmul.f32 %v1441, 1.442695
        %v1501 = vpow.pop %v1500
        %v1502 = vmul.f32 %v1442, 1.442695
        %v1503 = vpow.pop %v1502
        %v1504 = vmul.f32 %v1443, 1.442695
        %v1505 = vpow.pop %v1504
        %v1506 = vmul.f32 %v1444, 1.442695
        %v1507 = vpow.pop %v1506
        %v1508 = vmul.f32 %v1445, 1.442695
        %v1509 = vpow.pop %v1508
        %1510 = vadd.xlane.f32.xlu0 %v1447
        %v1511 = vpop.xlane.xlu0 %1510
        %1512 = vadd.xlane.f32.xlu0 %v1449
        %v1513 = vpop.xlane.xlu0 %1512
        %1514 = vadd.xlane.f32.xlu0 %v1451
        %v1515 = vpop.xlane.xlu0 %1514
        %1516 = vadd.xlane.f32.xlu0 %v1453
        %v1517 = vpop.xlane.xlu0 %1516
        %1518 = vadd.xlane.f32.xlu0 %v1455
        %v1519 = vpop.xlane.xlu0 %1518
        %1520 = vadd.xlane.f32.xlu0 %v1457
        %v1521 = vpop.xlane.xlu0 %1520
        %1522 = vadd.xlane.f32.xlu0 %v1459
        %v1523 = vpop.xlane.xlu0 %1522
        %1524 = vadd.xlane.f32.xlu0 %v1461
        %v1525 = vpop.xlane.xlu0 %1524
        %1526 = vadd.xlane.f32.xlu0 %v1463
        %v1527 = vpop.xlane.xlu0 %1526
        %1528 = vadd.xlane.f32.xlu0 %v1465
        %v1529 = vpop.xlane.xlu0 %1528
        %1530 = vadd.xlane.f32.xlu0 %v1467
        %v1531 = vpop.xlane.xlu0 %1530
        %1532 = vadd.xlane.f32.xlu0 %v1469
        %v1533 = vpop.xlane.xlu0 %1532
        %1534 = vadd.xlane.f32.xlu0 %v1471
        %v1535 = vpop.xlane.xlu0 %1534
        %1536 = vadd.xlane.f32.xlu0 %v1473
        %v1537 = vpop.xlane.xlu0 %1536
        %1538 = vadd.xlane.f32.xlu0 %v1475
        %v1539 = vpop.xlane.xlu0 %1538
        %1540 = vadd.xlane.f32.xlu0 %v1477
        %v1541 = vpop.xlane.xlu0 %1540
        %1542 = vadd.xlane.f32.xlu0 %v1479
        %v1543 = vpop.xlane.xlu0 %1542
        %1544 = vadd.xlane.f32.xlu0 %v1481
        %v1545 = vpop.xlane.xlu0 %1544
        %1546 = vadd.xlane.f32.xlu0 %v1483
        %v1547 = vpop.xlane.xlu0 %1546
        %1548 = vadd.xlane.f32.xlu0 %v1485
        %v1549 = vpop.xlane.xlu0 %1548
        %1550 = vadd.xlane.f32.xlu0 %v1487
        %v1551 = vpop.xlane.xlu0 %1550
        %1552 = vadd.xlane.f32.xlu0 %v1489
        %v1553 = vpop.xlane.xlu0 %1552
        %1554 = vadd.xlane.f32.xlu0 %v1491
        %v1555 = vpop.xlane.xlu0 %1554
        %1556 = vadd.xlane.f32.xlu0 %v1493
        %v1557 = vpop.xlane.xlu0 %1556
        %1558 = vadd.xlane.f32.xlu0 %v1495
        %v1559 = vpop.xlane.xlu0 %1558
        %1560 = vadd.xlane.f32.xlu0 %v1497
        %v1561 = vpop.xlane.xlu0 %1560
        %1562 = vadd.xlane.f32.xlu0 %v1499
        %v1563 = vpop.xlane.xlu0 %1562
        %1564 = vadd.xlane.f32.xlu0 %v1501
        %v1565 = vpop.xlane.xlu0 %1564
        %1566 = vadd.xlane.f32.xlu0 %v1503
        %v1567 = vpop.xlane.xlu0 %1566
        %1568 = vadd.xlane.f32.xlu0 %v1505
        %v1569 = vpop.xlane.xlu0 %1568
        %1570 = vadd.xlane.f32.xlu0 %v1507
        %v1571 = vpop.xlane.xlu0 %1570
        %1572 = vadd.xlane.f32.xlu0 %v1509
        %v1573 = vpop.xlane.xlu0 %1572
        %v1574 = vadd.f32 %v1222, %v1511
        %v1575 = vadd.f32 %v1223, %v1513
        %v1576 = vadd.f32 %v1224, %v1515
        %v1577 = vadd.f32 %v1225, %v1517
        %v1578 = vadd.f32 %v1226, %v1519
        %v1579 = vadd.f32 %v1227, %v1521
        %v1580 = vadd.f32 %v1228, %v1523
        %v1581 = vadd.f32 %v1229, %v1525
        %v1582 = vadd.f32 %v1230, %v1527
        %v1583 = vadd.f32 %v1231, %v1529
        %v1584 = vadd.f32 %v1232, %v1531
        %v1585 = vadd.f32 %v1233, %v1533
        %v1586 = vadd.f32 %v1234, %v1535
        %v1587 = vadd.f32 %v1235, %v1537
        %v1588 = vadd.f32 %v1236, %v1539
        %v1589 = vadd.f32 %v1237, %v1541
        %v1590 = vadd.f32 %v1238, %v1543
        %v1591 = vadd.f32 %v1239, %v1545
        %v1592 = vadd.f32 %v1240, %v1547
        %v1593 = vadd.f32 %v1241, %v1549
        %v1594 = vadd.f32 %v1242, %v1551
        %v1595 = vadd.f32 %v1243, %v1553
        %v1596 = vadd.f32 %v1244, %v1555
        %v1597 = vadd.f32 %v1245, %v1557
        %v1598 = vadd.f32 %v1246, %v1559
        %v1599 = vadd.f32 %v1247, %v1561
        %v1600 = vadd.f32 %v1248, %v1563
        %v1601 = vadd.f32 %v1249, %v1565
        %v1602 = vadd.f32 %v1250, %v1567
        %v1603 = vadd.f32 %v1251, %v1569
        %v1604 = vadd.f32 %v1252, %v1571
        %v1605 = vadd.f32 %v1253, %v1573
        %vm1606 = vcmask 7168
        %1607 = vst.msk [vmem:[#allocation3] sm:$0xff] %vm1606, %v1574
        %1608 = vst.msk [vmem:[#allocation3 + $0x8] sm:$0xff] %vm1606, %v1575
        %1609 = vst.msk [vmem:[#allocation3 + $0x10] sm:$0xff] %vm1606, %v1576
        %1610 = vst.msk [vmem:[#allocation3 + $0x18] sm:$0xff] %vm1606, %v1577
        %1611 = vst.msk [vmem:[#allocation3 + $0x20] sm:$0xff] %vm1606, %v1578
        %1612 = vst.msk [vmem:[#allocation3 + $0x28] sm:$0xff] %vm1606, %v1579
        %1613 = vst.msk [vmem:[#allocation3 + $0x30] sm:$0xff] %vm1606, %v1580
        %1614 = vst.msk [vmem:[#allocation3 + $0x38] sm:$0xff] %vm1606, %v1581
        %1615 = vst.msk [vmem:[#allocation3 + $0x40] sm:$0xff] %vm1606, %v1582
        %1616 = vst.msk [vmem:[#allocation3 + $0x48] sm:$0xff] %vm1606, %v1583
        %1617 = vst.msk [vmem:[#allocation3 + $0x50] sm:$0xff] %vm1606, %v1584
        %1618 = vst.msk [vmem:[#allocation3 + $0x58] sm:$0xff] %vm1606, %v1585
        %1619 = vst.msk [vmem:[#allocation3 + $0x60] sm:$0xff] %vm1606, %v1586
        %1620 = vst.msk [vmem:[#allocation3 + $0x68] sm:$0xff] %vm1606, %v1587
        %1621 = vst.msk [vmem:[#allocation3 + $0x70] sm:$0xff] %vm1606, %v1588
        %1622 = vst.msk [vmem:[#allocation3 + $0x78] sm:$0xff] %vm1606, %v1589
        %1623 = vst.msk [vmem:[#allocation3 + $0x80] sm:$0xff] %vm1606, %v1590
        %1624 = vst.msk [vmem:[#allocation3 + $0x88] sm:$0xff] %vm1606, %v1591
        %1625 = vst.msk [vmem:[#allocation3 + $0x90] sm:$0xff] %vm1606, %v1592
        %1626 = vst.msk [vmem:[#allocation3 + $0x98] sm:$0xff] %vm1606, %v1593
        %1627 = vst.msk [vmem:[#allocation3 + $0xa0] sm:$0xff] %vm1606, %v1594
        %1628 = vst.msk [vmem:[#allocation3 + $0xa8] sm:$0xff] %vm1606, %v1595
        %1629 = vst.msk [vmem:[#allocation3 + $0xb0] sm:$0xff] %vm1606, %v1596
        %1630 = vst.msk [vmem:[#allocation3 + $0xb8] sm:$0xff] %vm1606, %v1597
        %1631 = vst.msk [vmem:[#allocation3 + $0xc0] sm:$0xff] %vm1606, %v1598
        %1632 = vst.msk [vmem:[#allocation3 + $0xc8] sm:$0xff] %vm1606, %v1599
        %1633 = vst.msk [vmem:[#allocation3 + $0xd0] sm:$0xff] %vm1606, %v1600
        %1634 = vst.msk [vmem:[#allocation3 + $0xd8] sm:$0xff] %vm1606, %v1601
        %1635 = vst.msk [vmem:[#allocation3 + $0xe0] sm:$0xff] %vm1606, %v1602
        %1636 = vst.msk [vmem:[#allocation3 + $0xe8] sm:$0xff] %vm1606, %v1603
        %1637 = vst.msk [vmem:[#allocation3 + $0xf0] sm:$0xff] %vm1606, %v1604
        %1638 = vst.msk [vmem:[#allocation3 + $0xf8] sm:$0xff] %vm1606, %v1605
        %1639 = vst.msk [vmem:[#allocation2] sm:$0xff] %vm1606, %v1062
        %1640 = vst.msk [vmem:[#allocation2 + $0x8] sm:$0xff] %vm1606, %v1063
        %1641 = vst.msk [vmem:[#allocation2 + $0x10] sm:$0xff] %vm1606, %v1064
        %1642 = vst.msk [vmem:[#allocation2 + $0x18] sm:$0xff] %vm1606, %v1065
        %1643 = vst.msk [vmem:[#allocation2 + $0x20] sm:$0xff] %vm1606, %v1066
        %1644 = vst.msk [vmem:[#allocation2 + $0x28] sm:$0xff] %vm1606, %v1067
        %1645 = vst.msk [vmem:[#allocation2 + $0x30] sm:$0xff] %vm1606, %v1068
        %1646 = vst.msk [vmem:[#allocation2 + $0x38] sm:$0xff] %vm1606, %v1069
        %1647 = vst.msk [vmem:[#allocation2 + $0x40] sm:$0xff] %vm1606, %v1070
        %1648 = vst.msk [vmem:[#allocation2 + $0x48] sm:$0xff] %vm1606, %v1071
        %1649 = vst.msk [vmem:[#allocation2 + $0x50] sm:$0xff] %vm1606, %v1072
        %1650 = vst.msk [vmem:[#allocation2 + $0x58] sm:$0xff] %vm1606, %v1073
        %1651 = vst.msk [vmem:[#allocation2 + $0x60] sm:$0xff] %vm1606, %v1074
        %1652 = vst.msk [vmem:[#allocation2 + $0x68] sm:$0xff] %vm1606, %v1075
        %1653 = vst.msk [vmem:[#allocation2 + $0x70] sm:$0xff] %vm1606, %v1076
        %1654 = vst.msk [vmem:[#allocation2 + $0x78] sm:$0xff] %vm1606, %v1077
        %1655 = vst.msk [vmem:[#allocation2 + $0x80] sm:$0xff] %vm1606, %v1078
        %1656 = vst.msk [vmem:[#allocation2 + $0x88] sm:$0xff] %vm1606, %v1079
        %1657 = vst.msk [vmem:[#allocation2 + $0x90] sm:$0xff] %vm1606, %v1080
        %1658 = vst.msk [vmem:[#allocation2 + $0x98] sm:$0xff] %vm1606, %v1081
        %1659 = vst.msk [vmem:[#allocation2 + $0xa0] sm:$0xff] %vm1606, %v1082
        %1660 = vst.msk [vmem:[#allocation2 + $0xa8] sm:$0xff] %vm1606, %v1083
        %1661 = vst.msk [vmem:[#allocation2 + $0xb0] sm:$0xff] %vm1606, %v1084
        %1662 = vst.msk [vmem:[#allocation2 + $0xb8] sm:$0xff] %vm1606, %v1085
        %1663 = vst.msk [vmem:[#allocation2 + $0xc0] sm:$0xff] %vm1606, %v1086
        %1664 = vst.msk [vmem:[#allocation2 + $0xc8] sm:$0xff] %vm1606, %v1087
        %1665 = vst.msk [vmem:[#allocation2 + $0xd0] sm:$0xff] %vm1606, %v1088
        %1666 = vst.msk [vmem:[#allocation2 + $0xd8] sm:$0xff] %vm1606, %v1089
        %1667 = vst.msk [vmem:[#allocation2 + $0xe0] sm:$0xff] %vm1606, %v1090
        %1668 = vst.msk [vmem:[#allocation2 + $0xe8] sm:$0xff] %vm1606, %v1091
        %1669 = vst.msk [vmem:[#allocation2 + $0xf0] sm:$0xff] %vm1606, %v1092
        %1670 = vst.msk [vmem:[#allocation2 + $0xf8] sm:$0xff] %vm1606, %v1093
        %s1671 = smul.u32 %s21, 128
        %v1672 = vlaneseq
        %v1673 = vand.u32 %v1672, 127
        %v1674 = vstv %s1671
        %v1675 = vadd.s32 %v1674, %v1673
        %1676 = vset.pattern.permute.xlu0 0
        %1677 = vperm.xlu0 %1676, %v934
        %v1678 = vpop.permute.xlu0 %1677
        %1679 = vset.pattern.permute.xlu0 0
        %1680 = vperm.xlu0 %1679, %v935
        %v1681 = vpop.permute.xlu0 %1680
        %1682 = vset.pattern.permute.xlu0 0
        %1683 = vperm.xlu0 %1682, %v936
        %v1684 = vpop.permute.xlu0 %1683
        %1685 = vset.pattern.permute.xlu0 0
        %1686 = vperm.xlu0 %1685, %v937
        %v1687 = vpop.permute.xlu0 %1686
        %1688 = vset.pattern.permute.xlu0 0
        %1689 = vperm.xlu0 %1688, %v938
        %v1690 = vpop.permute.xlu0 %1689
        %1691 = vset.pattern.permute.xlu0 0
        %1692 = vperm.xlu0 %1691, %v939
        %v1693 = vpop.permute.xlu0 %1692
        %1694 = vset.pattern.permute.xlu0 0
        %1695 = vperm.xlu0 %1694, %v940
        %v1696 = vpop.permute.xlu0 %1695
        %1697 = vset.pattern.permute.xlu0 0
        %1698 = vperm.xlu0 %1697, %v941
        %v1699 = vpop.permute.xlu0 %1698
        %1700 = vset.pattern.permute.xlu0 0
        %1701 = vperm.xlu0 %1700, %v942
        %v1702 = vpop.permute.xlu0 %1701
        %1703 = vset.pattern.permute.xlu0 0
        %1704 = vperm.xlu0 %1703, %v943
        %v1705 = vpop.permute.xlu0 %1704
        %1706 = vset.pattern.permute.xlu0 0
        %1707 = vperm.xlu0 %1706, %v944
        %v1708 = vpop.permute.xlu0 %1707
        %1709 = vset.pattern.permute.xlu0 0
        %1710 = vperm.xlu0 %1709, %v945
        %v1711 = vpop.permute.xlu0 %1710
        %1712 = vset.pattern.permute.xlu0 0
        %1713 = vperm.xlu0 %1712, %v946
        %v1714 = vpop.permute.xlu0 %1713
        %1715 = vset.pattern.permute.xlu0 0
        %1716 = vperm.xlu0 %1715, %v947
        %v1717 = vpop.permute.xlu0 %1716
        %1718 = vset.pattern.permute.xlu0 0
        %1719 = vperm.xlu0 %1718, %v948
        %v1720 = vpop.permute.xlu0 %1719
        %1721 = vset.pattern.permute.xlu0 0
        %1722 = vperm.xlu0 %1721, %v949
        %v1723 = vpop.permute.xlu0 %1722
        %1724 = vset.pattern.permute.xlu0 0
        %1725 = vperm.xlu0 %1724, %v950
        %v1726 = vpop.permute.xlu0 %1725
        %1727 = vset.pattern.permute.xlu0 0
        %1728 = vperm.xlu0 %1727, %v951
        %v1729 = vpop.permute.xlu0 %1728
        %1730 = vset.pattern.permute.xlu0 0
        %1731 = vperm.xlu0 %1730, %v952
        %v1732 = vpop.permute.xlu0 %1731
        %1733 = vset.pattern.permute.xlu0 0
        %1734 = vperm.xlu0 %1733, %v953
        %v1735 = vpop.permute.xlu0 %1734
        %1736 = vset.pattern.permute.xlu0 0
        %1737 = vperm.xlu0 %1736, %v954
        %v1738 = vpop.permute.xlu0 %1737
        %1739 = vset.pattern.permute.xlu0 0
        %1740 = vperm.xlu0 %1739, %v955
        %v1741 = vpop.permute.xlu0 %1740
        %1742 = vset.pattern.permute.xlu0 0
        %1743 = vperm.xlu0 %1742, %v956
        %v1744 = vpop.permute.xlu0 %1743
        %1745 = vset.pattern.permute.xlu0 0
        %1746 = vperm.xlu0 %1745, %v957
        %v1747 = vpop.permute.xlu0 %1746
        %1748 = vset.pattern.permute.xlu0 0
        %1749 = vperm.xlu0 %1748, %v958
        %v1750 = vpop.permute.xlu0 %1749
        %1751 = vset.pattern.permute.xlu0 0
        %1752 = vperm.xlu0 %1751, %v959
        %v1753 = vpop.permute.xlu0 %1752
        %1754 = vset.pattern.permute.xlu0 0
        %1755 = vperm.xlu0 %1754, %v960
        %v1756 = vpop.permute.xlu0 %1755
        %1757 = vset.pattern.permute.xlu0 0
        %1758 = vperm.xlu0 %1757, %v961
        %v1759 = vpop.permute.xlu0 %1758
        %1760 = vset.pattern.permute.xlu0 0
        %1761 = vperm.xlu0 %1760, %v962
        %v1762 = vpop.permute.xlu0 %1761
        %1763 = vset.pattern.permute.xlu0 0
        %1764 = vperm.xlu0 %1763, %v963
        %v1765 = vpop.permute.xlu0 %1764
        %1766 = vset.pattern.permute.xlu0 0
        %1767 = vperm.xlu0 %1766, %v964
        %v1768 = vpop.permute.xlu0 %1767
        %1769 = vset.pattern.permute.xlu0 0
        %1770 = vperm.xlu0 %1769, %v965
        %v1771 = vpop.permute.xlu0 %1770
        %vm1772 = vcmp.eq.s32.totalorder %v1675, %v1678
        %vm1773 = vcmp.eq.s32.totalorder %v1675, %v1681
        %vm1774 = vcmp.eq.s32.totalorder %v1675, %v1684
        %vm1775 = vcmp.eq.s32.totalorder %v1675, %v1687
        %vm1776 = vcmp.eq.s32.totalorder %v1675, %v1690
        %vm1777 = vcmp.eq.s32.totalorder %v1675, %v1693
        %vm1778 = vcmp.eq.s32.totalorder %v1675, %v1696
        %vm1779 = vcmp.eq.s32.totalorder %v1675, %v1699
        %vm1780 = vcmp.eq.s32.totalorder %v1675, %v1702
        %vm1781 = vcmp.eq.s32.totalorder %v1675, %v1705
        %vm1782 = vcmp.eq.s32.totalorder %v1675, %v1708
        %vm1783 = vcmp.eq.s32.totalorder %v1675, %v1711
        %vm1784 = vcmp.eq.s32.totalorder %v1675, %v1714
        %vm1785 = vcmp.eq.s32.totalorder %v1675, %v1717
        %vm1786 = vcmp.eq.s32.totalorder %v1675, %v1720
        %vm1787 = vcmp.eq.s32.totalorder %v1675, %v1723
        %vm1788 = vcmp.eq.s32.totalorder %v1675, %v1726
        %vm1789 = vcmp.eq.s32.totalorder %v1675, %v1729
        %vm1790 = vcmp.eq.s32.totalorder %v1675, %v1732
        %vm1791 = vcmp.eq.s32.totalorder %v1675, %v1735
        %vm1792 = vcmp.eq.s32.totalorder %v1675, %v1738
        %vm1793 = vcmp.eq.s32.totalorder %v1675, %v1741
        %vm1794 = vcmp.eq.s32.totalorder %v1675, %v1744
        %vm1795 = vcmp.eq.s32.totalorder %v1675, %v1747
        %vm1796 = vcmp.eq.s32.totalorder %v1675, %v1750
        %vm1797 = vcmp.eq.s32.totalorder %v1675, %v1753
        %vm1798 = vcmp.eq.s32.totalorder %v1675, %v1756
        %vm1799 = vcmp.eq.s32.totalorder %v1675, %v1759
        %vm1800 = vcmp.eq.s32.totalorder %v1675, %v1762
        %vm1801 = vcmp.eq.s32.totalorder %v1675, %v1765
        %vm1802 = vcmp.eq.s32.totalorder %v1675, %v1768
        %vm1803 = vcmp.eq.s32.totalorder %v1675, %v1771
        %v1804 = vsel %vm1772, 1, 0
        %v1805 = vsel %vm1773, 1, 0
        %v1806 = vsel %vm1774, 1, 0
        %v1807 = vsel %vm1775, 1, 0
        %v1808 = vsel %vm1776, 1, 0
        %v1809 = vsel %vm1777, 1, 0
        %v1810 = vsel %vm1778, 1, 0
        %v1811 = vsel %vm1779, 1, 0
        %v1812 = vsel %vm1780, 1, 0
        %v1813 = vsel %vm1781, 1, 0
        %v1814 = vsel %vm1782, 1, 0
        %v1815 = vsel %vm1783, 1, 0
        %v1816 = vsel %vm1784, 1, 0
        %v1817 = vsel %vm1785, 1, 0
        %v1818 = vsel %vm1786, 1, 0
        %v1819 = vsel %vm1787, 1, 0
        %v1820 = vsel %vm1788, 1, 0
        %v1821 = vsel %vm1789, 1, 0
        %v1822 = vsel %vm1790, 1, 0
        %v1823 = vsel %vm1791, 1, 0
        %v1824 = vsel %vm1792, 1, 0
        %v1825 = vsel %vm1793, 1, 0
        %v1826 = vsel %vm1794, 1, 0
        %v1827 = vsel %vm1795, 1, 0
        %v1828 = vsel %vm1796, 1, 0
        %v1829 = vsel %vm1797, 1, 0
        %v1830 = vsel %vm1798, 1, 0
        %v1831 = vsel %vm1799, 1, 0
        %v1832 = vsel %vm1800, 1, 0
        %v1833 = vsel %vm1801, 1, 0
        %v1834 = vsel %vm1802, 1, 0
        %v1835 = vsel %vm1803, 1, 0
        %v1836 = vcvt.s32.f32 %v1804
        %v1837 = vcvt.s32.f32 %v1805
        %v1838 = vcvt.s32.f32 %v1806
        %v1839 = vcvt.s32.f32 %v1807
        %v1840 = vcvt.s32.f32 %v1808
        %v1841 = vcvt.s32.f32 %v1809
        %v1842 = vcvt.s32.f32 %v1810
        %v1843 = vcvt.s32.f32 %v1811
        %v1844 = vcvt.s32.f32 %v1812
        %v1845 = vcvt.s32.f32 %v1813
        %v1846 = vcvt.s32.f32 %v1814
        %v1847 = vcvt.s32.f32 %v1815
        %v1848 = vcvt.s32.f32 %v1816
        %v1849 = vcvt.s32.f32 %v1817
        %v1850 = vcvt.s32.f32 %v1818
        %v1851 = vcvt.s32.f32 %v1819
        %v1852 = vcvt.s32.f32 %v1820
        %v1853 = vcvt.s32.f32 %v1821
        %v1854 = vcvt.s32.f32 %v1822
        %v1855 = vcvt.s32.f32 %v1823
        %v1856 = vcvt.s32.f32 %v1824
        %v1857 = vcvt.s32.f32 %v1825
        %v1858 = vcvt.s32.f32 %v1826
        %v1859 = vcvt.s32.f32 %v1827
        %v1860 = vcvt.s32.f32 %v1828
        %v1861 = vcvt.s32.f32 %v1829
        %v1862 = vcvt.s32.f32 %v1830
        %v1863 = vcvt.s32.f32 %v1831
        %v1864 = vcvt.s32.f32 %v1832
        %v1865 = vcvt.s32.f32 %v1833
        %v1866 = vcvt.s32.f32 %v1834
        %v1867 = vcvt.s32.f32 %v1835
        %v1868 = vld [vmem:[#allocation7] sm:$0xff]
        %v1869 = vld [vmem:[#allocation7 + $0x8] sm:$0xff]
        %v1870 = vld [vmem:[#allocation7 + $0x10] sm:$0xff]
        %v1871 = vld [vmem:[#allocation7 + $0x18] sm:$0xff]
        %v1872 = vld [vmem:[#allocation7 + $0x20] sm:$0xff]
        %v1873 = vld [vmem:[#allocation7 + $0x28] sm:$0xff]
        %v1874 = vld [vmem:[#allocation7 + $0x30] sm:$0xff]
        %v1875 = vld [vmem:[#allocation7 + $0x38] sm:$0xff]
        %v1876 = vld [vmem:[#allocation7 + $0x40] sm:$0xff]
        %v1877 = vld [vmem:[#allocation7 + $0x48] sm:$0xff]
        %v1878 = vld [vmem:[#allocation7 + $0x50] sm:$0xff]
        %v1879 = vld [vmem:[#allocation7 + $0x58] sm:$0xff]
        %v1880 = vld [vmem:[#allocation7 + $0x60] sm:$0xff]
        %v1881 = vld [vmem:[#allocation7 + $0x68] sm:$0xff]
        %v1882 = vld [vmem:[#allocation7 + $0x70] sm:$0xff]
        %v1883 = vld [vmem:[#allocation7 + $0x78] sm:$0xff]
        %v1884 = vld [vmem:[#allocation7 + $0x80] sm:$0xff]
        %v1885 = vld [vmem:[#allocation7 + $0x88] sm:$0xff]
        %v1886 = vld [vmem:[#allocation7 + $0x90] sm:$0xff]
        %v1887 = vld [vmem:[#allocation7 + $0x98] sm:$0xff]
        %v1888 = vld [vmem:[#allocation7 + $0xa0] sm:$0xff]
        %v1889 = vld [vmem:[#allocation7 + $0xa8] sm:$0xff]
        %v1890 = vld [vmem:[#allocation7 + $0xb0] sm:$0xff]
        %v1891 = vld [vmem:[#allocation7 + $0xb8] sm:$0xff]
        %v1892 = vld [vmem:[#allocation7 + $0xc0] sm:$0xff]
        %v1893 = vld [vmem:[#allocation7 + $0xc8] sm:$0xff]
        %v1894 = vld [vmem:[#allocation7 + $0xd0] sm:$0xff]
        %v1895 = vld [vmem:[#allocation7 + $0xd8] sm:$0xff]
        %v1896 = vld [vmem:[#allocation7 + $0xe0] sm:$0xff]
        %v1897 = vld [vmem:[#allocation7 + $0xe8] sm:$0xff]
        %v1898 = vld [vmem:[#allocation7 + $0xf0] sm:$0xff]
        %v1899 = vld [vmem:[#allocation7 + $0xf8] sm:$0xff]
        %v1900 = vmul.f32 %v776, %v1836
        %v1901 = vmul.f32 %v780, %v1837
        %v1902 = vmul.f32 %v786, %v1838
        %v1903 = vmul.f32 %v790, %v1839
        %v1904 = vmul.f32 %v796, %v1840
        %v1905 = vmul.f32 %v800, %v1841
        %v1906 = vmul.f32 %v806, %v1842
        %v1907 = vmul.f32 %v810, %v1843
        %v1908 = vmul.f32 %v816, %v1844
        %v1909 = vmul.f32 %v820, %v1845
        %v1910 = vmul.f32 %v826, %v1846
        %v1911 = vmul.f32 %v830, %v1847
        %v1912 = vmul.f32 %v836, %v1848
        %v1913 = vmul.f32 %v840, %v1849
        %v1914 = vmul.f32 %v846, %v1850
        %v1915 = vmul.f32 %v850, %v1851
        %v1916 = vmul.f32 %v856, %v1852
        %v1917 = vmul.f32 %v860, %v1853
        %v1918 = vmul.f32 %v866, %v1854
        %v1919 = vmul.f32 %v870, %v1855
        %v1920 = vmul.f32 %v876, %v1856
        %v1921 = vmul.f32 %v880, %v1857
        %v1922 = vmul.f32 %v886, %v1858
        %v1923 = vmul.f32 %v890, %v1859
        %v1924 = vmul.f32 %v896, %v1860
        %v1925 = vmul.f32 %v900, %v1861
        %v1926 = vmul.f32 %v906, %v1862
        %v1927 = vmul.f32 %v910, %v1863
        %v1928 = vmul.f32 %v916, %v1864
        %v1929 = vmul.f32 %v920, %v1865
        %v1930 = vmul.f32 %v926, %v1866
        %v1931 = vmul.f32 %v930, %v1867
        %1932 = vadd.xlane.f32.xlu0 %v1900
        %v1933 = vpop.xlane.xlu0 %1932
        %1934 = vadd.xlane.f32.xlu0 %v1901
        %v1935 = vpop.xlane.xlu0 %1934
        %1936 = vadd.xlane.f32.xlu0 %v1902
        %v1937 = vpop.xlane.xlu0 %1936
        %1938 = vadd.xlane.f32.xlu0 %v1903
        %v1939 = vpop.xlane.xlu0 %1938
        %1940 = vadd.xlane.f32.xlu0 %v1904
        %v1941 = vpop.xlane.xlu0 %1940
        %1942 = vadd.xlane.f32.xlu0 %v1905
        %v1943 = vpop.xlane.xlu0 %1942
        %1944 = vadd.xlane.f32.xlu0 %v1906
        %v1945 = vpop.xlane.xlu0 %1944
        %1946 = vadd.xlane.f32.xlu0 %v1907
        %v1947 = vpop.xlane.xlu0 %1946
        %1948 = vadd.xlane.f32.xlu0 %v1908
        %v1949 = vpop.xlane.xlu0 %1948
        %1950 = vadd.xlane.f32.xlu0 %v1909
        %v1951 = vpop.xlane.xlu0 %1950
        %1952 = vadd.xlane.f32.xlu0 %v1910
        %v1953 = vpop.xlane.xlu0 %1952
        %1954 = vadd.xlane.f32.xlu0 %v1911
        %v1955 = vpop.xlane.xlu0 %1954
        %1956 = vadd.xlane.f32.xlu0 %v1912
        %v1957 = vpop.xlane.xlu0 %1956
        %1958 = vadd.xlane.f32.xlu0 %v1913
        %v1959 = vpop.xlane.xlu0 %1958
        %1960 = vadd.xlane.f32.xlu0 %v1914
        %v1961 = vpop.xlane.xlu0 %1960
        %1962 = vadd.xlane.f32.xlu0 %v1915
        %v1963 = vpop.xlane.xlu0 %1962
        %1964 = vadd.xlane.f32.xlu0 %v1916
        %v1965 = vpop.xlane.xlu0 %1964
        %1966 = vadd.xlane.f32.xlu0 %v1917
        %v1967 = vpop.xlane.xlu0 %1966
        %1968 = vadd.xlane.f32.xlu0 %v1918
        %v1969 = vpop.xlane.xlu0 %1968
        %1970 = vadd.xlane.f32.xlu0 %v1919
        %v1971 = vpop.xlane.xlu0 %1970
        %1972 = vadd.xlane.f32.xlu0 %v1920
        %v1973 = vpop.xlane.xlu0 %1972
        %1974 = vadd.xlane.f32.xlu0 %v1921
        %v1975 = vpop.xlane.xlu0 %1974
        %1976 = vadd.xlane.f32.xlu0 %v1922
        %v1977 = vpop.xlane.xlu0 %1976
        %1978 = vadd.xlane.f32.xlu0 %v1923
        %v1979 = vpop.xlane.xlu0 %1978
        %1980 = vadd.xlane.f32.xlu0 %v1924
        %v1981 = vpop.xlane.xlu0 %1980
        %1982 = vadd.xlane.f32.xlu0 %v1925
        %v1983 = vpop.xlane.xlu0 %1982
        %1984 = vadd.xlane.f32.xlu0 %v1926
        %v1985 = vpop.xlane.xlu0 %1984
        %1986 = vadd.xlane.f32.xlu0 %v1927
        %v1987 = vpop.xlane.xlu0 %1986
        %1988 = vadd.xlane.f32.xlu0 %v1928
        %v1989 = vpop.xlane.xlu0 %1988
        %1990 = vadd.xlane.f32.xlu0 %v1929
        %v1991 = vpop.xlane.xlu0 %1990
        %1992 = vadd.xlane.f32.xlu0 %v1930
        %v1993 = vpop.xlane.xlu0 %1992
        %1994 = vadd.xlane.f32.xlu0 %v1931
        %v1995 = vpop.xlane.xlu0 %1994
        %v1996 = vadd.f32 %v1868, %v1933
        %v1997 = vadd.f32 %v1869, %v1935
        %v1998 = vadd.f32 %v1870, %v1937
        %v1999 = vadd.f32 %v1871, %v1939
        %v2000 = vadd.f32 %v1872, %v1941
        %v2001 = vadd.f32 %v1873, %v1943
        %v2002 = vadd.f32 %v1874, %v1945
        %v2003 = vadd.f32 %v1875, %v1947
        %v2004 = vadd.f32 %v1876, %v1949
        %v2005 = vadd.f32 %v1877, %v1951
        %v2006 = vadd.f32 %v1878, %v1953
        %v2007 = vadd.f32 %v1879, %v1955
        %v2008 = vadd.f32 %v1880, %v1957
        %v2009 = vadd.f32 %v1881, %v1959
        %v2010 = vadd.f32 %v1882, %v1961
        %v2011 = vadd.f32 %v1883, %v1963
        %v2012 = vadd.f32 %v1884, %v1965
        %v2013 = vadd.f32 %v1885, %v1967
        %v2014 = vadd.f32 %v1886, %v1969
        %v2015 = vadd.f32 %v1887, %v1971
        %v2016 = vadd.f32 %v1888, %v1973
        %v2017 = vadd.f32 %v1889, %v1975
        %v2018 = vadd.f32 %v1890, %v1977
        %v2019 = vadd.f32 %v1891, %v1979
        %v2020 = vadd.f32 %v1892, %v1981
        %v2021 = vadd.f32 %v1893, %v1983
        %v2022 = vadd.f32 %v1894, %v1985
        %v2023 = vadd.f32 %v1895, %v1987
        %v2024 = vadd.f32 %v1896, %v1989
        %v2025 = vadd.f32 %v1897, %v1991
        %v2026 = vadd.f32 %v1898, %v1993
        %v2027 = vadd.f32 %v1899, %v1995
        %2028 = vst.msk [vmem:[#allocation7] sm:$0xff] %vm1606, %v1996
        %2029 = vst.msk [vmem:[#allocation7 + $0x8] sm:$0xff] %vm1606, %v1997
        %2030 = vst.msk [vmem:[#allocation7 + $0x10] sm:$0xff] %vm1606, %v1998
        %2031 = vst.msk [vmem:[#allocation7 + $0x18] sm:$0xff] %vm1606, %v1999
        %2032 = vst.msk [vmem:[#allocation7 + $0x20] sm:$0xff] %vm1606, %v2000
        %2033 = vst.msk [vmem:[#allocation7 + $0x28] sm:$0xff] %vm1606, %v2001
        %2034 = vst.msk [vmem:[#allocation7 + $0x30] sm:$0xff] %vm1606, %v2002
        %2035 = vst.msk [vmem:[#allocation7 + $0x38] sm:$0xff] %vm1606, %v2003
        %2036 = vst.msk [vmem:[#allocation7 + $0x40] sm:$0xff] %vm1606, %v2004
        %2037 = vst.msk [vmem:[#allocation7 + $0x48] sm:$0xff] %vm1606, %v2005
        %2038 = vst.msk [vmem:[#allocation7 + $0x50] sm:$0xff] %vm1606, %v2006
        %2039 = vst.msk [vmem:[#allocation7 + $0x58] sm:$0xff] %vm1606, %v2007
        %2040 = vst.msk [vmem:[#allocation7 + $0x60] sm:$0xff] %vm1606, %v2008
        %2041 = vst.msk [vmem:[#allocation7 + $0x68] sm:$0xff] %vm1606, %v2009
        %2042 = vst.msk [vmem:[#allocation7 + $0x70] sm:$0xff] %vm1606, %v2010
        %2043 = vst.msk [vmem:[#allocation7 + $0x78] sm:$0xff] %vm1606, %v2011
        %2044 = vst.msk [vmem:[#allocation7 + $0x80] sm:$0xff] %vm1606, %v2012
        %2045 = vst.msk [vmem:[#allocation7 + $0x88] sm:$0xff] %vm1606, %v2013
        %2046 = vst.msk [vmem:[#allocation7 + $0x90] sm:$0xff] %vm1606, %v2014
        %2047 = vst.msk [vmem:[#allocation7 + $0x98] sm:$0xff] %vm1606, %v2015
        %2048 = vst.msk [vmem:[#allocation7 + $0xa0] sm:$0xff] %vm1606, %v2016
        %2049 = vst.msk [vmem:[#allocation7 + $0xa8] sm:$0xff] %vm1606, %v2017
        %2050 = vst.msk [vmem:[#allocation7 + $0xb0] sm:$0xff] %vm1606, %v2018
        %2051 = vst.msk [vmem:[#allocation7 + $0xb8] sm:$0xff] %vm1606, %v2019
        %2052 = vst.msk [vmem:[#allocation7 + $0xc0] sm:$0xff] %vm1606, %v2020
        %2053 = vst.msk [vmem:[#allocation7 + $0xc8] sm:$0xff] %vm1606, %v2021
        %2054 = vst.msk [vmem:[#allocation7 + $0xd0] sm:$0xff] %vm1606, %v2022
        %2055 = vst.msk [vmem:[#allocation7 + $0xd8] sm:$0xff] %vm1606, %v2023
        %2056 = vst.msk [vmem:[#allocation7 + $0xe0] sm:$0xff] %vm1606, %v2024
        %2057 = vst.msk [vmem:[#allocation7 + $0xe8] sm:$0xff] %vm1606, %v2025
        %2058 = vst.msk [vmem:[#allocation7 + $0xf0] sm:$0xff] %vm1606, %v2026
        %2059 = vst.msk [vmem:[#allocation7 + $0xf8] sm:$0xff] %vm1606, %v2027
        %v2060 = vld [vmem:[#allocation4] sm:$0xff]
        %v2061 = vld [vmem:[#allocation4 + $0x8] sm:$0xff]
        %v2062 = vld [vmem:[#allocation4 + $0x10] sm:$0xff]
        %v2063 = vld [vmem:[#allocation4 + $0x18] sm:$0xff]
        %v2064 = vld [vmem:[#allocation4 + $0x20] sm:$0xff]
        %v2065 = vld [vmem:[#allocation4 + $0x28] sm:$0xff]
        %v2066 = vld [vmem:[#allocation4 + $0x30] sm:$0xff]
        %v2067 = vld [vmem:[#allocation4 + $0x38] sm:$0xff]
        %v2068 = vld [vmem:[#allocation4 + $0x40] sm:$0xff]
        %v2069 = vld [vmem:[#allocation4 + $0x48] sm:$0xff]
        %v2070 = vld [vmem:[#allocation4 + $0x50] sm:$0xff]
        %v2071 = vld [vmem:[#allocation4 + $0x58] sm:$0xff]
        %v2072 = vld [vmem:[#allocation4 + $0x60] sm:$0xff]
        %v2073 = vld [vmem:[#allocation4 + $0x68] sm:$0xff]
        %v2074 = vld [vmem:[#allocation4 + $0x70] sm:$0xff]
        %v2075 = vld [vmem:[#allocation4 + $0x78] sm:$0xff]
        %v2076 = vld [vmem:[#allocation4 + $0x80] sm:$0xff]
        %v2077 = vld [vmem:[#allocation4 + $0x88] sm:$0xff]
        %v2078 = vld [vmem:[#allocation4 + $0x90] sm:$0xff]
        %v2079 = vld [vmem:[#allocation4 + $0x98] sm:$0xff]
        %v2080 = vld [vmem:[#allocation4 + $0xa0] sm:$0xff]
        %v2081 = vld [vmem:[#allocation4 + $0xa8] sm:$0xff]
        %v2082 = vld [vmem:[#allocation4 + $0xb0] sm:$0xff]
        %v2083 = vld [vmem:[#allocation4 + $0xb8] sm:$0xff]
        %v2084 = vld [vmem:[#allocation4 + $0xc0] sm:$0xff]
        %v2085 = vld [vmem:[#allocation4 + $0xc8] sm:$0xff]
        %v2086 = vld [vmem:[#allocation4 + $0xd0] sm:$0xff]
        %v2087 = vld [vmem:[#allocation4 + $0xd8] sm:$0xff]
        %v2088 = vld [vmem:[#allocation4 + $0xe0] sm:$0xff]
        %v2089 = vld [vmem:[#allocation4 + $0xe8] sm:$0xff]
        %v2090 = vld [vmem:[#allocation4 + $0xf0] sm:$0xff]
        %v2091 = vld [vmem:[#allocation4 + $0xf8] sm:$0xff]
        %2092 = vmax.xlane.f32.xlu0 %v778
        %v2093 = vpop.xlane.xlu0 %2092
        %2094 = vmax.xlane.f32.xlu0 %v782
        %v2095 = vpop.xlane.xlu0 %2094
        %2096 = vmax.xlane.f32.xlu0 %v788
        %v2097 = vpop.xlane.xlu0 %2096
        %2098 = vmax.xlane.f32.xlu0 %v792
        %v2099 = vpop.xlane.xlu0 %2098
        %2100 = vmax.xlane.f32.xlu0 %v798
        %v2101 = vpop.xlane.xlu0 %2100
        %2102 = vmax.xlane.f32.xlu0 %v802
        %v2103 = vpop.xlane.xlu0 %2102
        %2104 = vmax.xlane.f32.xlu0 %v808
        %v2105 = vpop.xlane.xlu0 %2104
        %2106 = vmax.xlane.f32.xlu0 %v812
        %v2107 = vpop.xlane.xlu0 %2106
        %2108 = vmax.xlane.f32.xlu0 %v818
        %v2109 = vpop.xlane.xlu0 %2108
        %2110 = vmax.xlane.f32.xlu0 %v822
        %v2111 = vpop.xlane.xlu0 %2110
        %2112 = vmax.xlane.f32.xlu0 %v828
        %v2113 = vpop.xlane.xlu0 %2112
        %2114 = vmax.xlane.f32.xlu0 %v832
        %v2115 = vpop.xlane.xlu0 %2114
        %2116 = vmax.xlane.f32.xlu0 %v838
        %v2117 = vpop.xlane.xlu0 %2116
        %2118 = vmax.xlane.f32.xlu0 %v842
        %v2119 = vpop.xlane.xlu0 %2118
        %2120 = vmax.xlane.f32.xlu0 %v848
        %v2121 = vpop.xlane.xlu0 %2120
        %2122 = vmax.xlane.f32.xlu0 %v852
        %v2123 = vpop.xlane.xlu0 %2122
        %2124 = vmax.xlane.f32.xlu0 %v858
        %v2125 = vpop.xlane.xlu0 %2124
        %2126 = vmax.xlane.f32.xlu0 %v862
        %v2127 = vpop.xlane.xlu0 %2126
        %2128 = vmax.xlane.f32.xlu0 %v868
        %v2129 = vpop.xlane.xlu0 %2128
        %2130 = vmax.xlane.f32.xlu0 %v872
        %v2131 = vpop.xlane.xlu0 %2130
        %2132 = vmax.xlane.f32.xlu0 %v878
        %v2133 = vpop.xlane.xlu0 %2132
        %2134 = vmax.xlane.f32.xlu0 %v882
        %v2135 = vpop.xlane.xlu0 %2134
        %2136 = vmax.xlane.f32.xlu0 %v888
        %v2137 = vpop.xlane.xlu0 %2136
        %2138 = vmax.xlane.f32.xlu0 %v892
        %v2139 = vpop.xlane.xlu0 %2138
        %2140 = vmax.xlane.f32.xlu0 %v898
        %v2141 = vpop.xlane.xlu0 %2140
        %2142 = vmax.xlane.f32.xlu0 %v902
        %v2143 = vpop.xlane.xlu0 %2142
        %2144 = vmax.xlane.f32.xlu0 %v908
        %v2145 = vpop.xlane.xlu0 %2144
        %2146 = vmax.xlane.f32.xlu0 %v912
        %v2147 = vpop.xlane.xlu0 %2146
        %2148 = vmax.xlane.f32.xlu0 %v918
        %v2149 = vpop.xlane.xlu0 %2148
        %2150 = vmax.xlane.f32.xlu0 %v922
        %v2151 = vpop.xlane.xlu0 %2150
        %2152 = vmax.xlane.f32.xlu0 %v928
        %v2153 = vpop.xlane.xlu0 %2152
        %2154 = vmax.xlane.f32.xlu0 %v932
        %v2155 = vpop.xlane.xlu0 %2154
        %v2156 = vmax.f32 %v2060, %v2093
        %v2157 = vmax.f32 %v2061, %v2095
        %v2158 = vmax.f32 %v2062, %v2097
        %v2159 = vmax.f32 %v2063, %v2099
        %v2160 = vmax.f32 %v2064, %v2101
        %v2161 = vmax.f32 %v2065, %v2103
        %v2162 = vmax.f32 %v2066, %v2105
        %v2163 = vmax.f32 %v2067, %v2107
        %v2164 = vmax.f32 %v2068, %v2109
        %v2165 = vmax.f32 %v2069, %v2111
        %v2166 = vmax.f32 %v2070, %v2113
        %v2167 = vmax.f32 %v2071, %v2115
        %v2168 = vmax.f32 %v2072, %v2117
        %v2169 = vmax.f32 %v2073, %v2119
        %v2170 = vmax.f32 %v2074, %v2121
        %v2171 = vmax.f32 %v2075, %v2123
        %v2172 = vmax.f32 %v2076, %v2125
        %v2173 = vmax.f32 %v2077, %v2127
        %v2174 = vmax.f32 %v2078, %v2129
        %v2175 = vmax.f32 %v2079, %v2131
        %v2176 = vmax.f32 %v2080, %v2133
        %v2177 = vmax.f32 %v2081, %v2135
        %v2178 = vmax.f32 %v2082, %v2137
        %v2179 = vmax.f32 %v2083, %v2139
        %v2180 = vmax.f32 %v2084, %v2141
        %v2181 = vmax.f32 %v2085, %v2143
        %v2182 = vmax.f32 %v2086, %v2145
        %v2183 = vmax.f32 %v2087, %v2147
        %v2184 = vmax.f32 %v2088, %v2149
        %v2185 = vmax.f32 %v2089, %v2151
        %v2186 = vmax.f32 %v2090, %v2153
        %v2187 = vmax.f32 %v2091, %v2155
        %v2188 = vsub.f32 %v2060, %v2156
        %v2189 = vsub.f32 %v2061, %v2157
        %v2190 = vsub.f32 %v2062, %v2158
        %v2191 = vsub.f32 %v2063, %v2159
        %v2192 = vsub.f32 %v2064, %v2160
        %v2193 = vsub.f32 %v2065, %v2161
        %v2194 = vsub.f32 %v2066, %v2162
        %v2195 = vsub.f32 %v2067, %v2163
        %v2196 = vsub.f32 %v2068, %v2164
        %v2197 = vsub.f32 %v2069, %v2165
        %v2198 = vsub.f32 %v2070, %v2166
        %v2199 = vsub.f32 %v2071, %v2167
        %v2200 = vsub.f32 %v2072, %v2168
        %v2201 = vsub.f32 %v2073, %v2169
        %v2202 = vsub.f32 %v2074, %v2170
        %v2203 = vsub.f32 %v2075, %v2171
        %v2204 = vsub.f32 %v2076, %v2172
        %v2205 = vsub.f32 %v2077, %v2173
        %v2206 = vsub.f32 %v2078, %v2174
        %v2207 = vsub.f32 %v2079, %v2175
        %v2208 = vsub.f32 %v2080, %v2176
        %v2209 = vsub.f32 %v2081, %v2177
        %v2210 = vsub.f32 %v2082, %v2178
        %v2211 = vsub.f32 %v2083, %v2179
        %v2212 = vsub.f32 %v2084, %v2180
        %v2213 = vsub.f32 %v2085, %v2181
        %v2214 = vsub.f32 %v2086, %v2182
        %v2215 = vsub.f32 %v2087, %v2183
        %v2216 = vsub.f32 %v2088, %v2184
        %v2217 = vsub.f32 %v2089, %v2185
        %v2218 = vsub.f32 %v2090, %v2186
        %v2219 = vsub.f32 %v2091, %v2187
        %v2220 = vmul.f32 %v2188, 1.442695
        %v2221 = vpow.pop %v2220
        %v2222 = vmul.f32 %v2189, 1.442695
        %v2223 = vpow.pop %v2222
        %v2224 = vmul.f32 %v2190, 1.442695
        %v2225 = vpow.pop %v2224
        %v2226 = vmul.f32 %v2191, 1.442695
        %v2227 = vpow.pop %v2226
        %v2228 = vmul.f32 %v2192, 1.442695
        %v2229 = vpow.pop %v2228
        %v2230 = vmul.f32 %v2193, 1.442695
        %v2231 = vpow.pop %v2230
        %v2232 = vmul.f32 %v2194, 1.442695
        %v2233 = vpow.pop %v2232
        %v2234 = vmul.f32 %v2195, 1.442695
        %v2235 = vpow.pop %v2234
        %v2236 = vmul.f32 %v2196, 1.442695
        %v2237 = vpow.pop %v2236
        %v2238 = vmul.f32 %v2197, 1.442695
        %v2239 = vpow.pop %v2238
        %v2240 = vmul.f32 %v2198, 1.442695
        %v2241 = vpow.pop %v2240
        %v2242 = vmul.f32 %v2199, 1.442695
        %v2243 = vpow.pop %v2242
        %v2244 = vmul.f32 %v2200, 1.442695
        %v2245 = vpow.pop %v2244
        %v2246 = vmul.f32 %v2201, 1.442695
        %v2247 = vpow.pop %v2246
        %v2248 = vmul.f32 %v2202, 1.442695
        %v2249 = vpow.pop %v2248
        %v2250 = vmul.f32 %v2203, 1.442695
        %v2251 = vpow.pop %v2250
        %v2252 = vmul.f32 %v2204, 1.442695
        %v2253 = vpow.pop %v2252
        %v2254 = vmul.f32 %v2205, 1.442695
        %v2255 = vpow.pop %v2254
        %v2256 = vmul.f32 %v2206, 1.442695
        %v2257 = vpow.pop %v2256
        %v2258 = vmul.f32 %v2207, 1.442695
        %v2259 = vpow.pop %v2258
        %v2260 = vmul.f32 %v2208, 1.442695
        %v2261 = vpow.pop %v2260
        %v2262 = vmul.f32 %v2209, 1.442695
        %v2263 = vpow.pop %v2262
        %v2264 = vmul.f32 %v2210, 1.442695
        %v2265 = vpow.pop %v2264
        %v2266 = vmul.f32 %v2211, 1.442695
        %v2267 = vpow.pop %v2266
        %v2268 = vmul.f32 %v2212, 1.442695
        %v2269 = vpow.pop %v2268
        %v2270 = vmul.f32 %v2213, 1.442695
        %v2271 = vpow.pop %v2270
        %v2272 = vmul.f32 %v2214, 1.442695
        %v2273 = vpow.pop %v2272
        %v2274 = vmul.f32 %v2215, 1.442695
        %v2275 = vpow.pop %v2274
        %v2276 = vmul.f32 %v2216, 1.442695
        %v2277 = vpow.pop %v2276
        %v2278 = vmul.f32 %v2217, 1.442695
        %v2279 = vpow.pop %v2278
        %v2280 = vmul.f32 %v2218, 1.442695
        %v2281 = vpow.pop %v2280
        %v2282 = vmul.f32 %v2219, 1.442695
        %v2283 = vpow.pop %v2282
        %2285 = vset.pattern.permute.xlu0 0
        %2286 = vperm.xlu0 %2285, %v2156
        %v2287 = vpop.permute.xlu0 %2286
        %2290 = vset.pattern.permute.xlu0 0
        %2291 = vperm.xlu0 %2290, %v2157
        %v2292 = vpop.permute.xlu0 %2291
        %2295 = vset.pattern.permute.xlu0 0
        %2296 = vperm.xlu0 %2295, %v2158
        %v2297 = vpop.permute.xlu0 %2296
        %2300 = vset.pattern.permute.xlu0 0
        %2301 = vperm.xlu0 %2300, %v2159
        %v2302 = vpop.permute.xlu0 %2301
        %2305 = vset.pattern.permute.xlu0 0
        %2306 = vperm.xlu0 %2305, %v2160
        %v2307 = vpop.permute.xlu0 %2306
        %2310 = vset.pattern.permute.xlu0 0
        %2311 = vperm.xlu0 %2310, %v2161
        %v2312 = vpop.permute.xlu0 %2311
        %2315 = vset.pattern.permute.xlu0 0
        %2316 = vperm.xlu0 %2315, %v2162
        %v2317 = vpop.permute.xlu0 %2316
        %2320 = vset.pattern.permute.xlu0 0
        %2321 = vperm.xlu0 %2320, %v2163
        %v2322 = vpop.permute.xlu0 %2321
        %2325 = vset.pattern.permute.xlu0 0
        %2326 = vperm.xlu0 %2325, %v2164
        %v2327 = vpop.permute.xlu0 %2326
        %2330 = vset.pattern.permute.xlu0 0
        %2331 = vperm.xlu0 %2330, %v2165
        %v2332 = vpop.permute.xlu0 %2331
        %2335 = vset.pattern.permute.xlu0 0
        %2336 = vperm.xlu0 %2335, %v2166
        %v2337 = vpop.permute.xlu0 %2336
        %2340 = vset.pattern.permute.xlu0 0
        %2341 = vperm.xlu0 %2340, %v2167
        %v2342 = vpop.permute.xlu0 %2341
        %2345 = vset.pattern.permute.xlu0 0
        %2346 = vperm.xlu0 %2345, %v2168
        %v2347 = vpop.permute.xlu0 %2346
        %2350 = vset.pattern.permute.xlu0 0
        %2351 = vperm.xlu0 %2350, %v2169
        %v2352 = vpop.permute.xlu0 %2351
        %2355 = vset.pattern.permute.xlu0 0
        %2356 = vperm.xlu0 %2355, %v2170
        %v2357 = vpop.permute.xlu0 %2356
        %2360 = vset.pattern.permute.xlu0 0
        %2361 = vperm.xlu0 %2360, %v2171
        %v2362 = vpop.permute.xlu0 %2361
        %2365 = vset.pattern.permute.xlu0 0
        %2366 = vperm.xlu0 %2365, %v2172
        %v2367 = vpop.permute.xlu0 %2366
        %2370 = vset.pattern.permute.xlu0 0
        %2371 = vperm.xlu0 %2370, %v2173
        %v2372 = vpop.permute.xlu0 %2371
        %2375 = vset.pattern.permute.xlu0 0
        %2376 = vperm.xlu0 %2375, %v2174
        %v2377 = vpop.permute.xlu0 %2376
        %2380 = vset.pattern.permute.xlu0 0
        %2381 = vperm.xlu0 %2380, %v2175
        %v2382 = vpop.permute.xlu0 %2381
        %2385 = vset.pattern.permute.xlu0 0
        %2386 = vperm.xlu0 %2385, %v2176
        %v2387 = vpop.permute.xlu0 %2386
        %2390 = vset.pattern.permute.xlu0 0
        %2391 = vperm.xlu0 %2390, %v2177
        %v2392 = vpop.permute.xlu0 %2391
        %2395 = vset.pattern.permute.xlu0 0
        %2396 = vperm.xlu0 %2395, %v2178
        %v2397 = vpop.permute.xlu0 %2396
        %2400 = vset.pattern.permute.xlu0 0
        %2401 = vperm.xlu0 %2400, %v2179
        %v2402 = vpop.permute.xlu0 %2401
        %2405 = vset.pattern.permute.xlu0 0
        %2406 = vperm.xlu0 %2405, %v2180
        %v2407 = vpop.permute.xlu0 %2406
        %2410 = vset.pattern.permute.xlu0 0
        %2411 = vperm.xlu0 %2410, %v2181
        %v2412 = vpop.permute.xlu0 %2411
        %2415 = vset.pattern.permute.xlu0 0
        %2416 = vperm.xlu0 %2415, %v2182
        %v2417 = vpop.permute.xlu0 %2416
        %2420 = vset.pattern.permute.xlu0 0
        %2421 = vperm.xlu0 %2420, %v2183
        %v2422 = vpop.permute.xlu0 %2421
        %2425 = vset.pattern.permute.xlu0 0
        %2426 = vperm.xlu0 %2425, %v2184
        %v2427 = vpop.permute.xlu0 %2426
        %2430 = vset.pattern.permute.xlu0 0
        %2431 = vperm.xlu0 %2430, %v2185
        %v2432 = vpop.permute.xlu0 %2431
        %2435 = vset.pattern.permute.xlu0 0
        %2436 = vperm.xlu0 %2435, %v2186
        %v2437 = vpop.permute.xlu0 %2436
        %2440 = vset.pattern.permute.xlu0 0
        %2441 = vperm.xlu0 %2440, %v2187
        %v2442 = vpop.permute.xlu0 %2441
        %v2444 = vsub.f32 %v778, %v2287
        %v2445 = vsub.f32 %v782, %v2292
        %v2446 = vsub.f32 %v788, %v2297
        %v2447 = vsub.f32 %v792, %v2302
        %v2448 = vsub.f32 %v798, %v2307
        %v2449 = vsub.f32 %v802, %v2312
        %v2450 = vsub.f32 %v808, %v2317
        %v2451 = vsub.f32 %v812, %v2322
        %v2452 = vsub.f32 %v818, %v2327
        %v2453 = vsub.f32 %v822, %v2332
        %v2454 = vsub.f32 %v828, %v2337
        %v2455 = vsub.f32 %v832, %v2342
        %v2456 = vsub.f32 %v838, %v2347
        %v2457 = vsub.f32 %v842, %v2352
        %v2458 = vsub.f32 %v848, %v2357
        %v2459 = vsub.f32 %v852, %v2362
        %v2460 = vsub.f32 %v858, %v2367
        %v2461 = vsub.f32 %v862, %v2372
        %v2462 = vsub.f32 %v868, %v2377
        %v2463 = vsub.f32 %v872, %v2382
        %v2464 = vsub.f32 %v878, %v2387
        %v2465 = vsub.f32 %v882, %v2392
        %v2466 = vsub.f32 %v888, %v2397
        %v2467 = vsub.f32 %v892, %v2402
        %v2468 = vsub.f32 %v898, %v2407
        %v2469 = vsub.f32 %v902, %v2412
        %v2470 = vsub.f32 %v908, %v2417
        %v2471 = vsub.f32 %v912, %v2422
        %v2472 = vsub.f32 %v918, %v2427
        %v2473 = vsub.f32 %v922, %v2432
        %v2474 = vsub.f32 %v928, %v2437
        %v2475 = vsub.f32 %v932, %v2442
        %v2476 = vmul.f32 %v2444, 1.442695
        %v2477 = vpow.pop %v2476
        %v2478 = vmul.f32 %v2445, 1.442695
        %v2479 = vpow.pop %v2478
        %v2480 = vmul.f32 %v2446, 1.442695
        %v2481 = vpow.pop %v2480
        %v2482 = vmul.f32 %v2447, 1.442695
        %v2483 = vpow.pop %v2482
        %v2484 = vmul.f32 %v2448, 1.442695
        %v2485 = vpow.pop %v2484
        %v2486 = vmul.f32 %v2449, 1.442695
        %v2487 = vpow.pop %v2486
        %v2488 = vmul.f32 %v2450, 1.442695
        %v2489 = vpow.pop %v2488
        %v2490 = vmul.f32 %v2451, 1.442695
        %v2491 = vpow.pop %v2490
        %v2492 = vmul.f32 %v2452, 1.442695
        %v2493 = vpow.pop %v2492
        %v2494 = vmul.f32 %v2453, 1.442695
        %v2495 = vpow.pop %v2494
        %v2496 = vmul.f32 %v2454, 1.442695
        %v2497 = vpow.pop %v2496
        %v2498 = vmul.f32 %v2455, 1.442695
        %v2499 = vpow.pop %v2498
        %v2500 = vmul.f32 %v2456, 1.442695
        %v2501 = vpow.pop %v2500
        %v2502 = vmul.f32 %v2457, 1.442695
        %v2503 = vpow.pop %v2502
        %v2504 = vmul.f32 %v2458, 1.442695
        %v2505 = vpow.pop %v2504
        %v2506 = vmul.f32 %v2459, 1.442695
        %v2507 = vpow.pop %v2506
        %v2508 = vmul.f32 %v2460, 1.442695
        %v2509 = vpow.pop %v2508
        %v2510 = vmul.f32 %v2461, 1.442695
        %v2511 = vpow.pop %v2510
        %v2512 = vmul.f32 %v2462, 1.442695
        %v2513 = vpow.pop %v2512
        %v2514 = vmul.f32 %v2463, 1.442695
        %v2515 = vpow.pop %v2514
        %v2516 = vmul.f32 %v2464, 1.442695
        %v2517 = vpow.pop %v2516
        %v2518 = vmul.f32 %v2465, 1.442695
        %v2519 = vpow.pop %v2518
        %v2520 = vmul.f32 %v2466, 1.442695
        %v2521 = vpow.pop %v2520
        %v2522 = vmul.f32 %v2467, 1.442695
        %v2523 = vpow.pop %v2522
        %v2524 = vmul.f32 %v2468, 1.442695
        %v2525 = vpow.pop %v2524
        %v2526 = vmul.f32 %v2469, 1.442695
        %v2527 = vpow.pop %v2526
        %v2528 = vmul.f32 %v2470, 1.442695
        %v2529 = vpow.pop %v2528
        %v2530 = vmul.f32 %v2471, 1.442695
        %v2531 = vpow.pop %v2530
        %v2532 = vmul.f32 %v2472, 1.442695
        %v2533 = vpow.pop %v2532
        %v2534 = vmul.f32 %v2473, 1.442695
        %v2535 = vpow.pop %v2534
        %v2536 = vmul.f32 %v2474, 1.442695
        %v2537 = vpow.pop %v2536
        %v2538 = vmul.f32 %v2475, 1.442695
        %v2539 = vpow.pop %v2538
        %v2540 = vld [vmem:[#allocation5] sm:$0xff]
        %v2541 = vld [vmem:[#allocation5 + $0x8] sm:$0xff]
        %v2542 = vld [vmem:[#allocation5 + $0x10] sm:$0xff]
        %v2543 = vld [vmem:[#allocation5 + $0x18] sm:$0xff]
        %v2544 = vld [vmem:[#allocation5 + $0x20] sm:$0xff]
        %v2545 = vld [vmem:[#allocation5 + $0x28] sm:$0xff]
        %v2546 = vld [vmem:[#allocation5 + $0x30] sm:$0xff]
        %v2547 = vld [vmem:[#allocation5 + $0x38] sm:$0xff]
        %v2548 = vld [vmem:[#allocation5 + $0x40] sm:$0xff]
        %v2549 = vld [vmem:[#allocation5 + $0x48] sm:$0xff]
        %v2550 = vld [vmem:[#allocation5 + $0x50] sm:$0xff]
        %v2551 = vld [vmem:[#allocation5 + $0x58] sm:$0xff]
        %v2552 = vld [vmem:[#allocation5 + $0x60] sm:$0xff]
        %v2553 = vld [vmem:[#allocation5 + $0x68] sm:$0xff]
        %v2554 = vld [vmem:[#allocation5 + $0x70] sm:$0xff]
        %v2555 = vld [vmem:[#allocation5 + $0x78] sm:$0xff]
        %v2556 = vld [vmem:[#allocation5 + $0x80] sm:$0xff]
        %v2557 = vld [vmem:[#allocation5 + $0x88] sm:$0xff]
        %v2558 = vld [vmem:[#allocation5 + $0x90] sm:$0xff]
        %v2559 = vld [vmem:[#allocation5 + $0x98] sm:$0xff]
        %v2560 = vld [vmem:[#allocation5 + $0xa0] sm:$0xff]
        %v2561 = vld [vmem:[#allocation5 + $0xa8] sm:$0xff]
        %v2562 = vld [vmem:[#allocation5 + $0xb0] sm:$0xff]
        %v2563 = vld [vmem:[#allocation5 + $0xb8] sm:$0xff]
        %v2564 = vld [vmem:[#allocation5 + $0xc0] sm:$0xff]
        %v2565 = vld [vmem:[#allocation5 + $0xc8] sm:$0xff]
        %v2566 = vld [vmem:[#allocation5 + $0xd0] sm:$0xff]
        %v2567 = vld [vmem:[#allocation5 + $0xd8] sm:$0xff]
        %v2568 = vld [vmem:[#allocation5 + $0xe0] sm:$0xff]
        %v2569 = vld [vmem:[#allocation5 + $0xe8] sm:$0xff]
        %v2570 = vld [vmem:[#allocation5 + $0xf0] sm:$0xff]
        %v2571 = vld [vmem:[#allocation5 + $0xf8] sm:$0xff]
        %v2572 = vmul.f32 %v2540, %v2221
        %v2573 = vmul.f32 %v2541, %v2223
        %v2574 = vmul.f32 %v2542, %v2225
        %v2575 = vmul.f32 %v2543, %v2227
        %v2576 = vmul.f32 %v2544, %v2229
        %v2577 = vmul.f32 %v2545, %v2231
        %v2578 = vmul.f32 %v2546, %v2233
        %v2579 = vmul.f32 %v2547, %v2235
        %v2580 = vmul.f32 %v2548, %v2237
        %v2581 = vmul.f32 %v2549, %v2239
        %v2582 = vmul.f32 %v2550, %v2241
        %v2583 = vmul.f32 %v2551, %v2243
        %v2584 = vmul.f32 %v2552, %v2245
        %v2585 = vmul.f32 %v2553, %v2247
        %v2586 = vmul.f32 %v2554, %v2249
        %v2587 = vmul.f32 %v2555, %v2251
        %v2588 = vmul.f32 %v2556, %v2253
        %v2589 = vmul.f32 %v2557, %v2255
        %v2590 = vmul.f32 %v2558, %v2257
        %v2591 = vmul.f32 %v2559, %v2259
        %v2592 = vmul.f32 %v2560, %v2261
        %v2593 = vmul.f32 %v2561, %v2263
        %v2594 = vmul.f32 %v2562, %v2265
        %v2595 = vmul.f32 %v2563, %v2267
        %v2596 = vmul.f32 %v2564, %v2269
        %v2597 = vmul.f32 %v2565, %v2271
        %v2598 = vmul.f32 %v2566, %v2273
        %v2599 = vmul.f32 %v2567, %v2275
        %v2600 = vmul.f32 %v2568, %v2277
        %v2601 = vmul.f32 %v2569, %v2279
        %v2602 = vmul.f32 %v2570, %v2281
        %v2603 = vmul.f32 %v2571, %v2283
        %2604 = vadd.xlane.f32.xlu0 %v2477
        %v2605 = vpop.xlane.xlu0 %2604
        %2606 = vadd.xlane.f32.xlu0 %v2479
        %v2607 = vpop.xlane.xlu0 %2606
        %2608 = vadd.xlane.f32.xlu0 %v2481
        %v2609 = vpop.xlane.xlu0 %2608
        %2610 = vadd.xlane.f32.xlu0 %v2483
        %v2611 = vpop.xlane.xlu0 %2610
        %2612 = vadd.xlane.f32.xlu0 %v2485
        %v2613 = vpop.xlane.xlu0 %2612
        %2614 = vadd.xlane.f32.xlu0 %v2487
        %v2615 = vpop.xlane.xlu0 %2614
        %2616 = vadd.xlane.f32.xlu0 %v2489
        %v2617 = vpop.xlane.xlu0 %2616
        %2618 = vadd.xlane.f32.xlu0 %v2491
        %v2619 = vpop.xlane.xlu0 %2618
        %2620 = vadd.xlane.f32.xlu0 %v2493
        %v2621 = vpop.xlane.xlu0 %2620
        %2622 = vadd.xlane.f32.xlu0 %v2495
        %v2623 = vpop.xlane.xlu0 %2622
        %2624 = vadd.xlane.f32.xlu0 %v2497
        %v2625 = vpop.xlane.xlu0 %2624
        %2626 = vadd.xlane.f32.xlu0 %v2499
        %v2627 = vpop.xlane.xlu0 %2626
        %2628 = vadd.xlane.f32.xlu0 %v2501
        %v2629 = vpop.xlane.xlu0 %2628
        %2630 = vadd.xlane.f32.xlu0 %v2503
        %v2631 = vpop.xlane.xlu0 %2630
        %2632 = vadd.xlane.f32.xlu0 %v2505
        %v2633 = vpop.xlane.xlu0 %2632
        %2634 = vadd.xlane.f32.xlu0 %v2507
        %v2635 = vpop.xlane.xlu0 %2634
        %2636 = vadd.xlane.f32.xlu0 %v2509
        %v2637 = vpop.xlane.xlu0 %2636
        %2638 = vadd.xlane.f32.xlu0 %v2511
        %v2639 = vpop.xlane.xlu0 %2638
        %2640 = vadd.xlane.f32.xlu0 %v2513
        %v2641 = vpop.xlane.xlu0 %2640
        %2642 = vadd.xlane.f32.xlu0 %v2515
        %v2643 = vpop.xlane.xlu0 %2642
        %2644 = vadd.xlane.f32.xlu0 %v2517
        %v2645 = vpop.xlane.xlu0 %2644
        %2646 = vadd.xlane.f32.xlu0 %v2519
        %v2647 = vpop.xlane.xlu0 %2646
        %2648 = vadd.xlane.f32.xlu0 %v2521
        %v2649 = vpop.xlane.xlu0 %2648
        %2650 = vadd.xlane.f32.xlu0 %v2523
        %v2651 = vpop.xlane.xlu0 %2650
        %2652 = vadd.xlane.f32.xlu0 %v2525
        %v2653 = vpop.xlane.xlu0 %2652
        %2654 = vadd.xlane.f32.xlu0 %v2527
        %v2655 = vpop.xlane.xlu0 %2654
        %2656 = vadd.xlane.f32.xlu0 %v2529
        %v2657 = vpop.xlane.xlu0 %2656
        %2658 = vadd.xlane.f32.xlu0 %v2531
        %v2659 = vpop.xlane.xlu0 %2658
        %2660 = vadd.xlane.f32.xlu0 %v2533
        %v2661 = vpop.xlane.xlu0 %2660
        %2662 = vadd.xlane.f32.xlu0 %v2535
        %v2663 = vpop.xlane.xlu0 %2662
        %2664 = vadd.xlane.f32.xlu0 %v2537
        %v2665 = vpop.xlane.xlu0 %2664
        %2666 = vadd.xlane.f32.xlu0 %v2539
        %v2667 = vpop.xlane.xlu0 %2666
        %v2668 = vadd.f32 %v2572, %v2605
        %v2669 = vadd.f32 %v2573, %v2607
        %v2670 = vadd.f32 %v2574, %v2609
        %v2671 = vadd.f32 %v2575, %v2611
        %v2672 = vadd.f32 %v2576, %v2613
        %v2673 = vadd.f32 %v2577, %v2615
        %v2674 = vadd.f32 %v2578, %v2617
        %v2675 = vadd.f32 %v2579, %v2619
        %v2676 = vadd.f32 %v2580, %v2621
        %v2677 = vadd.f32 %v2581, %v2623
        %v2678 = vadd.f32 %v2582, %v2625
        %v2679 = vadd.f32 %v2583, %v2627
        %v2680 = vadd.f32 %v2584, %v2629
        %v2681 = vadd.f32 %v2585, %v2631
        %v2682 = vadd.f32 %v2586, %v2633
        %v2683 = vadd.f32 %v2587, %v2635
        %v2684 = vadd.f32 %v2588, %v2637
        %v2685 = vadd.f32 %v2589, %v2639
        %v2686 = vadd.f32 %v2590, %v2641
        %v2687 = vadd.f32 %v2591, %v2643
        %v2688 = vadd.f32 %v2592, %v2645
        %v2689 = vadd.f32 %v2593, %v2647
        %v2690 = vadd.f32 %v2594, %v2649
        %v2691 = vadd.f32 %v2595, %v2651
        %v2692 = vadd.f32 %v2596, %v2653
        %v2693 = vadd.f32 %v2597, %v2655
        %v2694 = vadd.f32 %v2598, %v2657
        %v2695 = vadd.f32 %v2599, %v2659
        %v2696 = vadd.f32 %v2600, %v2661
        %v2697 = vadd.f32 %v2601, %v2663
        %v2698 = vadd.f32 %v2602, %v2665
        %v2699 = vadd.f32 %v2603, %v2667
        %2700 = vst.msk [vmem:[#allocation5] sm:$0xff] %vm1606, %v2668
        %2701 = vst.msk [vmem:[#allocation5 + $0x8] sm:$0xff] %vm1606, %v2669
        %2702 = vst.msk [vmem:[#allocation5 + $0x10] sm:$0xff] %vm1606, %v2670
        %2703 = vst.msk [vmem:[#allocation5 + $0x18] sm:$0xff] %vm1606, %v2671
        %2704 = vst.msk [vmem:[#allocation5 + $0x20] sm:$0xff] %vm1606, %v2672
        %2705 = vst.msk [vmem:[#allocation5 + $0x28] sm:$0xff] %vm1606, %v2673
        %2706 = vst.msk [vmem:[#allocation5 + $0x30] sm:$0xff] %vm1606, %v2674
        %2707 = vst.msk [vmem:[#allocation5 + $0x38] sm:$0xff] %vm1606, %v2675
        %2708 = vst.msk [vmem:[#allocation5 + $0x40] sm:$0xff] %vm1606, %v2676
        %2709 = vst.msk [vmem:[#allocation5 + $0x48] sm:$0xff] %vm1606, %v2677
        %2710 = vst.msk [vmem:[#allocation5 + $0x50] sm:$0xff] %vm1606, %v2678
        %2711 = vst.msk [vmem:[#allocation5 + $0x58] sm:$0xff] %vm1606, %v2679
        %2712 = vst.msk [vmem:[#allocation5 + $0x60] sm:$0xff] %vm1606, %v2680
        %2713 = vst.msk [vmem:[#allocation5 + $0x68] sm:$0xff] %vm1606, %v2681
        %2714 = vst.msk [vmem:[#allocation5 + $0x70] sm:$0xff] %vm1606, %v2682
        %2715 = vst.msk [vmem:[#allocation5 + $0x78] sm:$0xff] %vm1606, %v2683
        %2716 = vst.msk [vmem:[#allocation5 + $0x80] sm:$0xff] %vm1606, %v2684
        %2717 = vst.msk [vmem:[#allocation5 + $0x88] sm:$0xff] %vm1606, %v2685
        %2718 = vst.msk [vmem:[#allocation5 + $0x90] sm:$0xff] %vm1606, %v2686
        %2719 = vst.msk [vmem:[#allocation5 + $0x98] sm:$0xff] %vm1606, %v2687
        %2720 = vst.msk [vmem:[#allocation5 + $0xa0] sm:$0xff] %vm1606, %v2688
        %2721 = vst.msk [vmem:[#allocation5 + $0xa8] sm:$0xff] %vm1606, %v2689
        %2722 = vst.msk [vmem:[#allocation5 + $0xb0] sm:$0xff] %vm1606, %v2690
        %2723 = vst.msk [vmem:[#allocation5 + $0xb8] sm:$0xff] %vm1606, %v2691
        %2724 = vst.msk [vmem:[#allocation5 + $0xc0] sm:$0xff] %vm1606, %v2692
        %2725 = vst.msk [vmem:[#allocation5 + $0xc8] sm:$0xff] %vm1606, %v2693
        %2726 = vst.msk [vmem:[#allocation5 + $0xd0] sm:$0xff] %vm1606, %v2694
        %2727 = vst.msk [vmem:[#allocation5 + $0xd8] sm:$0xff] %vm1606, %v2695
        %2728 = vst.msk [vmem:[#allocation5 + $0xe0] sm:$0xff] %vm1606, %v2696
        %2729 = vst.msk [vmem:[#allocation5 + $0xe8] sm:$0xff] %vm1606, %v2697
        %2730 = vst.msk [vmem:[#allocation5 + $0xf0] sm:$0xff] %vm1606, %v2698
        %2731 = vst.msk [vmem:[#allocation5 + $0xf8] sm:$0xff] %vm1606, %v2699
        %v2732 = vld [vmem:[#allocation6] sm:$0xff]
        %v2733 = vld [vmem:[#allocation6 + $0x8] sm:$0xff]
        %v2734 = vld [vmem:[#allocation6 + $0x10] sm:$0xff]
        %v2735 = vld [vmem:[#allocation6 + $0x18] sm:$0xff]
        %v2736 = vld [vmem:[#allocation6 + $0x20] sm:$0xff]
        %v2737 = vld [vmem:[#allocation6 + $0x28] sm:$0xff]
        %v2738 = vld [vmem:[#allocation6 + $0x30] sm:$0xff]
        %v2739 = vld [vmem:[#allocation6 + $0x38] sm:$0xff]
        %v2740 = vld [vmem:[#allocation6 + $0x40] sm:$0xff]
        %v2741 = vld [vmem:[#allocation6 + $0x48] sm:$0xff]
        %v2742 = vld [vmem:[#allocation6 + $0x50] sm:$0xff]
        %v2743 = vld [vmem:[#allocation6 + $0x58] sm:$0xff]
        %v2744 = vld [vmem:[#allocation6 + $0x60] sm:$0xff]
        %v2745 = vld [vmem:[#allocation6 + $0x68] sm:$0xff]
        %v2746 = vld [vmem:[#allocation6 + $0x70] sm:$0xff]
        %v2747 = vld [vmem:[#allocation6 + $0x78] sm:$0xff]
        %v2748 = vld [vmem:[#allocation6 + $0x80] sm:$0xff]
        %v2749 = vld [vmem:[#allocation6 + $0x88] sm:$0xff]
        %v2750 = vld [vmem:[#allocation6 + $0x90] sm:$0xff]
        %v2751 = vld [vmem:[#allocation6 + $0x98] sm:$0xff]
        %v2752 = vld [vmem:[#allocation6 + $0xa0] sm:$0xff]
        %v2753 = vld [vmem:[#allocation6 + $0xa8] sm:$0xff]
        %v2754 = vld [vmem:[#allocation6 + $0xb0] sm:$0xff]
        %v2755 = vld [vmem:[#allocation6 + $0xb8] sm:$0xff]
        %v2756 = vld [vmem:[#allocation6 + $0xc0] sm:$0xff]
        %v2757 = vld [vmem:[#allocation6 + $0xc8] sm:$0xff]
        %v2758 = vld [vmem:[#allocation6 + $0xd0] sm:$0xff]
        %v2759 = vld [vmem:[#allocation6 + $0xd8] sm:$0xff]
        %v2760 = vld [vmem:[#allocation6 + $0xe0] sm:$0xff]
        %v2761 = vld [vmem:[#allocation6 + $0xe8] sm:$0xff]
        %v2762 = vld [vmem:[#allocation6 + $0xf0] sm:$0xff]
        %v2763 = vld [vmem:[#allocation6 + $0xf8] sm:$0xff]
        %v2764 = vmul.f32 %v2732, %v2221
        %v2765 = vmul.f32 %v2733, %v2223
        %v2766 = vmul.f32 %v2734, %v2225
        %v2767 = vmul.f32 %v2735, %v2227
        %v2768 = vmul.f32 %v2736, %v2229
        %v2769 = vmul.f32 %v2737, %v2231
        %v2770 = vmul.f32 %v2738, %v2233
        %v2771 = vmul.f32 %v2739, %v2235
        %v2772 = vmul.f32 %v2740, %v2237
        %v2773 = vmul.f32 %v2741, %v2239
        %v2774 = vmul.f32 %v2742, %v2241
        %v2775 = vmul.f32 %v2743, %v2243
        %v2776 = vmul.f32 %v2744, %v2245
        %v2777 = vmul.f32 %v2745, %v2247
        %v2778 = vmul.f32 %v2746, %v2249
        %v2779 = vmul.f32 %v2747, %v2251
        %v2780 = vmul.f32 %v2748, %v2253
        %v2781 = vmul.f32 %v2749, %v2255
        %v2782 = vmul.f32 %v2750, %v2257
        %v2783 = vmul.f32 %v2751, %v2259
        %v2784 = vmul.f32 %v2752, %v2261
        %v2785 = vmul.f32 %v2753, %v2263
        %v2786 = vmul.f32 %v2754, %v2265
        %v2787 = vmul.f32 %v2755, %v2267
        %v2788 = vmul.f32 %v2756, %v2269
        %v2789 = vmul.f32 %v2757, %v2271
        %v2790 = vmul.f32 %v2758, %v2273
        %v2791 = vmul.f32 %v2759, %v2275
        %v2792 = vmul.f32 %v2760, %v2277
        %v2793 = vmul.f32 %v2761, %v2279
        %v2794 = vmul.f32 %v2762, %v2281
        %v2795 = vmul.f32 %v2763, %v2283
        %v2796 = vsub.f32 %v778, %v776
        %v2797 = vsub.f32 %v782, %v780
        %v2798 = vsub.f32 %v788, %v786
        %v2799 = vsub.f32 %v792, %v790
        %v2800 = vsub.f32 %v798, %v796
        %v2801 = vsub.f32 %v802, %v800
        %v2802 = vsub.f32 %v808, %v806
        %v2803 = vsub.f32 %v812, %v810
        %v2804 = vsub.f32 %v818, %v816
        %v2805 = vsub.f32 %v822, %v820
        %v2806 = vsub.f32 %v828, %v826
        %v2807 = vsub.f32 %v832, %v830
        %v2808 = vsub.f32 %v838, %v836
        %v2809 = vsub.f32 %v842, %v840
        %v2810 = vsub.f32 %v848, %v846
        %v2811 = vsub.f32 %v852, %v850
        %v2812 = vsub.f32 %v858, %v856
        %v2813 = vsub.f32 %v862, %v860
        %v2814 = vsub.f32 %v868, %v866
        %v2815 = vsub.f32 %v872, %v870
        %v2816 = vsub.f32 %v878, %v876
        %v2817 = vsub.f32 %v882, %v880
        %v2818 = vsub.f32 %v888, %v886
        %v2819 = vsub.f32 %v892, %v890
        %v2820 = vsub.f32 %v898, %v896
        %v2821 = vsub.f32 %v902, %v900
        %v2822 = vsub.f32 %v908, %v906
        %v2823 = vsub.f32 %v912, %v910
        %v2824 = vsub.f32 %v918, %v916
        %v2825 = vsub.f32 %v922, %v920
        %v2826 = vsub.f32 %v928, %v926
        %v2827 = vsub.f32 %v932, %v930
        %v2828 = vmul.f32 %v2477, %v2796
        %v2829 = vmul.f32 %v2479, %v2797
        %v2830 = vmul.f32 %v2481, %v2798
        %v2831 = vmul.f32 %v2483, %v2799
        %v2832 = vmul.f32 %v2485, %v2800
        %v2833 = vmul.f32 %v2487, %v2801
        %v2834 = vmul.f32 %v2489, %v2802
        %v2835 = vmul.f32 %v2491, %v2803
        %v2836 = vmul.f32 %v2493, %v2804
        %v2837 = vmul.f32 %v2495, %v2805
        %v2838 = vmul.f32 %v2497, %v2806
        %v2839 = vmul.f32 %v2499, %v2807
        %v2840 = vmul.f32 %v2501, %v2808
        %v2841 = vmul.f32 %v2503, %v2809
        %v2842 = vmul.f32 %v2505, %v2810
        %v2843 = vmul.f32 %v2507, %v2811
        %v2844 = vmul.f32 %v2509, %v2812
        %v2845 = vmul.f32 %v2511, %v2813
        %v2846 = vmul.f32 %v2513, %v2814
        %v2847 = vmul.f32 %v2515, %v2815
        %v2848 = vmul.f32 %v2517, %v2816
        %v2849 = vmul.f32 %v2519, %v2817
        %v2850 = vmul.f32 %v2521, %v2818
        %v2851 = vmul.f32 %v2523, %v2819
        %v2852 = vmul.f32 %v2525, %v2820
        %v2853 = vmul.f32 %v2527, %v2821
        %v2854 = vmul.f32 %v2529, %v2822
        %v2855 = vmul.f32 %v2531, %v2823
        %v2856 = vmul.f32 %v2533, %v2824
        %v2857 = vmul.f32 %v2535, %v2825
        %v2858 = vmul.f32 %v2537, %v2826
        %v2859 = vmul.f32 %v2539, %v2827
        %2860 = vadd.xlane.f32.xlu0 %v2828
        %v2861 = vpop.xlane.xlu0 %2860
        %2862 = vadd.xlane.f32.xlu0 %v2829
        %v2863 = vpop.xlane.xlu0 %2862
        %2864 = vadd.xlane.f32.xlu0 %v2830
        %v2865 = vpop.xlane.xlu0 %2864
        %2866 = vadd.xlane.f32.xlu0 %v2831
        %v2867 = vpop.xlane.xlu0 %2866
        %2868 = vadd.xlane.f32.xlu0 %v2832
        %v2869 = vpop.xlane.xlu0 %2868
        %2870 = vadd.xlane.f32.xlu0 %v2833
        %v2871 = vpop.xlane.xlu0 %2870
        %2872 = vadd.xlane.f32.xlu0 %v2834
        %v2873 = vpop.xlane.xlu0 %2872
        %2874 = vadd.xlane.f32.xlu0 %v2835
        %v2875 = vpop.xlane.xlu0 %2874
        %2876 = vadd.xlane.f32.xlu0 %v2836
        %v2877 = vpop.xlane.xlu0 %2876
        %2878 = vadd.xlane.f32.xlu0 %v2837
        %v2879 = vpop.xlane.xlu0 %2878
        %2880 = vadd.xlane.f32.xlu0 %v2838
        %v2881 = vpop.xlane.xlu0 %2880
        %2882 = vadd.xlane.f32.xlu0 %v2839
        %v2883 = vpop.xlane.xlu0 %2882
        %2884 = vadd.xlane.f32.xlu0 %v2840
        %v2885 = vpop.xlane.xlu0 %2884
        %2886 = vadd.xlane.f32.xlu0 %v2841
        %v2887 = vpop.xlane.xlu0 %2886
        %2888 = vadd.xlane.f32.xlu0 %v2842
        %v2889 = vpop.xlane.xlu0 %2888
        %2890 = vadd.xlane.f32.xlu0 %v2843
        %v2891 = vpop.xlane.xlu0 %2890
        %2892 = vadd.xlane.f32.xlu0 %v2844
        %v2893 = vpop.xlane.xlu0 %2892
        %2894 = vadd.xlane.f32.xlu0 %v2845
        %v2895 = vpop.xlane.xlu0 %2894
        %2896 = vadd.xlane.f32.xlu0 %v2846
        %v2897 = vpop.xlane.xlu0 %2896
        %2898 = vadd.xlane.f32.xlu0 %v2847
        %v2899 = vpop.xlane.xlu0 %2898
        %2900 = vadd.xlane.f32.xlu0 %v2848
        %v2901 = vpop.xlane.xlu0 %2900
        %2902 = vadd.xlane.f32.xlu0 %v2849
        %v2903 = vpop.xlane.xlu0 %2902
        %2904 = vadd.xlane.f32.xlu0 %v2850
        %v2905 = vpop.xlane.xlu0 %2904
        %2906 = vadd.xlane.f32.xlu0 %v2851
        %v2907 = vpop.xlane.xlu0 %2906
        %2908 = vadd.xlane.f32.xlu0 %v2852
        %v2909 = vpop.xlane.xlu0 %2908
        %2910 = vadd.xlane.f32.xlu0 %v2853
        %v2911 = vpop.xlane.xlu0 %2910
        %2912 = vadd.xlane.f32.xlu0 %v2854
        %v2913 = vpop.xlane.xlu0 %2912
        %2914 = vadd.xlane.f32.xlu0 %v2855
        %v2915 = vpop.xlane.xlu0 %2914
        %2916 = vadd.xlane.f32.xlu0 %v2856
        %v2917 = vpop.xlane.xlu0 %2916
        %2918 = vadd.xlane.f32.xlu0 %v2857
        %v2919 = vpop.xlane.xlu0 %2918
        %2920 = vadd.xlane.f32.xlu0 %v2858
        %v2921 = vpop.xlane.xlu0 %2920
        %2922 = vadd.xlane.f32.xlu0 %v2859
        %v2923 = vpop.xlane.xlu0 %2922
        %v2924 = vadd.f32 %v2764, %v2861
        %v2925 = vadd.f32 %v2765, %v2863
        %v2926 = vadd.f32 %v2766, %v2865
        %v2927 = vadd.f32 %v2767, %v2867
        %v2928 = vadd.f32 %v2768, %v2869
        %v2929 = vadd.f32 %v2769, %v2871
        %v2930 = vadd.f32 %v2770, %v2873
        %v2931 = vadd.f32 %v2771, %v2875
        %v2932 = vadd.f32 %v2772, %v2877
        %v2933 = vadd.f32 %v2773, %v2879
        %v2934 = vadd.f32 %v2774, %v2881
        %v2935 = vadd.f32 %v2775, %v2883
        %v2936 = vadd.f32 %v2776, %v2885
        %v2937 = vadd.f32 %v2777, %v2887
        %v2938 = vadd.f32 %v2778, %v2889
        %v2939 = vadd.f32 %v2779, %v2891
        %v2940 = vadd.f32 %v2780, %v2893
        %v2941 = vadd.f32 %v2781, %v2895
        %v2942 = vadd.f32 %v2782, %v2897
        %v2943 = vadd.f32 %v2783, %v2899
        %v2944 = vadd.f32 %v2784, %v2901
        %v2945 = vadd.f32 %v2785, %v2903
        %v2946 = vadd.f32 %v2786, %v2905
        %v2947 = vadd.f32 %v2787, %v2907
        %v2948 = vadd.f32 %v2788, %v2909
        %v2949 = vadd.f32 %v2789, %v2911
        %v2950 = vadd.f32 %v2790, %v2913
        %v2951 = vadd.f32 %v2791, %v2915
        %v2952 = vadd.f32 %v2792, %v2917
        %v2953 = vadd.f32 %v2793, %v2919
        %v2954 = vadd.f32 %v2794, %v2921
        %v2955 = vadd.f32 %v2795, %v2923
        %2956 = vst.msk [vmem:[#allocation6] sm:$0xff] %vm1606, %v2924
        %2957 = vst.msk [vmem:[#allocation6 + $0x8] sm:$0xff] %vm1606, %v2925
        %2958 = vst.msk [vmem:[#allocation6 + $0x10] sm:$0xff] %vm1606, %v2926
        %2959 = vst.msk [vmem:[#allocation6 + $0x18] sm:$0xff] %vm1606, %v2927
        %2960 = vst.msk [vmem:[#allocation6 + $0x20] sm:$0xff] %vm1606, %v2928
        %2961 = vst.msk [vmem:[#allocation6 + $0x28] sm:$0xff] %vm1606, %v2929
        %2962 = vst.msk [vmem:[#allocation6 + $0x30] sm:$0xff] %vm1606, %v2930
        %2963 = vst.msk [vmem:[#allocation6 + $0x38] sm:$0xff] %vm1606, %v2931
        %2964 = vst.msk [vmem:[#allocation6 + $0x40] sm:$0xff] %vm1606, %v2932
        %2965 = vst.msk [vmem:[#allocation6 + $0x48] sm:$0xff] %vm1606, %v2933
        %2966 = vst.msk [vmem:[#allocation6 + $0x50] sm:$0xff] %vm1606, %v2934
        %2967 = vst.msk [vmem:[#allocation6 + $0x58] sm:$0xff] %vm1606, %v2935
        %2968 = vst.msk [vmem:[#allocation6 + $0x60] sm:$0xff] %vm1606, %v2936
        %2969 = vst.msk [vmem:[#allocation6 + $0x68] sm:$0xff] %vm1606, %v2937
        %2970 = vst.msk [vmem:[#allocation6 + $0x70] sm:$0xff] %vm1606, %v2938
        %2971 = vst.msk [vmem:[#allocation6 + $0x78] sm:$0xff] %vm1606, %v2939
        %2972 = vst.msk [vmem:[#allocation6 + $0x80] sm:$0xff] %vm1606, %v2940
        %2973 = vst.msk [vmem:[#allocation6 + $0x88] sm:$0xff] %vm1606, %v2941
        %2974 = vst.msk [vmem:[#allocation6 + $0x90] sm:$0xff] %vm1606, %v2942
        %2975 = vst.msk [vmem:[#allocation6 + $0x98] sm:$0xff] %vm1606, %v2943
        %2976 = vst.msk [vmem:[#allocation6 + $0xa0] sm:$0xff] %vm1606, %v2944
        %2977 = vst.msk [vmem:[#allocation6 + $0xa8] sm:$0xff] %vm1606, %v2945
        %2978 = vst.msk [vmem:[#allocation6 + $0xb0] sm:$0xff] %vm1606, %v2946
        %2979 = vst.msk [vmem:[#allocation6 + $0xb8] sm:$0xff] %vm1606, %v2947
        %2980 = vst.msk [vmem:[#allocation6 + $0xc0] sm:$0xff] %vm1606, %v2948
        %2981 = vst.msk [vmem:[#allocation6 + $0xc8] sm:$0xff] %vm1606, %v2949
        %2982 = vst.msk [vmem:[#allocation6 + $0xd0] sm:$0xff] %vm1606, %v2950
        %2983 = vst.msk [vmem:[#allocation6 + $0xd8] sm:$0xff] %vm1606, %v2951
        %2984 = vst.msk [vmem:[#allocation6 + $0xe0] sm:$0xff] %vm1606, %v2952
        %2985 = vst.msk [vmem:[#allocation6 + $0xe8] sm:$0xff] %vm1606, %v2953
        %2986 = vst.msk [vmem:[#allocation6 + $0xf0] sm:$0xff] %vm1606, %v2954
        %2987 = vst.msk [vmem:[#allocation6 + $0xf8] sm:$0xff] %vm1606, %v2955
        %2988 = vst.msk [vmem:[#allocation4] sm:$0xff] %vm1606, %v2156
        %2989 = vst.msk [vmem:[#allocation4 + $0x8] sm:$0xff] %vm1606, %v2157
        %2990 = vst.msk [vmem:[#allocation4 + $0x10] sm:$0xff] %vm1606, %v2158
        %2991 = vst.msk [vmem:[#allocation4 + $0x18] sm:$0xff] %vm1606, %v2159
        %2992 = vst.msk [vmem:[#allocation4 + $0x20] sm:$0xff] %vm1606, %v2160
        %2993 = vst.msk [vmem:[#allocation4 + $0x28] sm:$0xff] %vm1606, %v2161
        %2994 = vst.msk [vmem:[#allocation4 + $0x30] sm:$0xff] %vm1606, %v2162
        %2995 = vst.msk [vmem:[#allocation4 + $0x38] sm:$0xff] %vm1606, %v2163
        %2996 = vst.msk [vmem:[#allocation4 + $0x40] sm:$0xff] %vm1606, %v2164
        %2997 = vst.msk [vmem:[#allocation4 + $0x48] sm:$0xff] %vm1606, %v2165
        %2998 = vst.msk [vmem:[#allocation4 + $0x50] sm:$0xff] %vm1606, %v2166
        %2999 = vst.msk [vmem:[#allocation4 + $0x58] sm:$0xff] %vm1606, %v2167
        %3000 = vst.msk [vmem:[#allocation4 + $0x60] sm:$0xff] %vm1606, %v2168
        %3001 = vst.msk [vmem:[#allocation4 + $0x68] sm:$0xff] %vm1606, %v2169
        %3002 = vst.msk [vmem:[#allocation4 + $0x70] sm:$0xff] %vm1606, %v2170
        %3003 = vst.msk [vmem:[#allocation4 + $0x78] sm:$0xff] %vm1606, %v2171
        %3004 = vst.msk [vmem:[#allocation4 + $0x80] sm:$0xff] %vm1606, %v2172
        %3005 = vst.msk [vmem:[#allocation4 + $0x88] sm:$0xff] %vm1606, %v2173
        %3006 = vst.msk [vmem:[#allocation4 + $0x90] sm:$0xff] %vm1606, %v2174
        %3007 = vst.msk [vmem:[#allocation4 + $0x98] sm:$0xff] %vm1606, %v2175
        %3008 = vst.msk [vmem:[#allocation4 + $0xa0] sm:$0xff] %vm1606, %v2176
        %3009 = vst.msk [vmem:[#allocation4 + $0xa8] sm:$0xff] %vm1606, %v2177
        %3010 = vst.msk [vmem:[#allocation4 + $0xb0] sm:$0xff] %vm1606, %v2178
        %3011 = vst.msk [vmem:[#allocation4 + $0xb8] sm:$0xff] %vm1606, %v2179
        %3012 = vst.msk [vmem:[#allocation4 + $0xc0] sm:$0xff] %vm1606, %v2180
        %3013 = vst.msk [vmem:[#allocation4 + $0xc8] sm:$0xff] %vm1606, %v2181
        %3014 = vst.msk [vmem:[#allocation4 + $0xd0] sm:$0xff] %vm1606, %v2182
        %3015 = vst.msk [vmem:[#allocation4 + $0xd8] sm:$0xff] %vm1606, %v2183
        %3016 = vst.msk [vmem:[#allocation4 + $0xe0] sm:$0xff] %vm1606, %v2184
        %3017 = vst.msk [vmem:[#allocation4 + $0xe8] sm:$0xff] %vm1606, %v2185
        %3018 = vst.msk [vmem:[#allocation4 + $0xf0] sm:$0xff] %vm1606, %v2186
        %3019 = vst.msk [vmem:[#allocation4 + $0xf8] sm:$0xff] %vm1606, %v2187
        %p3020 = scmp.eq.s32.totalorder %s21, 1
        // Predicated region
        $region75: #{tpu_custom_call.1} parent=65 // pred_check
          %p3021 = pneg %p3020
        $region76: #{tpu_custom_call.1} parent=65 // pred_check_branch
          %3023 = sbr.rel (%p3021) target = $region78
        $region77: #{tpu_custom_call.1} parent=65 // pred_region
          %v3024 = vld [vmem:[#allocation2] sm:$0xff]
          %v3025 = vld [vmem:[#allocation2 + $0x8] sm:$0xff]
          %v3026 = vld [vmem:[#allocation2 + $0x10] sm:$0xff]
          %v3027 = vld [vmem:[#allocation2 + $0x18] sm:$0xff]
          %v3028 = vld [vmem:[#allocation2 + $0x20] sm:$0xff]
          %v3029 = vld [vmem:[#allocation2 + $0x28] sm:$0xff]
          %v3030 = vld [vmem:[#allocation2 + $0x30] sm:$0xff]
          %v3031 = vld [vmem:[#allocation2 + $0x38] sm:$0xff]
          %v3032 = vld [vmem:[#allocation2 + $0x40] sm:$0xff]
          %v3033 = vld [vmem:[#allocation2 + $0x48] sm:$0xff]
          %v3034 = vld [vmem:[#allocation2 + $0x50] sm:$0xff]
          %v3035 = vld [vmem:[#allocation2 + $0x58] sm:$0xff]
          %v3036 = vld [vmem:[#allocation2 + $0x60] sm:$0xff]
          %v3037 = vld [vmem:[#allocation2 + $0x68] sm:$0xff]
          %v3038 = vld [vmem:[#allocation2 + $0x70] sm:$0xff]
          %v3039 = vld [vmem:[#allocation2 + $0x78] sm:$0xff]
          %v3040 = vld [vmem:[#allocation2 + $0x80] sm:$0xff]
          %v3041 = vld [vmem:[#allocation2 + $0x88] sm:$0xff]
          %v3042 = vld [vmem:[#allocation2 + $0x90] sm:$0xff]
          %v3043 = vld [vmem:[#allocation2 + $0x98] sm:$0xff]
          %v3044 = vld [vmem:[#allocation2 + $0xa0] sm:$0xff]
          %v3045 = vld [vmem:[#allocation2 + $0xa8] sm:$0xff]
          %v3046 = vld [vmem:[#allocation2 + $0xb0] sm:$0xff]
          %v3047 = vld [vmem:[#allocation2 + $0xb8] sm:$0xff]
          %v3048 = vld [vmem:[#allocation2 + $0xc0] sm:$0xff]
          %v3049 = vld [vmem:[#allocation2 + $0xc8] sm:$0xff]
          %v3050 = vld [vmem:[#allocation2 + $0xd0] sm:$0xff]
          %v3051 = vld [vmem:[#allocation2 + $0xd8] sm:$0xff]
          %v3052 = vld [vmem:[#allocation2 + $0xe0] sm:$0xff]
          %v3053 = vld [vmem:[#allocation2 + $0xe8] sm:$0xff]
          %v3054 = vld [vmem:[#allocation2 + $0xf0] sm:$0xff]
          %v3055 = vld [vmem:[#allocation2 + $0xf8] sm:$0xff]
          %v3056 = vld [vmem:[#allocation3] sm:$0xff]
          %v3057 = vld [vmem:[#allocation3 + $0x8] sm:$0xff]
          %v3058 = vld [vmem:[#allocation3 + $0x10] sm:$0xff]
          %v3059 = vld [vmem:[#allocation3 + $0x18] sm:$0xff]
          %v3060 = vld [vmem:[#allocation3 + $0x20] sm:$0xff]
          %v3061 = vld [vmem:[#allocation3 + $0x28] sm:$0xff]
          %v3062 = vld [vmem:[#allocation3 + $0x30] sm:$0xff]
          %v3063 = vld [vmem:[#allocation3 + $0x38] sm:$0xff]
          %v3064 = vld [vmem:[#allocation3 + $0x40] sm:$0xff]
          %v3065 = vld [vmem:[#allocation3 + $0x48] sm:$0xff]
          %v3066 = vld [vmem:[#allocation3 + $0x50] sm:$0xff]
          %v3067 = vld [vmem:[#allocation3 + $0x58] sm:$0xff]
          %v3068 = vld [vmem:[#allocation3 + $0x60] sm:$0xff]
          %v3069 = vld [vmem:[#allocation3 + $0x68] sm:$0xff]
          %v3070 = vld [vmem:[#allocation3 + $0x70] sm:$0xff]
          %v3071 = vld [vmem:[#allocation3 + $0x78] sm:$0xff]
          %v3072 = vld [vmem:[#allocation3 + $0x80] sm:$0xff]
          %v3073 = vld [vmem:[#allocation3 + $0x88] sm:$0xff]
          %v3074 = vld [vmem:[#allocation3 + $0x90] sm:$0xff]
          %v3075 = vld [vmem:[#allocation3 + $0x98] sm:$0xff]
          %v3076 = vld [vmem:[#allocation3 + $0xa0] sm:$0xff]
          %v3077 = vld [vmem:[#allocation3 + $0xa8] sm:$0xff]
          %v3078 = vld [vmem:[#allocation3 + $0xb0] sm:$0xff]
          %v3079 = vld [vmem:[#allocation3 + $0xb8] sm:$0xff]
          %v3080 = vld [vmem:[#allocation3 + $0xc0] sm:$0xff]
          %v3081 = vld [vmem:[#allocation3 + $0xc8] sm:$0xff]
          %v3082 = vld [vmem:[#allocation3 + $0xd0] sm:$0xff]
          %v3083 = vld [vmem:[#allocation3 + $0xd8] sm:$0xff]
          %v3084 = vld [vmem:[#allocation3 + $0xe0] sm:$0xff]
          %v3085 = vld [vmem:[#allocation3 + $0xe8] sm:$0xff]
          %v3086 = vld [vmem:[#allocation3 + $0xf0] sm:$0xff]
          %v3087 = vld [vmem:[#allocation3 + $0xf8] sm:$0xff]
          %v3088 = vlog2.pop %v3056
          %v3089 = vmul.f32 %v3088, 0.6931472
          %v3090 = vlog2.pop %v3057
          %v3091 = vmul.f32 %v3090, 0.6931472
          %v3092 = vlog2.pop %v3058
          %v3093 = vmul.f32 %v3092, 0.6931472
          %v3094 = vlog2.pop %v3059
          %v3095 = vmul.f32 %v3094, 0.6931472
          %v3096 = vlog2.pop %v3060
          %v3097 = vmul.f32 %v3096, 0.6931472
          %v3098 = vlog2.pop %v3061
          %v3099 = vmul.f32 %v3098, 0.6931472
          %v3100 = vlog2.pop %v3062
          %v3101 = vmul.f32 %v3100, 0.6931472
          %v3102 = vlog2.pop %v3063
          %v3103 = vmul.f32 %v3102, 0.6931472
          %v3104 = vlog2.pop %v3064
          %v3105 = vmul.f32 %v3104, 0.6931472
          %v3106 = vlog2.pop %v3065
          %v3107 = vmul.f32 %v3106, 0.6931472
          %v3108 = vlog2.pop %v3066
          %v3109 = vmul.f32 %v3108, 0.6931472
          %v3110 = vlog2.pop %v3067
          %v3111 = vmul.f32 %v3110, 0.6931472
          %v3112 = vlog2.pop %v3068
          %v3113 = vmul.f32 %v3112, 0.6931472
          %v3114 = vlog2.pop %v3069
          %v3115 = vmul.f32 %v3114, 0.6931472
          %v3116 = vlog2.pop %v3070
          %v3117 = vmul.f32 %v3116, 0.6931472
          %v3118 = vlog2.pop %v3071
          %v3119 = vmul.f32 %v3118, 0.6931472
          %v3120 = vlog2.pop %v3072
          %v3121 = vmul.f32 %v3120, 0.6931472
          %v3122 = vlog2.pop %v3073
          %v3123 = vmul.f32 %v3122, 0.6931472
          %v3124 = vlog2.pop %v3074
          %v3125 = vmul.f32 %v3124, 0.6931472
          %v3126 = vlog2.pop %v3075
          %v3127 = vmul.f32 %v3126, 0.6931472
          %v3128 = vlog2.pop %v3076
          %v3129 = vmul.f32 %v3128, 0.6931472
          %v3130 = vlog2.pop %v3077
          %v3131 = vmul.f32 %v3130, 0.6931472
          %v3132 = vlog2.pop %v3078
          %v3133 = vmul.f32 %v3132, 0.6931472
          %v3134 = vlog2.pop %v3079
          %v3135 = vmul.f32 %v3134, 0.6931472
          %v3136 = vlog2.pop %v3080
          %v3137 = vmul.f32 %v3136, 0.6931472
          %v3138 = vlog2.pop %v3081
          %v3139 = vmul.f32 %v3138, 0.6931472
          %v3140 = vlog2.pop %v3082
          %v3141 = vmul.f32 %v3140, 0.6931472
          %v3142 = vlog2.pop %v3083
          %v3143 = vmul.f32 %v3142, 0.6931472
          %v3144 = vlog2.pop %v3084
          %v3145 = vmul.f32 %v3144, 0.6931472
          %v3146 = vlog2.pop %v3085
          %v3147 = vmul.f32 %v3146, 0.6931472
          %v3148 = vlog2.pop %v3086
          %v3149 = vmul.f32 %v3148, 0.6931472
          %v3150 = vlog2.pop %v3087
          %v3151 = vmul.f32 %v3150, 0.6931472
          %v3152 = vadd.f32 %v3024, %v3089
          %v3153 = vadd.f32 %v3025, %v3091
          %v3154 = vadd.f32 %v3026, %v3093
          %v3155 = vadd.f32 %v3027, %v3095
          %v3156 = vadd.f32 %v3028, %v3097
          %v3157 = vadd.f32 %v3029, %v3099
          %v3158 = vadd.f32 %v3030, %v3101
          %v3159 = vadd.f32 %v3031, %v3103
          %v3160 = vadd.f32 %v3032, %v3105
          %v3161 = vadd.f32 %v3033, %v3107
          %v3162 = vadd.f32 %v3034, %v3109
          %v3163 = vadd.f32 %v3035, %v3111
          %v3164 = vadd.f32 %v3036, %v3113
          %v3165 = vadd.f32 %v3037, %v3115
          %v3166 = vadd.f32 %v3038, %v3117
          %v3167 = vadd.f32 %v3039, %v3119
          %v3168 = vadd.f32 %v3040, %v3121
          %v3169 = vadd.f32 %v3041, %v3123
          %v3170 = vadd.f32 %v3042, %v3125
          %v3171 = vadd.f32 %v3043, %v3127
          %v3172 = vadd.f32 %v3044, %v3129
          %v3173 = vadd.f32 %v3045, %v3131
          %v3174 = vadd.f32 %v3046, %v3133
          %v3175 = vadd.f32 %v3047, %v3135
          %v3176 = vadd.f32 %v3048, %v3137
          %v3177 = vadd.f32 %v3049, %v3139
          %v3178 = vadd.f32 %v3050, %v3141
          %v3179 = vadd.f32 %v3051, %v3143
          %v3180 = vadd.f32 %v3052, %v3145
          %v3181 = vadd.f32 %v3053, %v3147
          %v3182 = vadd.f32 %v3054, %v3149
          %v3183 = vadd.f32 %v3055, %v3151
          %v3184 = vld [vmem:[#allocation4] sm:$0xff]
          %v3185 = vld [vmem:[#allocation4 + $0x8] sm:$0xff]
          %v3186 = vld [vmem:[#allocation4 + $0x10] sm:$0xff]
          %v3187 = vld [vmem:[#allocation4 + $0x18] sm:$0xff]
          %v3188 = vld [vmem:[#allocation4 + $0x20] sm:$0xff]
          %v3189 = vld [vmem:[#allocation4 + $0x28] sm:$0xff]
          %v3190 = vld [vmem:[#allocation4 + $0x30] sm:$0xff]
          %v3191 = vld [vmem:[#allocation4 + $0x38] sm:$0xff]
          %v3192 = vld [vmem:[#allocation4 + $0x40] sm:$0xff]
          %v3193 = vld [vmem:[#allocation4 + $0x48] sm:$0xff]
          %v3194 = vld [vmem:[#allocation4 + $0x50] sm:$0xff]
          %v3195 = vld [vmem:[#allocation4 + $0x58] sm:$0xff]
          %v3196 = vld [vmem:[#allocation4 + $0x60] sm:$0xff]
          %v3197 = vld [vmem:[#allocation4 + $0x68] sm:$0xff]
          %v3198 = vld [vmem:[#allocation4 + $0x70] sm:$0xff]
          %v3199 = vld [vmem:[#allocation4 + $0x78] sm:$0xff]
          %v3200 = vld [vmem:[#allocation4 + $0x80] sm:$0xff]
          %v3201 = vld [vmem:[#allocation4 + $0x88] sm:$0xff]
          %v3202 = vld [vmem:[#allocation4 + $0x90] sm:$0xff]
          %v3203 = vld [vmem:[#allocation4 + $0x98] sm:$0xff]
          %v3204 = vld [vmem:[#allocation4 + $0xa0] sm:$0xff]
          %v3205 = vld [vmem:[#allocation4 + $0xa8] sm:$0xff]
          %v3206 = vld [vmem:[#allocation4 + $0xb0] sm:$0xff]
          %v3207 = vld [vmem:[#allocation4 + $0xb8] sm:$0xff]
          %v3208 = vld [vmem:[#allocation4 + $0xc0] sm:$0xff]
          %v3209 = vld [vmem:[#allocation4 + $0xc8] sm:$0xff]
          %v3210 = vld [vmem:[#allocation4 + $0xd0] sm:$0xff]
          %v3211 = vld [vmem:[#allocation4 + $0xd8] sm:$0xff]
          %v3212 = vld [vmem:[#allocation4 + $0xe0] sm:$0xff]
          %v3213 = vld [vmem:[#allocation4 + $0xe8] sm:$0xff]
          %v3214 = vld [vmem:[#allocation4 + $0xf0] sm:$0xff]
          %v3215 = vld [vmem:[#allocation4 + $0xf8] sm:$0xff]
          %v3216 = vld [vmem:[#allocation5] sm:$0xff]
          %v3217 = vld [vmem:[#allocation5 + $0x8] sm:$0xff]
          %v3218 = vld [vmem:[#allocation5 + $0x10] sm:$0xff]
          %v3219 = vld [vmem:[#allocation5 + $0x18] sm:$0xff]
          %v3220 = vld [vmem:[#allocation5 + $0x20] sm:$0xff]
          %v3221 = vld [vmem:[#allocation5 + $0x28] sm:$0xff]
          %v3222 = vld [vmem:[#allocation5 + $0x30] sm:$0xff]
          %v3223 = vld [vmem:[#allocation5 + $0x38] sm:$0xff]
          %v3224 = vld [vmem:[#allocation5 + $0x40] sm:$0xff]
          %v3225 = vld [vmem:[#allocation5 + $0x48] sm:$0xff]
          %v3226 = vld [vmem:[#allocation5 + $0x50] sm:$0xff]
          %v3227 = vld [vmem:[#allocation5 + $0x58] sm:$0xff]
          %v3228 = vld [vmem:[#allocation5 + $0x60] sm:$0xff]
          %v3229 = vld [vmem:[#allocation5 + $0x68] sm:$0xff]
          %v3230 = vld [vmem:[#allocation5 + $0x70] sm:$0xff]
          %v3231 = vld [vmem:[#allocation5 + $0x78] sm:$0xff]
          %v3232 = vld [vmem:[#allocation5 + $0x80] sm:$0xff]
          %v3233 = vld [vmem:[#allocation5 + $0x88] sm:$0xff]
          %v3234 = vld [vmem:[#allocation5 + $0x90] sm:$0xff]
          %v3235 = vld [vmem:[#allocation5 + $0x98] sm:$0xff]
          %v3236 = vld [vmem:[#allocation5 + $0xa0] sm:$0xff]
          %v3237 = vld [vmem:[#allocation5 + $0xa8] sm:$0xff]
          %v3238 = vld [vmem:[#allocation5 + $0xb0] sm:$0xff]
          %v3239 = vld [vmem:[#allocation5 + $0xb8] sm:$0xff]
          %v3240 = vld [vmem:[#allocation5 + $0xc0] sm:$0xff]
          %v3241 = vld [vmem:[#allocation5 + $0xc8] sm:$0xff]
          %v3242 = vld [vmem:[#allocation5 + $0xd0] sm:$0xff]
          %v3243 = vld [vmem:[#allocation5 + $0xd8] sm:$0xff]
          %v3244 = vld [vmem:[#allocation5 + $0xe0] sm:$0xff]
          %v3245 = vld [vmem:[#allocation5 + $0xe8] sm:$0xff]
          %v3246 = vld [vmem:[#allocation5 + $0xf0] sm:$0xff]
          %v3247 = vld [vmem:[#allocation5 + $0xf8] sm:$0xff]
          %v3248 = vlog2.pop %v3216
          %v3249 = vmul.f32 %v3248, 0.6931472
          %v3250 = vlog2.pop %v3217
          %v3251 = vmul.f32 %v3250, 0.6931472
          %v3252 = vlog2.pop %v3218
          %v3253 = vmul.f32 %v3252, 0.6931472
          %v3254 = vlog2.pop %v3219
          %v3255 = vmul.f32 %v3254, 0.6931472
          %v3256 = vlog2.pop %v3220
          %v3257 = vmul.f32 %v3256, 0.6931472
          %v3258 = vlog2.pop %v3221
          %v3259 = vmul.f32 %v3258, 0.6931472
          %v3260 = vlog2.pop %v3222
          %v3261 = vmul.f32 %v3260, 0.6931472
          %v3262 = vlog2.pop %v3223
          %v3263 = vmul.f32 %v3262, 0.6931472
          %v3264 = vlog2.pop %v3224
          %v3265 = vmul.f32 %v3264, 0.6931472
          %v3266 = vlog2.pop %v3225
          %v3267 = vmul.f32 %v3266, 0.6931472
          %v3268 = vlog2.pop %v3226
          %v3269 = vmul.f32 %v3268, 0.6931472
          %v3270 = vlog2.pop %v3227
          %v3271 = vmul.f32 %v3270, 0.6931472
          %v3272 = vlog2.pop %v3228
          %v3273 = vmul.f32 %v3272, 0.6931472
          %v3274 = vlog2.pop %v3229
          %v3275 = vmul.f32 %v3274, 0.6931472
          %v3276 = vlog2.pop %v3230
          %v3277 = vmul.f32 %v3276, 0.6931472
          %v3278 = vlog2.pop %v3231
          %v3279 = vmul.f32 %v3278, 0.6931472
          %v3280 = vlog2.pop %v3232
          %v3281 = vmul.f32 %v3280, 0.6931472
          %v3282 = vlog2.pop %v3233
          %v3283 = vmul.f32 %v3282, 0.6931472
          %v3284 = vlog2.pop %v3234
          %v3285 = vmul.f32 %v3284, 0.6931472
          %v3286 = vlog2.pop %v3235
          %v3287 = vmul.f32 %v3286, 0.6931472
          %v3288 = vlog2.pop %v3236
          %v3289 = vmul.f32 %v3288, 0.6931472
          %v3290 = vlog2.pop %v3237
          %v3291 = vmul.f32 %v3290, 0.6931472
          %v3292 = vlog2.pop %v3238
          %v3293 = vmul.f32 %v3292, 0.6931472
          %v3294 = vlog2.pop %v3239
          %v3295 = vmul.f32 %v3294, 0.6931472
          %v3296 = vlog2.pop %v3240
          %v3297 = vmul.f32 %v3296, 0.6931472
          %v3298 = vlog2.pop %v3241
          %v3299 = vmul.f32 %v3298, 0.6931472
          %v3300 = vlog2.pop %v3242
          %v3301 = vmul.f32 %v3300, 0.6931472
          %v3302 = vlog2.pop %v3243
          %v3303 = vmul.f32 %v3302, 0.6931472
          %v3304 = vlog2.pop %v3244
          %v3305 = vmul.f32 %v3304, 0.6931472
          %v3306 = vlog2.pop %v3245
          %v3307 = vmul.f32 %v3306, 0.6931472
          %v3308 = vlog2.pop %v3246
          %v3309 = vmul.f32 %v3308, 0.6931472
          %v3310 = vlog2.pop %v3247
          %v3311 = vmul.f32 %v3310, 0.6931472
          %v3312 = vadd.f32 %v3184, %v3249
          %v3313 = vadd.f32 %v3185, %v3251
          %v3314 = vadd.f32 %v3186, %v3253
          %v3315 = vadd.f32 %v3187, %v3255
          %v3316 = vadd.f32 %v3188, %v3257
          %v3317 = vadd.f32 %v3189, %v3259
          %v3318 = vadd.f32 %v3190, %v3261
          %v3319 = vadd.f32 %v3191, %v3263
          %v3320 = vadd.f32 %v3192, %v3265
          %v3321 = vadd.f32 %v3193, %v3267
          %v3322 = vadd.f32 %v3194, %v3269
          %v3323 = vadd.f32 %v3195, %v3271
          %v3324 = vadd.f32 %v3196, %v3273
          %v3325 = vadd.f32 %v3197, %v3275
          %v3326 = vadd.f32 %v3198, %v3277
          %v3327 = vadd.f32 %v3199, %v3279
          %v3328 = vadd.f32 %v3200, %v3281
          %v3329 = vadd.f32 %v3201, %v3283
          %v3330 = vadd.f32 %v3202, %v3285
          %v3331 = vadd.f32 %v3203, %v3287
          %v3332 = vadd.f32 %v3204, %v3289
          %v3333 = vadd.f32 %v3205, %v3291
          %v3334 = vadd.f32 %v3206, %v3293
          %v3335 = vadd.f32 %v3207, %v3295
          %v3336 = vadd.f32 %v3208, %v3297
          %v3337 = vadd.f32 %v3209, %v3299
          %v3338 = vadd.f32 %v3210, %v3301
          %v3339 = vadd.f32 %v3211, %v3303
          %v3340 = vadd.f32 %v3212, %v3305
          %v3341 = vadd.f32 %v3213, %v3307
          %v3342 = vadd.f32 %v3214, %v3309
          %v3343 = vadd.f32 %v3215, %v3311
          %vm3344 = vcmp.ge.s32.totalorder %v934, 0
          %vm3345 = vcmp.ge.s32.totalorder %v935, 0
          %vm3346 = vcmp.ge.s32.totalorder %v936, 0
          %vm3347 = vcmp.ge.s32.totalorder %v937, 0
          %vm3348 = vcmp.ge.s32.totalorder %v938, 0
          %vm3349 = vcmp.ge.s32.totalorder %v939, 0
          %vm3350 = vcmp.ge.s32.totalorder %v940, 0
          %vm3351 = vcmp.ge.s32.totalorder %v941, 0
          %vm3352 = vcmp.ge.s32.totalorder %v942, 0
          %vm3353 = vcmp.ge.s32.totalorder %v943, 0
          %vm3354 = vcmp.ge.s32.totalorder %v944, 0
          %vm3355 = vcmp.ge.s32.totalorder %v945, 0
          %vm3356 = vcmp.ge.s32.totalorder %v946, 0
          %vm3357 = vcmp.ge.s32.totalorder %v947, 0
          %vm3358 = vcmp.ge.s32.totalorder %v948, 0
          %vm3359 = vcmp.ge.s32.totalorder %v949, 0
          %vm3360 = vcmp.ge.s32.totalorder %v950, 0
          %vm3361 = vcmp.ge.s32.totalorder %v951, 0
          %vm3362 = vcmp.ge.s32.totalorder %v952, 0
          %vm3363 = vcmp.ge.s32.totalorder %v953, 0
          %vm3364 = vcmp.ge.s32.totalorder %v954, 0
          %vm3365 = vcmp.ge.s32.totalorder %v955, 0
          %vm3366 = vcmp.ge.s32.totalorder %v956, 0
          %vm3367 = vcmp.ge.s32.totalorder %v957, 0
          %vm3368 = vcmp.ge.s32.totalorder %v958, 0
          %vm3369 = vcmp.ge.s32.totalorder %v959, 0
          %vm3370 = vcmp.ge.s32.totalorder %v960, 0
          %vm3371 = vcmp.ge.s32.totalorder %v961, 0
          %vm3372 = vcmp.ge.s32.totalorder %v962, 0
          %vm3373 = vcmp.ge.s32.totalorder %v963, 0
          %vm3374 = vcmp.ge.s32.totalorder %v964, 0
          %vm3375 = vcmp.ge.s32.totalorder %v965, 0
          %v3376 = vsel %vm3344, 1, 0
          %v3377 = vsel %vm3345, 1, 0
          %v3378 = vsel %vm3346, 1, 0
          %v3379 = vsel %vm3347, 1, 0
          %v3380 = vsel %vm3348, 1, 0
          %v3381 = vsel %vm3349, 1, 0
          %v3382 = vsel %vm3350, 1, 0
          %v3383 = vsel %vm3351, 1, 0
          %v3384 = vsel %vm3352, 1, 0
          %v3385 = vsel %vm3353, 1, 0
          %v3386 = vsel %vm3354, 1, 0
          %v3387 = vsel %vm3355, 1, 0
          %v3388 = vsel %vm3356, 1, 0
          %v3389 = vsel %vm3357, 1, 0
          %v3390 = vsel %vm3358, 1, 0
          %v3391 = vsel %vm3359, 1, 0
          %v3392 = vsel %vm3360, 1, 0
          %v3393 = vsel %vm3361, 1, 0
          %v3394 = vsel %vm3362, 1, 0
          %v3395 = vsel %vm3363, 1, 0
          %v3396 = vsel %vm3364, 1, 0
          %v3397 = vsel %vm3365, 1, 0
          %v3398 = vsel %vm3366, 1, 0
          %v3399 = vsel %vm3367, 1, 0
          %v3400 = vsel %vm3368, 1, 0
          %v3401 = vsel %vm3369, 1, 0
          %v3402 = vsel %vm3370, 1, 0
          %v3403 = vsel %vm3371, 1, 0
          %v3404 = vsel %vm3372, 1, 0
          %v3405 = vsel %vm3373, 1, 0
          %v3406 = vsel %vm3374, 1, 0
          %v3407 = vsel %vm3375, 1, 0
          %v3408 = vcvt.s32.f32 %v3376
          %v3409 = vcvt.s32.f32 %v3377
          %v3410 = vcvt.s32.f32 %v3378
          %v3411 = vcvt.s32.f32 %v3379
          %v3412 = vcvt.s32.f32 %v3380
          %v3413 = vcvt.s32.f32 %v3381
          %v3414 = vcvt.s32.f32 %v3382
          %v3415 = vcvt.s32.f32 %v3383
          %v3416 = vcvt.s32.f32 %v3384
          %v3417 = vcvt.s32.f32 %v3385
          %v3418 = vcvt.s32.f32 %v3386
          %v3419 = vcvt.s32.f32 %v3387
          %v3420 = vcvt.s32.f32 %v3388
          %v3421 = vcvt.s32.f32 %v3389
          %v3422 = vcvt.s32.f32 %v3390
          %v3423 = vcvt.s32.f32 %v3391
          %v3424 = vcvt.s32.f32 %v3392
          %v3425 = vcvt.s32.f32 %v3393
          %v3426 = vcvt.s32.f32 %v3394
          %v3427 = vcvt.s32.f32 %v3395
          %v3428 = vcvt.s32.f32 %v3396
          %v3429 = vcvt.s32.f32 %v3397
          %v3430 = vcvt.s32.f32 %v3398
          %v3431 = vcvt.s32.f32 %v3399
          %v3432 = vcvt.s32.f32 %v3400
          %v3433 = vcvt.s32.f32 %v3401
          %v3434 = vcvt.s32.f32 %v3402
          %v3435 = vcvt.s32.f32 %v3403
          %v3436 = vcvt.s32.f32 %v3404
          %v3437 = vcvt.s32.f32 %v3405
          %v3438 = vcvt.s32.f32 %v3406
          %v3439 = vcvt.s32.f32 %v3407
          %vm3440 = vcmp.ge.s32.totalorder %v934, 4294967295
          %vm3441 = vcmp.ge.s32.totalorder %v935, 4294967295
          %vm3442 = vcmp.ge.s32.totalorder %v936, 4294967295
          %vm3443 = vcmp.ge.s32.totalorder %v937, 4294967295
          %vm3444 = vcmp.ge.s32.totalorder %v938, 4294967295
          %vm3445 = vcmp.ge.s32.totalorder %v939, 4294967295
          %vm3446 = vcmp.ge.s32.totalorder %v940, 4294967295
          %vm3447 = vcmp.ge.s32.totalorder %v941, 4294967295
          %vm3448 = vcmp.ge.s32.totalorder %v942, 4294967295
          %vm3449 = vcmp.ge.s32.totalorder %v943, 4294967295
          %vm3450 = vcmp.ge.s32.totalorder %v944, 4294967295
          %vm3451 = vcmp.ge.s32.totalorder %v945, 4294967295
          %vm3452 = vcmp.ge.s32.totalorder %v946, 4294967295
          %vm3453 = vcmp.ge.s32.totalorder %v947, 4294967295
          %vm3454 = vcmp.ge.s32.totalorder %v948, 4294967295
          %vm3455 = vcmp.ge.s32.totalorder %v949, 4294967295
          %vm3456 = vcmp.ge.s32.totalorder %v950, 4294967295
          %vm3457 = vcmp.ge.s32.totalorder %v951, 4294967295
          %vm3458 = vcmp.ge.s32.totalorder %v952, 4294967295
          %vm3459 = vcmp.ge.s32.totalorder %v953, 4294967295
          %vm3460 = vcmp.ge.s32.totalorder %v954, 4294967295
          %vm3461 = vcmp.ge.s32.totalorder %v955, 4294967295
          %vm3462 = vcmp.ge.s32.totalorder %v956, 4294967295
          %vm3463 = vcmp.ge.s32.totalorder %v957, 4294967295
          %vm3464 = vcmp.ge.s32.totalorder %v958, 4294967295
          %vm3465 = vcmp.ge.s32.totalorder %v959, 4294967295
          %vm3466 = vcmp.ge.s32.totalorder %v960, 4294967295
          %vm3467 = vcmp.ge.s32.totalorder %v961, 4294967295
          %vm3468 = vcmp.ge.s32.totalorder %v962, 4294967295
          %vm3469 = vcmp.ge.s32.totalorder %v963, 4294967295
          %vm3470 = vcmp.ge.s32.totalorder %v964, 4294967295
          %vm3471 = vcmp.ge.s32.totalorder %v965, 4294967295
          %v3472 = vsel %vm3440, 1, 0
          %v3473 = vsel %vm3441, 1, 0
          %v3474 = vsel %vm3442, 1, 0
          %v3475 = vsel %vm3443, 1, 0
          %v3476 = vsel %vm3444, 1, 0
          %v3477 = vsel %vm3445, 1, 0
          %v3478 = vsel %vm3446, 1, 0
          %v3479 = vsel %vm3447, 1, 0
          %v3480 = vsel %vm3448, 1, 0
          %v3481 = vsel %vm3449, 1, 0
          %v3482 = vsel %vm3450, 1, 0
          %v3483 = vsel %vm3451, 1, 0
          %v3484 = vsel %vm3452, 1, 0
          %v3485 = vsel %vm3453, 1, 0
          %v3486 = vsel %vm3454, 1, 0
          %v3487 = vsel %vm3455, 1, 0
          %v3488 = vsel %vm3456, 1, 0
          %v3489 = vsel %vm3457, 1, 0
          %v3490 = vsel %vm3458, 1, 0
          %v3491 = vsel %vm3459, 1, 0
          %v3492 = vsel %vm3460, 1, 0
          %v3493 = vsel %vm3461, 1, 0
          %v3494 = vsel %vm3462, 1, 0
          %v3495 = vsel %vm3463, 1, 0
          %v3496 = vsel %vm3464, 1, 0
          %v3497 = vsel %vm3465, 1, 0
          %v3498 = vsel %vm3466, 1, 0
          %v3499 = vsel %vm3467, 1, 0
          %v3500 = vsel %vm3468, 1, 0
          %v3501 = vsel %vm3469, 1, 0
          %v3502 = vsel %vm3470, 1, 0
          %v3503 = vsel %vm3471, 1, 0
          %v3504 = vcvt.s32.f32 %v3472
          %v3505 = vcvt.s32.f32 %v3473
          %v3506 = vcvt.s32.f32 %v3474
          %v3507 = vcvt.s32.f32 %v3475
          %v3508 = vcvt.s32.f32 %v3476
          %v3509 = vcvt.s32.f32 %v3477
          %v3510 = vcvt.s32.f32 %v3478
          %v3511 = vcvt.s32.f32 %v3479
          %v3512 = vcvt.s32.f32 %v3480
          %v3513 = vcvt.s32.f32 %v3481
          %v3514 = vcvt.s32.f32 %v3482
          %v3515 = vcvt.s32.f32 %v3483
          %v3516 = vcvt.s32.f32 %v3484
          %v3517 = vcvt.s32.f32 %v3485
          %v3518 = vcvt.s32.f32 %v3486
          %v3519 = vcvt.s32.f32 %v3487
          %v3520 = vcvt.s32.f32 %v3488
          %v3521 = vcvt.s32.f32 %v3489
          %v3522 = vcvt.s32.f32 %v3490
          %v3523 = vcvt.s32.f32 %v3491
          %v3524 = vcvt.s32.f32 %v3492
          %v3525 = vcvt.s32.f32 %v3493
          %v3526 = vcvt.s32.f32 %v3494
          %v3527 = vcvt.s32.f32 %v3495
          %v3528 = vcvt.s32.f32 %v3496
          %v3529 = vcvt.s32.f32 %v3497
          %v3530 = vcvt.s32.f32 %v3498
          %v3531 = vcvt.s32.f32 %v3499
          %v3532 = vcvt.s32.f32 %v3500
          %v3533 = vcvt.s32.f32 %v3501
          %v3534 = vcvt.s32.f32 %v3502
          %v3535 = vcvt.s32.f32 %v3503
          %v3536 = vld [vmem:[#allocation7] sm:$0xff]
          %v3537 = vld [vmem:[#allocation7 + $0x8] sm:$0xff]
          %v3538 = vld [vmem:[#allocation7 + $0x10] sm:$0xff]
          %v3539 = vld [vmem:[#allocation7 + $0x18] sm:$0xff]
          %v3540 = vld [vmem:[#allocation7 + $0x20] sm:$0xff]
          %v3541 = vld [vmem:[#allocation7 + $0x28] sm:$0xff]
          %v3542 = vld [vmem:[#allocation7 + $0x30] sm:$0xff]
          %v3543 = vld [vmem:[#allocation7 + $0x38] sm:$0xff]
          %v3544 = vld [vmem:[#allocation7 + $0x40] sm:$0xff]
          %v3545 = vld [vmem:[#allocation7 + $0x48] sm:$0xff]
          %v3546 = vld [vmem:[#allocation7 + $0x50] sm:$0xff]
          %v3547 = vld [vmem:[#allocation7 + $0x58] sm:$0xff]
          %v3548 = vld [vmem:[#allocation7 + $0x60] sm:$0xff]
          %v3549 = vld [vmem:[#allocation7 + $0x68] sm:$0xff]
          %v3550 = vld [vmem:[#allocation7 + $0x70] sm:$0xff]
          %v3551 = vld [vmem:[#allocation7 + $0x78] sm:$0xff]
          %v3552 = vld [vmem:[#allocation7 + $0x80] sm:$0xff]
          %v3553 = vld [vmem:[#allocation7 + $0x88] sm:$0xff]
          %v3554 = vld [vmem:[#allocation7 + $0x90] sm:$0xff]
          %v3555 = vld [vmem:[#allocation7 + $0x98] sm:$0xff]
          %v3556 = vld [vmem:[#allocation7 + $0xa0] sm:$0xff]
          %v3557 = vld [vmem:[#allocation7 + $0xa8] sm:$0xff]
          %v3558 = vld [vmem:[#allocation7 + $0xb0] sm:$0xff]
          %v3559 = vld [vmem:[#allocation7 + $0xb8] sm:$0xff]
          %v3560 = vld [vmem:[#allocation7 + $0xc0] sm:$0xff]
          %v3561 = vld [vmem:[#allocation7 + $0xc8] sm:$0xff]
          %v3562 = vld [vmem:[#allocation7 + $0xd0] sm:$0xff]
          %v3563 = vld [vmem:[#allocation7 + $0xd8] sm:$0xff]
          %v3564 = vld [vmem:[#allocation7 + $0xe0] sm:$0xff]
          %v3565 = vld [vmem:[#allocation7 + $0xe8] sm:$0xff]
          %v3566 = vld [vmem:[#allocation7 + $0xf0] sm:$0xff]
          %v3567 = vld [vmem:[#allocation7 + $0xf8] sm:$0xff]
          %v3568 = vsub.f32 %v3152, %v3536
          %v3569 = vsub.f32 %v3153, %v3537
          %v3570 = vsub.f32 %v3154, %v3538
          %v3571 = vsub.f32 %v3155, %v3539
          %v3572 = vsub.f32 %v3156, %v3540
          %v3573 = vsub.f32 %v3157, %v3541
          %v3574 = vsub.f32 %v3158, %v3542
          %v3575 = vsub.f32 %v3159, %v3543
          %v3576 = vsub.f32 %v3160, %v3544
          %v3577 = vsub.f32 %v3161, %v3545
          %v3578 = vsub.f32 %v3162, %v3546
          %v3579 = vsub.f32 %v3163, %v3547
          %v3580 = vsub.f32 %v3164, %v3548
          %v3581 = vsub.f32 %v3165, %v3549
          %v3582 = vsub.f32 %v3166, %v3550
          %v3583 = vsub.f32 %v3167, %v3551
          %v3584 = vsub.f32 %v3168, %v3552
          %v3585 = vsub.f32 %v3169, %v3553
          %v3586 = vsub.f32 %v3170, %v3554
          %v3587 = vsub.f32 %v3171, %v3555
          %v3588 = vsub.f32 %v3172, %v3556
          %v3589 = vsub.f32 %v3173, %v3557
          %v3590 = vsub.f32 %v3174, %v3558
          %v3591 = vsub.f32 %v3175, %v3559
          %v3592 = vsub.f32 %v3176, %v3560
          %v3593 = vsub.f32 %v3177, %v3561
          %v3594 = vsub.f32 %v3178, %v3562
          %v3595 = vsub.f32 %v3179, %v3563
          %v3596 = vsub.f32 %v3180, %v3564
          %v3597 = vsub.f32 %v3181, %v3565
          %v3598 = vsub.f32 %v3182, %v3566
          %v3599 = vsub.f32 %v3183, %v3567
          %v3600 = vmul.f32 %v3568, %v3408
          %v3601 = vmul.f32 %v3569, %v3409
          %v3602 = vmul.f32 %v3570, %v3410
          %v3603 = vmul.f32 %v3571, %v3411
          %v3604 = vmul.f32 %v3572, %v3412
          %v3605 = vmul.f32 %v3573, %v3413
          %v3606 = vmul.f32 %v3574, %v3414
          %v3607 = vmul.f32 %v3575, %v3415
          %v3608 = vmul.f32 %v3576, %v3416
          %v3609 = vmul.f32 %v3577, %v3417
          %v3610 = vmul.f32 %v3578, %v3418
          %v3611 = vmul.f32 %v3579, %v3419
          %v3612 = vmul.f32 %v3580, %v3420
          %v3613 = vmul.f32 %v3581, %v3421
          %v3614 = vmul.f32 %v3582, %v3422
          %v3615 = vmul.f32 %v3583, %v3423
          %v3616 = vmul.f32 %v3584, %v3424
          %v3617 = vmul.f32 %v3585, %v3425
          %v3618 = vmul.f32 %v3586, %v3426
          %v3619 = vmul.f32 %v3587, %v3427
          %v3620 = vmul.f32 %v3588, %v3428
          %v3621 = vmul.f32 %v3589, %v3429
          %v3622 = vmul.f32 %v3590, %v3430
          %v3623 = vmul.f32 %v3591, %v3431
          %v3624 = vmul.f32 %v3592, %v3432
          %v3625 = vmul.f32 %v3593, %v3433
          %v3626 = vmul.f32 %v3594, %v3434
          %v3627 = vmul.f32 %v3595, %v3435
          %v3628 = vmul.f32 %v3596, %v3436
          %v3629 = vmul.f32 %v3597, %v3437
          %v3630 = vmul.f32 %v3598, %v3438
          %v3631 = vmul.f32 %v3599, %v3439
          %3632 = vst.msk [vmem:[%s326] sm:$0xff] %vm1606, %v3600
          %3633 = vst.msk [vmem:[%s326 + $0x8] sm:$0xff] %vm1606, %v3601
          %3634 = vst.msk [vmem:[%s326 + $0x10] sm:$0xff] %vm1606, %v3602
          %3635 = vst.msk [vmem:[%s326 + $0x18] sm:$0xff] %vm1606, %v3603
          %3636 = vst.msk [vmem:[%s326 + $0x20] sm:$0xff] %vm1606, %v3604
          %3637 = vst.msk [vmem:[%s326 + $0x28] sm:$0xff] %vm1606, %v3605
          %3638 = vst.msk [vmem:[%s326 + $0x30] sm:$0xff] %vm1606, %v3606
          %3639 = vst.msk [vmem:[%s326 + $0x38] sm:$0xff] %vm1606, %v3607
          %3640 = vst.msk [vmem:[%s326 + $0x40] sm:$0xff] %vm1606, %v3608
          %3641 = vst.msk [vmem:[%s326 + $0x48] sm:$0xff] %vm1606, %v3609
          %3642 = vst.msk [vmem:[%s326 + $0x50] sm:$0xff] %vm1606, %v3610
          %3643 = vst.msk [vmem:[%s326 + $0x58] sm:$0xff] %vm1606, %v3611
          %3644 = vst.msk [vmem:[%s326 + $0x60] sm:$0xff] %vm1606, %v3612
          %3645 = vst.msk [vmem:[%s326 + $0x68] sm:$0xff] %vm1606, %v3613
          %3646 = vst.msk [vmem:[%s326 + $0x70] sm:$0xff] %vm1606, %v3614
          %3647 = vst.msk [vmem:[%s326 + $0x78] sm:$0xff] %vm1606, %v3615
          %3648 = vst.msk [vmem:[%s326 + $0x80] sm:$0xff] %vm1606, %v3616
          %3649 = vst.msk [vmem:[%s326 + $0x88] sm:$0xff] %vm1606, %v3617
          %3650 = vst.msk [vmem:[%s326 + $0x90] sm:$0xff] %vm1606, %v3618
          %3651 = vst.msk [vmem:[%s326 + $0x98] sm:$0xff] %vm1606, %v3619
          %3652 = vst.msk [vmem:[%s326 + $0xa0] sm:$0xff] %vm1606, %v3620
          %3653 = vst.msk [vmem:[%s326 + $0xa8] sm:$0xff] %vm1606, %v3621
          %3654 = vst.msk [vmem:[%s326 + $0xb0] sm:$0xff] %vm1606, %v3622
          %3655 = vst.msk [vmem:[%s326 + $0xb8] sm:$0xff] %vm1606, %v3623
          %3656 = vst.msk [vmem:[%s326 + $0xc0] sm:$0xff] %vm1606, %v3624
          %3657 = vst.msk [vmem:[%s326 + $0xc8] sm:$0xff] %vm1606, %v3625
          %3658 = vst.msk [vmem:[%s326 + $0xd0] sm:$0xff] %vm1606, %v3626
          %3659 = vst.msk [vmem:[%s326 + $0xd8] sm:$0xff] %vm1606, %v3627
          %3660 = vst.msk [vmem:[%s326 + $0xe0] sm:$0xff] %vm1606, %v3628
          %3661 = vst.msk [vmem:[%s326 + $0xe8] sm:$0xff] %vm1606, %v3629
          %3662 = vst.msk [vmem:[%s326 + $0xf0] sm:$0xff] %vm1606, %v3630
          %3663 = vst.msk [vmem:[%s326 + $0xf8] sm:$0xff] %vm1606, %v3631
          %v3664 = vld [vmem:[#allocation6] sm:$0xff]
          %v3665 = vld [vmem:[#allocation6 + $0x8] sm:$0xff]
          %v3666 = vld [vmem:[#allocation6 + $0x10] sm:$0xff]
          %v3667 = vld [vmem:[#allocation6 + $0x18] sm:$0xff]
          %v3668 = vld [vmem:[#allocation6 + $0x20] sm:$0xff]
          %v3669 = vld [vmem:[#allocation6 + $0x28] sm:$0xff]
          %v3670 = vld [vmem:[#allocation6 + $0x30] sm:$0xff]
          %v3671 = vld [vmem:[#allocation6 + $0x38] sm:$0xff]
          %v3672 = vld [vmem:[#allocation6 + $0x40] sm:$0xff]
          %v3673 = vld [vmem:[#allocation6 + $0x48] sm:$0xff]
          %v3674 = vld [vmem:[#allocation6 + $0x50] sm:$0xff]
          %v3675 = vld [vmem:[#allocation6 + $0x58] sm:$0xff]
          %v3676 = vld [vmem:[#allocation6 + $0x60] sm:$0xff]
          %v3677 = vld [vmem:[#allocation6 + $0x68] sm:$0xff]
          %v3678 = vld [vmem:[#allocation6 + $0x70] sm:$0xff]
          %v3679 = vld [vmem:[#allocation6 + $0x78] sm:$0xff]
          %v3680 = vld [vmem:[#allocation6 + $0x80] sm:$0xff]
          %v3681 = vld [vmem:[#allocation6 + $0x88] sm:$0xff]
          %v3682 = vld [vmem:[#allocation6 + $0x90] sm:$0xff]
          %v3683 = vld [vmem:[#allocation6 + $0x98] sm:$0xff]
          %v3684 = vld [vmem:[#allocation6 + $0xa0] sm:$0xff]
          %v3685 = vld [vmem:[#allocation6 + $0xa8] sm:$0xff]
          %v3686 = vld [vmem:[#allocation6 + $0xb0] sm:$0xff]
          %v3687 = vld [vmem:[#allocation6 + $0xb8] sm:$0xff]
          %v3688 = vld [vmem:[#allocation6 + $0xc0] sm:$0xff]
          %v3689 = vld [vmem:[#allocation6 + $0xc8] sm:$0xff]
          %v3690 = vld [vmem:[#allocation6 + $0xd0] sm:$0xff]
          %v3691 = vld [vmem:[#allocation6 + $0xd8] sm:$0xff]
          %v3692 = vld [vmem:[#allocation6 + $0xe0] sm:$0xff]
          %v3693 = vld [vmem:[#allocation6 + $0xe8] sm:$0xff]
          %v3694 = vld [vmem:[#allocation6 + $0xf0] sm:$0xff]
          %v3695 = vld [vmem:[#allocation6 + $0xf8] sm:$0xff]
          %v3696 = vld [vmem:[#allocation5] sm:$0xff]
          %v3697 = vld [vmem:[#allocation5 + $0x8] sm:$0xff]
          %v3698 = vld [vmem:[#allocation5 + $0x10] sm:$0xff]
          %v3699 = vld [vmem:[#allocation5 + $0x18] sm:$0xff]
          %v3700 = vld [vmem:[#allocation5 + $0x20] sm:$0xff]
          %v3701 = vld [vmem:[#allocation5 + $0x28] sm:$0xff]
          %v3702 = vld [vmem:[#allocation5 + $0x30] sm:$0xff]
          %v3703 = vld [vmem:[#allocation5 + $0x38] sm:$0xff]
          %v3704 = vld [vmem:[#allocation5 + $0x40] sm:$0xff]
          %v3705 = vld [vmem:[#allocation5 + $0x48] sm:$0xff]
          %v3706 = vld [vmem:[#allocation5 + $0x50] sm:$0xff]
          %v3707 = vld [vmem:[#allocation5 + $0x58] sm:$0xff]
          %v3708 = vld [vmem:[#allocation5 + $0x60] sm:$0xff]
          %v3709 = vld [vmem:[#allocation5 + $0x68] sm:$0xff]
          %v3710 = vld [vmem:[#allocation5 + $0x70] sm:$0xff]
          %v3711 = vld [vmem:[#allocation5 + $0x78] sm:$0xff]
          %v3712 = vld [vmem:[#allocation5 + $0x80] sm:$0xff]
          %v3713 = vld [vmem:[#allocation5 + $0x88] sm:$0xff]
          %v3714 = vld [vmem:[#allocation5 + $0x90] sm:$0xff]
          %v3715 = vld [vmem:[#allocation5 + $0x98] sm:$0xff]
          %v3716 = vld [vmem:[#allocation5 + $0xa0] sm:$0xff]
          %v3717 = vld [vmem:[#allocation5 + $0xa8] sm:$0xff]
          %v3718 = vld [vmem:[#allocation5 + $0xb0] sm:$0xff]
          %v3719 = vld [vmem:[#allocation5 + $0xb8] sm:$0xff]
          %v3720 = vld [vmem:[#allocation5 + $0xc0] sm:$0xff]
          %v3721 = vld [vmem:[#allocation5 + $0xc8] sm:$0xff]
          %v3722 = vld [vmem:[#allocation5 + $0xd0] sm:$0xff]
          %v3723 = vld [vmem:[#allocation5 + $0xd8] sm:$0xff]
          %v3724 = vld [vmem:[#allocation5 + $0xe0] sm:$0xff]
          %v3725 = vld [vmem:[#allocation5 + $0xe8] sm:$0xff]
          %v3726 = vld [vmem:[#allocation5 + $0xf0] sm:$0xff]
          %v3727 = vld [vmem:[#allocation5 + $0xf8] sm:$0xff]
          %v3728 = vrcp.pop %v3696
          %v3729 = vmul.f32 %v3664, %v3728
          %v3730 = vrcp.pop %v3697
          %v3731 = vmul.f32 %v3665, %v3730
          %v3732 = vrcp.pop %v3698
          %v3733 = vmul.f32 %v3666, %v3732
          %v3734 = vrcp.pop %v3699
          %v3735 = vmul.f32 %v3667, %v3734
          %v3736 = vrcp.pop %v3700
          %v3737 = vmul.f32 %v3668, %v3736
          %v3738 = vrcp.pop %v3701
          %v3739 = vmul.f32 %v3669, %v3738
          %v3740 = vrcp.pop %v3702
          %v3741 = vmul.f32 %v3670, %v3740
          %v3742 = vrcp.pop %v3703
          %v3743 = vmul.f32 %v3671, %v3742
          %v3744 = vrcp.pop %v3704
          %v3745 = vmul.f32 %v3672, %v3744
          %v3746 = vrcp.pop %v3705
          %v3747 = vmul.f32 %v3673, %v3746
          %v3748 = vrcp.pop %v3706
          %v3749 = vmul.f32 %v3674, %v3748
          %v3750 = vrcp.pop %v3707
          %v3751 = vmul.f32 %v3675, %v3750
          %v3752 = vrcp.pop %v3708
          %v3753 = vmul.f32 %v3676, %v3752
          %v3754 = vrcp.pop %v3709
          %v3755 = vmul.f32 %v3677, %v3754
          %v3756 = vrcp.pop %v3710
          %v3757 = vmul.f32 %v3678, %v3756
          %v3758 = vrcp.pop %v3711
          %v3759 = vmul.f32 %v3679, %v3758
          %v3760 = vrcp.pop %v3712
          %v3761 = vmul.f32 %v3680, %v3760
          %v3762 = vrcp.pop %v3713
          %v3763 = vmul.f32 %v3681, %v3762
          %v3764 = vrcp.pop %v3714
          %v3765 = vmul.f32 %v3682, %v3764
          %v3766 = vrcp.pop %v3715
          %v3767 = vmul.f32 %v3683, %v3766
          %v3768 = vrcp.pop %v3716
          %v3769 = vmul.f32 %v3684, %v3768
          %v3770 = vrcp.pop %v3717
          %v3771 = vmul.f32 %v3685, %v3770
          %v3772 = vrcp.pop %v3718
          %v3773 = vmul.f32 %v3686, %v3772
          %v3774 = vrcp.pop %v3719
          %v3775 = vmul.f32 %v3687, %v3774
          %v3776 = vrcp.pop %v3720
          %v3777 = vmul.f32 %v3688, %v3776
          %v3778 = vrcp.pop %v3721
          %v3779 = vmul.f32 %v3689, %v3778
          %v3780 = vrcp.pop %v3722
          %v3781 = vmul.f32 %v3690, %v3780
          %v3782 = vrcp.pop %v3723
          %v3783 = vmul.f32 %v3691, %v3782
          %v3784 = vrcp.pop %v3724
          %v3785 = vmul.f32 %v3692, %v3784
          %v3786 = vrcp.pop %v3725
          %v3787 = vmul.f32 %v3693, %v3786
          %v3788 = vrcp.pop %v3726
          %v3789 = vmul.f32 %v3694, %v3788
          %v3790 = vrcp.pop %v3727
          %v3791 = vmul.f32 %v3695, %v3790
          %v3792 = vsub.f32 %v3729, %v3312
          %v3793 = vsub.f32 %v3731, %v3313
          %v3794 = vsub.f32 %v3733, %v3314
          %v3795 = vsub.f32 %v3735, %v3315
          %v3796 = vsub.f32 %v3737, %v3316
          %v3797 = vsub.f32 %v3739, %v3317
          %v3798 = vsub.f32 %v3741, %v3318
          %v3799 = vsub.f32 %v3743, %v3319
          %v3800 = vsub.f32 %v3745, %v3320
          %v3801 = vsub.f32 %v3747, %v3321
          %v3802 = vsub.f32 %v3749, %v3322
          %v3803 = vsub.f32 %v3751, %v3323
          %v3804 = vsub.f32 %v3753, %v3324
          %v3805 = vsub.f32 %v3755, %v3325
          %v3806 = vsub.f32 %v3757, %v3326
          %v3807 = vsub.f32 %v3759, %v3327
          %v3808 = vsub.f32 %v3761, %v3328
          %v3809 = vsub.f32 %v3763, %v3329
          %v3810 = vsub.f32 %v3765, %v3330
          %v3811 = vsub.f32 %v3767, %v3331
          %v3812 = vsub.f32 %v3769, %v3332
          %v3813 = vsub.f32 %v3771, %v3333
          %v3814 = vsub.f32 %v3773, %v3334
          %v3815 = vsub.f32 %v3775, %v3335
          %v3816 = vsub.f32 %v3777, %v3336
          %v3817 = vsub.f32 %v3779, %v3337
          %v3818 = vsub.f32 %v3781, %v3338
          %v3819 = vsub.f32 %v3783, %v3339
          %v3820 = vsub.f32 %v3785, %v3340
          %v3821 = vsub.f32 %v3787, %v3341
          %v3822 = vsub.f32 %v3789, %v3342
          %v3823 = vsub.f32 %v3791, %v3343
          %v3824 = vadd.f32 %v3792, %v3152
          %v3825 = vadd.f32 %v3793, %v3153
          %v3826 = vadd.f32 %v3794, %v3154
          %v3827 = vadd.f32 %v3795, %v3155
          %v3828 = vadd.f32 %v3796, %v3156
          %v3829 = vadd.f32 %v3797, %v3157
          %v3830 = vadd.f32 %v3798, %v3158
          %v3831 = vadd.f32 %v3799, %v3159
          %v3832 = vadd.f32 %v3800, %v3160
          %v3833 = vadd.f32 %v3801, %v3161
          %v3834 = vadd.f32 %v3802, %v3162
          %v3835 = vadd.f32 %v3803, %v3163
          %v3836 = vadd.f32 %v3804, %v3164
          %v3837 = vadd.f32 %v3805, %v3165
          %v3838 = vadd.f32 %v3806, %v3166
          %v3839 = vadd.f32 %v3807, %v3167
          %v3840 = vadd.f32 %v3808, %v3168
          %v3841 = vadd.f32 %v3809, %v3169
          %v3842 = vadd.f32 %v3810, %v3170
          %v3843 = vadd.f32 %v3811, %v3171
          %v3844 = vadd.f32 %v3812, %v3172
          %v3845 = vadd.f32 %v3813, %v3173
          %v3846 = vadd.f32 %v3814, %v3174
          %v3847 = vadd.f32 %v3815, %v3175
          %v3848 = vadd.f32 %v3816, %v3176
          %v3849 = vadd.f32 %v3817, %v3177
          %v3850 = vadd.f32 %v3818, %v3178
          %v3851 = vadd.f32 %v3819, %v3179
          %v3852 = vadd.f32 %v3820, %v3180
          %v3853 = vadd.f32 %v3821, %v3181
          %v3854 = vadd.f32 %v3822, %v3182
          %v3855 = vadd.f32 %v3823, %v3183
          %v3856 = vmul.f32 %v3824, %v3504
          %v3857 = vmul.f32 %v3825, %v3505
          %v3858 = vmul.f32 %v3826, %v3506
          %v3859 = vmul.f32 %v3827, %v3507
          %v3860 = vmul.f32 %v3828, %v3508
          %v3861 = vmul.f32 %v3829, %v3509
          %v3862 = vmul.f32 %v3830, %v3510
          %v3863 = vmul.f32 %v3831, %v3511
          %v3864 = vmul.f32 %v3832, %v3512
          %v3865 = vmul.f32 %v3833, %v3513
          %v3866 = vmul.f32 %v3834, %v3514
          %v3867 = vmul.f32 %v3835, %v3515
          %v3868 = vmul.f32 %v3836, %v3516
          %v3869 = vmul.f32 %v3837, %v3517
          %v3870 = vmul.f32 %v3838, %v3518
          %v3871 = vmul.f32 %v3839, %v3519
          %v3872 = vmul.f32 %v3840, %v3520
          %v3873 = vmul.f32 %v3841, %v3521
          %v3874 = vmul.f32 %v3842, %v3522
          %v3875 = vmul.f32 %v3843, %v3523
          %v3876 = vmul.f32 %v3844, %v3524
          %v3877 = vmul.f32 %v3845, %v3525
          %v3878 = vmul.f32 %v3846, %v3526
          %v3879 = vmul.f32 %v3847, %v3527
          %v3880 = vmul.f32 %v3848, %v3528
          %v3881 = vmul.f32 %v3849, %v3529
          %v3882 = vmul.f32 %v3850, %v3530
          %v3883 = vmul.f32 %v3851, %v3531
          %v3884 = vmul.f32 %v3852, %v3532
          %v3885 = vmul.f32 %v3853, %v3533
          %v3886 = vmul.f32 %v3854, %v3534
          %v3887 = vmul.f32 %v3855, %v3535
          %3888 = vst.msk [vmem:[%s332] sm:$0xff] %vm1606, %v3856
          %3889 = vst.msk [vmem:[%s332 + $0x8] sm:$0xff] %vm1606, %v3857
          %3890 = vst.msk [vmem:[%s332 + $0x10] sm:$0xff] %vm1606, %v3858
          %3891 = vst.msk [vmem:[%s332 + $0x18] sm:$0xff] %vm1606, %v3859
          %3892 = vst.msk [vmem:[%s332 + $0x20] sm:$0xff] %vm1606, %v3860
          %3893 = vst.msk [vmem:[%s332 + $0x28] sm:$0xff] %vm1606, %v3861
          %3894 = vst.msk [vmem:[%s332 + $0x30] sm:$0xff] %vm1606, %v3862
          %3895 = vst.msk [vmem:[%s332 + $0x38] sm:$0xff] %vm1606, %v3863
          %3896 = vst.msk [vmem:[%s332 + $0x40] sm:$0xff] %vm1606, %v3864
          %3897 = vst.msk [vmem:[%s332 + $0x48] sm:$0xff] %vm1606, %v3865
          %3898 = vst.msk [vmem:[%s332 + $0x50] sm:$0xff] %vm1606, %v3866
          %3899 = vst.msk [vmem:[%s332 + $0x58] sm:$0xff] %vm1606, %v3867
          %3900 = vst.msk [vmem:[%s332 + $0x60] sm:$0xff] %vm1606, %v3868
          %3901 = vst.msk [vmem:[%s332 + $0x68] sm:$0xff] %vm1606, %v3869
          %3902 = vst.msk [vmem:[%s332 + $0x70] sm:$0xff] %vm1606, %v3870
          %3903 = vst.msk [vmem:[%s332 + $0x78] sm:$0xff] %vm1606, %v3871
          %3904 = vst.msk [vmem:[%s332 + $0x80] sm:$0xff] %vm1606, %v3872
          %3905 = vst.msk [vmem:[%s332 + $0x88] sm:$0xff] %vm1606, %v3873
          %3906 = vst.msk [vmem:[%s332 + $0x90] sm:$0xff] %vm1606, %v3874
          %3907 = vst.msk [vmem:[%s332 + $0x98] sm:$0xff] %vm1606, %v3875
          %3908 = vst.msk [vmem:[%s332 + $0xa0] sm:$0xff] %vm1606, %v3876
          %3909 = vst.msk [vmem:[%s332 + $0xa8] sm:$0xff] %vm1606, %v3877
          %3910 = vst.msk [vmem:[%s332 + $0xb0] sm:$0xff] %vm1606, %v3878
          %3911 = vst.msk [vmem:[%s332 + $0xb8] sm:$0xff] %vm1606, %v3879
          %3912 = vst.msk [vmem:[%s332 + $0xc0] sm:$0xff] %vm1606, %v3880
          %3913 = vst.msk [vmem:[%s332 + $0xc8] sm:$0xff] %vm1606, %v3881
          %3914 = vst.msk [vmem:[%s332 + $0xd0] sm:$0xff] %vm1606, %v3882
          %3915 = vst.msk [vmem:[%s332 + $0xd8] sm:$0xff] %vm1606, %v3883
          %3916 = vst.msk [vmem:[%s332 + $0xe0] sm:$0xff] %vm1606, %v3884
          %3917 = vst.msk [vmem:[%s332 + $0xe8] sm:$0xff] %vm1606, %v3885
          %3918 = vst.msk [vmem:[%s332 + $0xf0] sm:$0xff] %vm1606, %v3886
          %3919 = vst.msk [vmem:[%s332 + $0xf8] sm:$0xff] %vm1606, %v3887
        $region78: #{tpu_custom_call.1} parent=65 // pred_fallthru
          _
        %s3920 = smul.u32 32, %s20
        %p3921 = scmp.lt.s32.totalorder %s3920, 63
        %s3922 = scalar_select %p3921, %s3920, 63
        %s3923 = smul.addr %s3922, 8
        %s3924 = scalar_lea.vmem %s3, %s3923
        %s3925 = smul.u32 32, %s20
        %p3926 = scmp.lt.s32.totalorder %s3925, 63
        %s3927 = scalar_select %p3926, %s3925, 63
        %s3928 = smul.addr %s3927, 8
        %s3929 = scalar_lea.vmem %s4, %s3928
        // Predicated region
        $region79: #{tpu_custom_call.1} parent=65 // pred_check
          %p3930 = pneg %p124
        $region80: #{tpu_custom_call.1} parent=65 // pred_check_branch
          %3932 = sbr.rel (%p3930) target = $region82
        $region81: #{tpu_custom_call.1} parent=65 // pred_region
          %s3933 = smul.u32 32, %s20
        $region82: #{tpu_custom_call.1} parent=65 // pred_fallthru
          _
        // Predicated region
        $region83: #{tpu_custom_call.1} parent=65 // pred_check
          %p3934 = pneg %p150
        $region84: #{tpu_custom_call.1} parent=65 // pred_check_branch
          %3936 = sbr.rel (%p3934) target = $region86
        $region85: #{tpu_custom_call.1} parent=65 // pred_region
          %s3937 = smul.u32 32, %s20
        $region86: #{tpu_custom_call.1} parent=65 // pred_fallthru
          _
      $region66: #{tpu_custom_call.1} parent=5 // pred_fallthru
        _
      %p3938 = scmp.le.s32.totalorder 2, %s11
      // Predicated region
      $region87: #{tpu_custom_call.1} parent=5 // pred_check
        %p3939 = pneg %p3938
      $region88: #{tpu_custom_call.1} parent=5 // pred_check_branch
        %3941 = sbr.rel (%p3939) target = $region90
      $region89: #{tpu_custom_call.1} parent=5 // pred_region
        %s3942 = ssub.s32 %s11, 2
        // Predicated region
        $region91: #{tpu_custom_call.1} parent=89 // pred_check
          %p3943 = pneg %p130
        $region92: #{tpu_custom_call.1} parent=89 // pred_check_branch
          %3945 = sbr.rel (%p3943) target = $region94
        $region93: #{tpu_custom_call.1} parent=89 // pred_region
          %s3946 = smul.u32 32, %s22
          %p3947 = scmp.lt.s32.totalorder %s3946, 63
          %s3948 = scalar_select %p3947, %s3946, 63
          %s3949 = smul.addr %s3948, 8
          %s3950 = scalar_lea.vmem %s3, %s3949
        $region94: #{tpu_custom_call.1} parent=89 // pred_fallthru
          _
        // Predicated region
        $region95: #{tpu_custom_call.1} parent=89 // pred_check
          %p3951 = pneg %p156
        $region96: #{tpu_custom_call.1} parent=89 // pred_check_branch
          %3953 = sbr.rel (%p3951) target = $region98
        $region97: #{tpu_custom_call.1} parent=89 // pred_region
          %s3954 = smul.u32 32, %s22
          %p3955 = scmp.lt.s32.totalorder %s3954, 63
          %s3956 = scalar_select %p3955, %s3954, 63
          %s3957 = smul.addr %s3956, 8
          %s3958 = scalar_lea.vmem %s4, %s3957
        $region98: #{tpu_custom_call.1} parent=89 // pred_fallthru
          _
      $region90: #{tpu_custom_call.1} parent=5 // pred_fallthru
        _
    $region6: #{tpu_custom_call.1} parent=1 // loop_footer
      %s15 = sadd.s32 1, %s11
    $region7: #{tpu_custom_call.1} parent=1 // loop_footer_branch
      %10 = sbr.rel target = $region3
    $region8: #{tpu_custom_call.1} parent=1 // loop_exit
      _

</llo_original>
